<compile_context>
chip_gen: v7x
topology: tpu7x:2x2x1
jax: 0.10.0
libtpu: 0.0.40
codegen_flags: <defaults>
</compile_context>

<pallas_src>
import math
import jax
import jax.numpy as jnp
from jax import lax
from jax.experimental import pallas as pl
from jax.experimental.pallas import tpu as pltpu

jax.config.update("jax_default_matmul_precision", "highest")

# ----- model dims (small, consistent with a Mamba mixer of d_model=32) -----
DIM = 32                       # d_model
D_STATE = 16
D_CONV = 4
EXPAND = 2
D_INNER = EXPAND * DIM         # 64
DT_RANK = max(DIM // 16, 1)    # 2
LN_EPS = 1e-5
CONV_PAD = 8                   # sublane-aligned offset for the in-kernel causal pad


def _sigmoid(x):
    # numerically stable sigmoid (tanh form); tanh maps to the EUP slot
    return 0.5 * (jnp.tanh(0.5 * x) + 1.0)


def _softplus(x):
    return jnp.maximum(x, 0.0) + jnp.log(1.0 + jnp.exp(-jnp.abs(x)))


# ------------------------- single fused Block kernel -------------------------
def block_kernel(desc_ref, lnw_ref, lnb_ref, win_ref, convw_ref, convb_ref,
                 wxdt_ref, bdt_ref, at_ref, d_ref, wout_ref,
                 out_ref, xpad_ref, hs_ref):
    B, L, D = desc_ref.shape

    r3 = desc_ref[...]                                   # (B, L, DIM), residual (fp32)
    r2 = r3.reshape(B * L, D)

    # ---- LayerNorm + in_proj (fused) ----
    mu = jnp.mean(r2, axis=-1, keepdims=True)
    var = jnp.mean(jnp.square(r2 - mu), axis=-1, keepdims=True)
    hn = (r2 - mu) * lax.rsqrt(var + LN_EPS) * lnw_ref[...] + lnb_ref[...]
    xz = jnp.dot(hn, win_ref[...], preferred_element_type=jnp.float32)   # (B*L, 2*D_INNER)
    xm = xz[:, :D_INNER].reshape(B, L, D_INNER)
    z = xz[:, D_INNER:].reshape(B, L, D_INNER)

    # ---- causal depthwise conv1d + SiLU (in-kernel left pad via VMEM scratch) ----
    xpad_ref[...] = jnp.zeros_like(xpad_ref)
    xpad_ref[:, CONV_PAD:CONV_PAD + L, :] = xm           # sublane-aligned store at offset 8
    conv = convb_ref[...][None, :, :]                    # (1, 1, D_INNER) conv bias
    for k in range(D_CONV):                              # static 4-tap causal conv
        off = CONV_PAD - (D_CONV - 1) + k
        conv = conv + xpad_ref[:, off:off + L, :] * convw_ref[k:k + 1, :][None, :, :]
    xs3 = conv * _sigmoid(conv)                          # SiLU, (B, L, D_INNER)
    xs2 = xs3.reshape(B * L, D_INNER)

    # ---- fused x_proj + (folded) dt_proj: one (D_INNER x D_INNER+2*D_STATE) matmul ----
    x_dbl = jnp.dot(xs2, wxdt_ref[...], preferred_element_type=jnp.float32)  # (B*L, 96)
    dt3 = _softplus(x_dbl[:, :D_INNER] + bdt_ref[...]).reshape(B, L, D_INNER)
    Bm = x_dbl[:, D_INNER:D_INNER + D_STATE].reshape(B, L, D_STATE)
    Cm = x_dbl[:, D_INNER + D_STATE:].reshape(B, L, D_STATE)

    # ---- selective scan: precompute dA/dBx over all L (lane-dense, n-major state) ----
    At = at_ref[...]                                                  # (D_STATE, D_INNER) = A^T
    dA = jnp.exp(dt3[:, :, None, :] * At[None, None, :, :])           # (B, L, D_STATE, D_INNER)
    dBx = (dt3 * xs3)[:, :, None, :] * Bm[:, :, :, None]              # (B, L, D_STATE, D_INNER)

    h_state = jnp.zeros((B, D_STATE, D_INNER), jnp.float32)
    for t in range(L):                       # L=8 static unroll; body is one fused mul-add
        h_state = dA[:, t, :, :] * h_state + dBx[:, t, :, :]
        hs_ref[:, t, :, :] = h_state

    # ---- batched C-contraction, D skip, SiLU(z) gate (vectorized over L) ----
    hs = hs_ref[...]                                                  # (B, L, D_STATE, D_INNER)
    y = jnp.sum(hs * Cm[:, :, :, None], axis=2)                       # (B, L, D_INNER)
    y = y + d_ref[...][None, :, :] * xs3
    y = y * (z * _sigmoid(z))

    # ---- out_proj + residual add ----
    y2 = y.reshape(B * L, D_INNER)
    out2 = r2 + jnp.dot(y2, wout_ref[...], preferred_element_type=jnp.float32)
    out_ref[...] = out2.reshape(B, L, D)


# ------------------------------ Block forward -------------------------------
def block_forward(desc, p):
    """Block.forward: hidden = LN(desc); hidden = Mamba(hidden); return desc + hidden."""
    B, L, D = desc.shape
    desc32 = desc.astype(jnp.float32)                    # residual_in_fp32

    # weight-only host-side folding (one-time transforms, not activation glue):
    #   dt_proj folded into x_proj; A transposed for the n-major scan layout.
    w_dt_eff = jnp.dot(p["w_x_t"][:, :DT_RANK], p["w_dt_t"],
                       preferred_element_type=jnp.float32)            # (D_INNER, D_INNER)
    w_xdt_t = jnp.concatenate([w_dt_eff, p["w_x_t"][:, DT_RANK:]], axis=1)  # (64, 96)
    a_t = p["A"].T                                                     # (D_STATE, D_INNER)

    def full(shape):
        return pl.BlockSpec(shape, lambda i, s=shape: (0,) * len(s))

    out = pl.pallas_call(
        block_kernel,
        out_shape=jax.ShapeDtypeStruct((B, L, D), jnp.float32),
        grid=(1,),
        in_specs=[
            full(desc32.shape), full(p["ln_w"].shape), full(p["ln_b"].shape),
            full(p["w_in_t"].shape), full(p["conv_w"].shape), full(p["conv_b"].shape),
            full(w_xdt_t.shape), full(p["b_dt"].shape), full(a_t.shape),
            full(p["D"].shape), full(p["w_out_t"].shape),
        ],
        out_specs=full((B, L, D)),
        scratch_shapes=[
            pltpu.VMEM((B, CONV_PAD + L, D_INNER), jnp.float32),   # causal-pad buffer
            pltpu.VMEM((B, L, D_STATE, D_INNER), jnp.float32),     # stacked scan states
        ],
        compiler_params=pltpu.CompilerParams(dimension_semantics=("arbitrary",)),
    )(desc32, p["ln_w"], p["ln_b"], p["w_in_t"], p["conv_w"], p["conv_b"],
      w_xdt_t, p["b_dt"], a_t, p["D"], p["w_out_t"])
    return out

# TODO(synk): inference_params / allocate_inference_cache (stateful decode cache) and
#             drop_path (identity at p=0.0) are not represented in this synthetic kernel.
# TODO(synk): for long L, tile the L axis (h carried in scratch across grid steps) and expose
#             a batch-parallel grid axis for v7x's second TensorCore; at B*L=16 a single fused
#             step is optimal.


# --------------------------- deterministic params ---------------------------
def init_params(key):
    ks = jax.random.split(key, 6)
    sc = 0.05
    w_in = jax.random.normal(ks[0], (2 * D_INNER, DIM), jnp.float32) * sc   # Linear (out,in), bias=False
    conv_w = jax.random.normal(ks[1], (D_INNER, D_CONV), jnp.float32) * sc  # depthwise conv weight
    conv_b = jax.random.normal(ks[2], (D_INNER,), jnp.float32) * sc
    w_x = jax.random.normal(ks[3], (DT_RANK + 2 * D_STATE, D_INNER), jnp.float32) * sc
    w_dt = jax.random.normal(ks[4], (D_INNER, DT_RANK), jnp.float32) * (DT_RANK ** -0.5)
    dt0 = jnp.exp(jnp.linspace(math.log(1e-3), math.log(1e-1), D_INNER)).astype(jnp.float32)
    b_dt = dt0 + jnp.log(-jnp.expm1(-dt0))                   # inverse softplus (Mamba init)
    A = jnp.tile(jnp.arange(1, D_STATE + 1, dtype=jnp.float32)[None, :], (D_INNER, 1))
    Dp = jnp.ones((D_INNER,), jnp.float32)
    w_out = jax.random.normal(ks[5], (DIM, D_INNER), jnp.float32) * sc
    return {
        "ln_w": jnp.ones((1, DIM), jnp.float32),
        "ln_b": jnp.zeros((1, DIM), jnp.float32),
        "w_in_t": w_in.T,                  # (DIM, 2*D_INNER)
        "conv_w": conv_w.T,                # (D_CONV, D_INNER)
        "conv_b": conv_b.reshape(1, D_INNER),
        "w_x_t": w_x.T,                    # (D_INNER, DT_RANK+2*D_STATE)
        "w_dt_t": w_dt.T,                  # (DT_RANK, D_INNER)
        "b_dt": b_dt.reshape(1, D_INNER),
        "A": -jnp.exp(jnp.log(A)),         # (D_INNER, D_STATE)
        "D": Dp.reshape(1, D_INNER),
        "w_out_t": w_out.T,                # (D_INNER, DIM)
    }


# ----------------------------- pure-JAX reference ----------------------------
def reference_forward(desc, p):
    B, L, D = desc.shape
    r = desc.astype(jnp.float32)
    mu = jnp.mean(r, -1, keepdims=True)
    var = jnp.mean((r - mu) ** 2, -1, keepdims=True)
    h = (r - mu) / jnp.sqrt(var + LN_EPS) * p["ln_w"][0] + p["ln_b"][0]
    xz = h @ p["w_in_t"]
    xm, z = xz[..., :D_INNER], xz[..., D_INNER:]
    xp = jnp.pad(xm, ((0, 0), (D_CONV - 1, 0), (0, 0)))
    conv = sum(xp[:, k:k + L, :] * p["conv_w"][k][None, None, :] for k in range(D_CONV)) + p["conv_b"][0]
    xs = conv * _sigmoid(conv)
    x_dbl = xs @ p["w_x_t"]
    dt = _softplus(x_dbl[..., :DT_RANK] @ p["w_dt_t"] + p["b_dt"][0])
    Bm, Cm = x_dbl[..., DT_RANK:DT_RANK + D_STATE], x_dbl[..., DT_RANK + D_STATE:]
    A, Dv = p["A"], p["D"][0]
    hs = jnp.zeros((B, D_INNER, D_STATE), jnp.float32)
    ys = []
    for t in range(L):
        dA = jnp.exp(dt[:, t, :, None] * A[None])
        dBx = (dt[:, t] * xs[:, t])[:, :, None] * Bm[:, t][:, None, :]
        hs = dA * hs + dBx
        yt = jnp.sum(hs * Cm[:, t][:, None, :], -1) + Dv * xs[:, t]
        ys.append(yt * (z[:, t] * _sigmoid(z[:, t])))
    y = jnp.stack(ys, axis=1)
    return r + y @ p["w_out_t"]


if __name__ == "__main__":
    key = jax.random.PRNGKey(0)
    kx, kp = jax.random.split(key)
    B, L = 2, 8
    desc = jax.random.normal(kx, (B, L, DIM), jnp.float32)
    params = init_params(kp)

    out = jax.jit(block_forward)(desc, params)
    out = jax.block_until_ready(out)
    assert out.shape == (B, L, DIM)

    ref = reference_forward(desc, params)
    max_err = float(jnp.max(jnp.abs(out - ref)))
    assert max_err < 2e-3, f"kernel/reference mismatch: {max_err}"
    print("KERNEL_OK")
</pallas_src>

<mosaic_0001>
module attributes {stable_mosaic.version = 11 : i64} {
  func.func @block_kernel(%arg0: i32, %arg1: memref<2x8x32xf32, #tpu.memory_space<vmem>>, %arg2: memref<1x32xf32, #tpu.memory_space<vmem>>, %arg3: memref<1x32xf32, #tpu.memory_space<vmem>>, %arg4: memref<32x128xf32, #tpu.memory_space<vmem>>, %arg5: memref<4x64xf32, #tpu.memory_space<vmem>>, %arg6: memref<1x64xf32, #tpu.memory_space<vmem>>, %arg7: memref<64x96xf32, #tpu.memory_space<vmem>>, %arg8: memref<1x64xf32, #tpu.memory_space<vmem>>, %arg9: memref<16x64xf32, #tpu.memory_space<vmem>>, %arg10: memref<1x64xf32, #tpu.memory_space<vmem>>, %arg11: memref<64x32xf32, #tpu.memory_space<vmem>>, %arg12: memref<2x8x32xf32, #tpu.memory_space<vmem>>, %arg13: memref<2x16x64xf32, #tpu.memory_space<vmem>>, %arg14: memref<2x8x16x64xf32, #tpu.memory_space<vmem>>) attributes {dimension_semantics = [#tpu.dimension_semantics<arbitrary>], iteration_bounds = array<i64: 1>, scalar_prefetch = 0 : i64, scratch_operands = 2 : i64, tpu.core_type = #tpu.core_type<tc>, window_params = [{pipeline_mode = #tpu.pipeline_mode<synchronous>, transform_indices = @transform_0, window_bounds = array<i64: 2, 8, 32>}, {pipeline_mode = #tpu.pipeline_mode<synchronous>, transform_indices = @transform_1, window_bounds = array<i64: 1, 32>}, {pipeline_mode = #tpu.pipeline_mode<synchronous>, transform_indices = @transform_2, window_bounds = array<i64: 1, 32>}, {pipeline_mode = #tpu.pipeline_mode<synchronous>, transform_indices = @transform_3, window_bounds = array<i64: 32, 128>}, {pipeline_mode = #tpu.pipeline_mode<synchronous>, transform_indices = @transform_4, window_bounds = array<i64: 4, 64>}, {pipeline_mode = #tpu.pipeline_mode<synchronous>, transform_indices = @transform_5, window_bounds = array<i64: 1, 64>}, {pipeline_mode = #tpu.pipeline_mode<synchronous>, transform_indices = @transform_6, window_bounds = array<i64: 64, 96>}, {pipeline_mode = #tpu.pipeline_mode<synchronous>, transform_indices = @transform_7, window_bounds = array<i64: 1, 64>}, {pipeline_mode = #tpu.pipeline_mode<synchronous>, transform_indices = @transform_8, window_bounds = array<i64: 16, 64>}, {pipeline_mode = #tpu.pipeline_mode<synchronous>, transform_indices = @transform_9, window_bounds = array<i64: 1, 64>}, {pipeline_mode = #tpu.pipeline_mode<synchronous>, transform_indices = @transform_10, window_bounds = array<i64: 64, 32>}, {pipeline_mode = #tpu.pipeline_mode<synchronous>, transform_indices = @transform_11, window_bounds = array<i64: 2, 8, 32>}]} {
    %c0 = arith.constant 0 : index
    %c0_0 = arith.constant 0 : index
    %c0_1 = arith.constant 0 : index
    %0 = vector.load %arg1[%c0, %c0_0, %c0_1] : memref<2x8x32xf32, #tpu.memory_space<vmem>>, vector<2x8x32xf32>
    %1 = vector.shape_cast %0 : vector<2x8x32xf32> to vector<16x32xf32>
    %cst = arith.constant dense<0.000000e+00> : vector<16xf32>
    %2 = vector.multi_reduction <add>, %1, %cst [1] : vector<16x32xf32> to vector<16xf32>
    %3 = vector.shape_cast %2 : vector<16xf32> to vector<16x1xf32>
    %cst_2 = arith.constant 3.200000e+01 : f32
    %4 = vector.broadcast %cst_2 : f32 to vector<16x1xf32>
    %5 = arith.divf %3, %4 : vector<16x1xf32>
    %6 = vector.broadcast %5 : vector<16x1xf32> to vector<16x32xf32>
    %7 = arith.subf %1, %6 : vector<16x32xf32>
    %8 = arith.mulf %7, %7 : vector<16x32xf32>
    %cst_3 = arith.constant dense<0.000000e+00> : vector<16xf32>
    %9 = vector.multi_reduction <add>, %8, %cst_3 [1] : vector<16x32xf32> to vector<16xf32>
    %10 = vector.shape_cast %9 : vector<16xf32> to vector<16x1xf32>
    %cst_4 = arith.constant 3.200000e+01 : f32
    %11 = vector.broadcast %cst_4 : f32 to vector<16x1xf32>
    %12 = arith.divf %10, %11 : vector<16x1xf32>
    %13 = vector.broadcast %5 : vector<16x1xf32> to vector<16x32xf32>
    %14 = arith.subf %1, %13 : vector<16x32xf32>
    %cst_5 = arith.constant 9.99999974E-6 : f32
    %15 = vector.broadcast %cst_5 : f32 to vector<16x1xf32>
    %16 = arith.addf %12, %15 : vector<16x1xf32>
    %17 = math.rsqrt %16 : vector<16x1xf32>
    %18 = vector.broadcast %17 : vector<16x1xf32> to vector<16x32xf32>
    %19 = arith.mulf %14, %18 : vector<16x32xf32>
    %c0_6 = arith.constant 0 : index
    %c0_7 = arith.constant 0 : index
    %20 = vector.load %arg2[%c0_6, %c0_7] : memref<1x32xf32, #tpu.memory_space<vmem>>, vector<1x32xf32>
    %21 = vector.broadcast %20 : vector<1x32xf32> to vector<16x32xf32>
    %22 = arith.mulf %19, %21 : vector<16x32xf32>
    %c0_8 = arith.constant 0 : index
    %c0_9 = arith.constant 0 : index
    %23 = vector.load %arg3[%c0_8, %c0_9] : memref<1x32xf32, #tpu.memory_space<vmem>>, vector<1x32xf32>
    %24 = vector.broadcast %23 : vector<1x32xf32> to vector<16x32xf32>
    %25 = arith.addf %22, %24 : vector<16x32xf32>
    %c0_10 = arith.constant 0 : index
    %c0_11 = arith.constant 0 : index
    %26 = vector.load %arg4[%c0_10, %c0_11] : memref<32x128xf32, #tpu.memory_space<vmem>>, vector<32x128xf32>
    %cst_12 = arith.constant dense<0.000000e+00> : vector<16x128xf32>
    %27 = tpu.matmul %25, %26, %cst_12 {dimension_numbers = #tpu.dot_dimension_numbers<[1], [0], [0], [1], [0, 0, 1, 1], [], []>, precision = #tpu.contract_precision<fp32>} : vector<16x32xf32>, vector<32x128xf32>, vector<16x128xf32> -> vector<16x128xf32>
    %28 = vector.extract_strided_slice %27 {offsets = [0, 0], sizes = [16, 64], strides = [1, 1]} : vector<16x128xf32> to vector<16x64xf32>
    %29 = vector.shape_cast %28 : vector<16x64xf32> to vector<2x8x64xf32>
    %30 = vector.extract_strided_slice %27 {offsets = [0, 64], sizes = [16, 64], strides = [1, 1]} : vector<16x128xf32> to vector<16x64xf32>
    %31 = vector.shape_cast %30 : vector<16x64xf32> to vector<2x8x64xf32>
    %cst_13 = arith.constant 0.000000e+00 : f32
    %32 = vector.broadcast %cst_13 : f32 to vector<2x16x64xf32>
    %c0_14 = arith.constant 0 : index
    %c0_15 = arith.constant 0 : index
    %c0_16 = arith.constant 0 : index
    %33 = vector.load %arg13[%c0_14, %c0_15, %c0_16] : memref<2x16x64xf32, #tpu.memory_space<vmem>>, vector<2x16x64xf32>
    tpu.vector_store %arg13[%c0_14, %c0_15, %c0_16], %32 {strides = array<i32>} : memref<2x16x64xf32, #tpu.memory_space<vmem>>, vector<2x16x64xf32>,
    %c0_17 = arith.constant 0 : index
    %c8 = arith.constant 8 : index
    %c0_18 = arith.constant 0 : index
    %34 = vector.load %arg13[%c0_17, %c8, %c0_18] : memref<2x16x64xf32, #tpu.memory_space<vmem>>, vector<2x8x64xf32>
    tpu.vector_store %arg13[%c0_17, %c8, %c0_18], %29 {strides = array<i32>} : memref<2x16x64xf32, #tpu.memory_space<vmem>>, vector<2x8x64xf32>,
    %c0_19 = arith.constant 0 : index
    %c0_20 = arith.constant 0 : index
    %35 = vector.load %arg6[%c0_19, %c0_20] : memref<1x64xf32, #tpu.memory_space<vmem>>, vector<1x64xf32>
    %36 = vector.shape_cast %35 : vector<1x64xf32> to vector<1x1x64xf32>
    %c0_21 = arith.constant 0 : index
    %c5 = arith.constant 5 : index
    %c0_22 = arith.constant 0 : index
    %37 = vector.load %arg13[%c0_21, %c5, %c0_22] : memref<2x16x64xf32, #tpu.memory_space<vmem>>, vector<2x8x64xf32>
    %c0_23 = arith.constant 0 : index
    %c0_24 = arith.constant 0 : index
    %38 = vector.load %arg5[%c0_23, %c0_24] : memref<4x64xf32, #tpu.memory_space<vmem>>, vector<1x64xf32>
    %39 = vector.shape_cast %38 : vector<1x64xf32> to vector<1x1x64xf32>
    %40 = vector.broadcast %39 : vector<1x1x64xf32> to vector<2x8x64xf32>
    %41 = arith.mulf %37, %40 : vector<2x8x64xf32>
    %42 = vector.broadcast %36 : vector<1x1x64xf32> to vector<2x8x64xf32>
    %43 = arith.addf %42, %41 : vector<2x8x64xf32>
    %c0_25 = arith.constant 0 : index
    %c6 = arith.constant 6 : index
    %c0_26 = arith.constant 0 : index
    %44 = vector.load %arg13[%c0_25, %c6, %c0_26] : memref<2x16x64xf32, #tpu.memory_space<vmem>>, vector<2x8x64xf32>
    %c1 = arith.constant 1 : index
    %c0_27 = arith.constant 0 : index
    %45 = vector.load %arg5[%c1, %c0_27] : memref<4x64xf32, #tpu.memory_space<vmem>>, vector<1x64xf32>
    %46 = vector.shape_cast %45 : vector<1x64xf32> to vector<1x1x64xf32>
    %47 = vector.broadcast %46 : vector<1x1x64xf32> to vector<2x8x64xf32>
    %48 = arith.mulf %44, %47 : vector<2x8x64xf32>
    %49 = arith.addf %43, %48 : vector<2x8x64xf32>
    %c0_28 = arith.constant 0 : index
    %c7 = arith.constant 7 : index
    %c0_29 = arith.constant 0 : index
    %50 = vector.load %arg13[%c0_28, %c7, %c0_29] : memref<2x16x64xf32, #tpu.memory_space<vmem>>, vector<2x8x64xf32>
    %c2 = arith.constant 2 : index
    %c0_30 = arith.constant 0 : index
    %51 = vector.load %arg5[%c2, %c0_30] : memref<4x64xf32, #tpu.memory_space<vmem>>, vector<1x64xf32>
    %52 = vector.shape_cast %51 : vector<1x64xf32> to vector<1x1x64xf32>
    %53 = vector.broadcast %52 : vector<1x1x64xf32> to vector<2x8x64xf32>
    %54 = arith.mulf %50, %53 : vector<2x8x64xf32>
    %55 = arith.addf %49, %54 : vector<2x8x64xf32>
    %c0_31 = arith.constant 0 : index
    %c8_32 = arith.constant 8 : index
    %c0_33 = arith.constant 0 : index
    %56 = vector.load %arg13[%c0_31, %c8_32, %c0_33] : memref<2x16x64xf32, #tpu.memory_space<vmem>>, vector<2x8x64xf32>
    %c3 = arith.constant 3 : index
    %c0_34 = arith.constant 0 : index
    %57 = vector.load %arg5[%c3, %c0_34] : memref<4x64xf32, #tpu.memory_space<vmem>>, vector<1x64xf32>
    %58 = vector.shape_cast %57 : vector<1x64xf32> to vector<1x1x64xf32>
    %59 = vector.broadcast %58 : vector<1x1x64xf32> to vector<2x8x64xf32>
    %60 = arith.mulf %56, %59 : vector<2x8x64xf32>
    %61 = arith.addf %55, %60 : vector<2x8x64xf32>
    %cst_35 = arith.constant 5.000000e-01 : f32
    %62 = vector.broadcast %cst_35 : f32 to vector<2x8x64xf32>
    %63 = arith.mulf %62, %61 : vector<2x8x64xf32>
    %64 = math.tanh %63 : vector<2x8x64xf32>
    %cst_36 = arith.constant 1.000000e+00 : f32
    %65 = vector.broadcast %cst_36 : f32 to vector<2x8x64xf32>
    %66 = arith.addf %64, %65 : vector<2x8x64xf32>
    %cst_37 = arith.constant 5.000000e-01 : f32
    %67 = vector.broadcast %cst_37 : f32 to vector<2x8x64xf32>
    %68 = arith.mulf %67, %66 : vector<2x8x64xf32>
    %69 = arith.mulf %61, %68 : vector<2x8x64xf32>
    %70 = vector.shape_cast %69 : vector<2x8x64xf32> to vector<16x64xf32>
    %c0_38 = arith.constant 0 : index
    %c0_39 = arith.constant 0 : index
    %71 = vector.load %arg7[%c0_38, %c0_39] : memref<64x96xf32, #tpu.memory_space<vmem>>, vector<64x96xf32>
    %cst_40 = arith.constant dense<0.000000e+00> : vector<16x96xf32>
    %72 = tpu.matmul %70, %71, %cst_40 {dimension_numbers = #tpu.dot_dimension_numbers<[1], [0], [0], [1], [0, 0, 1, 1], [], []>, precision = #tpu.contract_precision<fp32>} : vector<16x64xf32>, vector<64x96xf32>, vector<16x96xf32> -> vector<16x96xf32>
    %73 = vector.extract_strided_slice %72 {offsets = [0, 0], sizes = [16, 64], strides = [1, 1]} : vector<16x96xf32> to vector<16x64xf32>
    %c0_41 = arith.constant 0 : index
    %c0_42 = arith.constant 0 : index
    %74 = vector.load %arg8[%c0_41, %c0_42] : memref<1x64xf32, #tpu.memory_space<vmem>>, vector<1x64xf32>
    %75 = vector.broadcast %74 : vector<1x64xf32> to vector<16x64xf32>
    %76 = arith.addf %73, %75 : vector<16x64xf32>
    %cst_43 = arith.constant 0.000000e+00 : f32
    %77 = vector.broadcast %cst_43 : f32 to vector<16x64xf32>
    %78 = arith.maximumf %76, %77 : vector<16x64xf32>
    %79 = math.absf %76 : vector<16x64xf32>
    %cst_44 = arith.constant 0.000000e+00 : f32
    %80 = vector.broadcast %cst_44 : f32 to vector<16x64xf32>
    %81 = arith.subf %80, %79 : vector<16x64xf32>
    %82 = math.exp %81 : vector<16x64xf32>
    %cst_45 = arith.constant 1.000000e+00 : f32
    %83 = vector.broadcast %cst_45 : f32 to vector<16x64xf32>
    %84 = arith.addf %83, %82 : vector<16x64xf32>
    %85 = math.log %84 : vector<16x64xf32>
    %86 = arith.addf %78, %85 : vector<16x64xf32>
    %87 = vector.shape_cast %86 : vector<16x64xf32> to vector<2x8x64xf32>
    %88 = vector.extract_strided_slice %72 {offsets = [0, 64], sizes = [16, 16], strides = [1, 1]} : vector<16x96xf32> to vector<16x16xf32>
    %89 = vector.shape_cast %88 : vector<16x16xf32> to vector<2x8x16xf32>
    %90 = vector.extract_strided_slice %72 {offsets = [0, 80], sizes = [16, 16], strides = [1, 1]} : vector<16x96xf32> to vector<16x16xf32>
    %91 = vector.shape_cast %90 : vector<16x16xf32> to vector<2x8x16xf32>
    %c0_46 = arith.constant 0 : index
    %c0_47 = arith.constant 0 : index
    %92 = vector.load %arg9[%c0_46, %c0_47] : memref<16x64xf32, #tpu.memory_space<vmem>>, vector<16x64xf32>
    %93 = vector.shape_cast %87 : vector<2x8x64xf32> to vector<2x8x1x64xf32>
    %94 = vector.shape_cast %92 : vector<16x64xf32> to vector<1x1x16x64xf32>
    %95 = vector.broadcast %93 : vector<2x8x1x64xf32> to vector<2x8x16x64xf32>
    %96 = vector.broadcast %94 : vector<1x1x16x64xf32> to vector<2x8x16x64xf32>
    %97 = arith.mulf %95, %96 : vector<2x8x16x64xf32>
    %98 = math.exp %97 : vector<2x8x16x64xf32>
    %99 = arith.mulf %87, %69 : vector<2x8x64xf32>
    %100 = vector.shape_cast %99 : vector<2x8x64xf32> to vector<2x8x1x64xf32>
    %101 = vector.shape_cast %89 : vector<2x8x16xf32> to vector<2x8x16x1xf32>
    %102 = vector.broadcast %100 : vector<2x8x1x64xf32> to vector<2x8x16x64xf32>
    %103 = vector.broadcast %101 : vector<2x8x16x1xf32> to vector<2x8x16x64xf32>
    %104 = arith.mulf %102, %103 : vector<2x8x16x64xf32>
    %cst_48 = arith.constant 0.000000e+00 : f32
    %105 = vector.broadcast %cst_48 : f32 to vector<2x16x64xf32>
    %106 = vector.extract_strided_slice %98 {offsets = [0, 0, 0, 0], sizes = [2, 1, 16, 64], strides = [1, 1, 1, 1]} : vector<2x8x16x64xf32> to vector<2x1x16x64xf32>
    %107 = vector.shape_cast %106 : vector<2x1x16x64xf32> to vector<2x16x64xf32>
    %108 = arith.mulf %107, %105 : vector<2x16x64xf32>
    %109 = vector.extract_strided_slice %104 {offsets = [0, 0, 0, 0], sizes = [2, 1, 16, 64], strides = [1, 1, 1, 1]} : vector<2x8x16x64xf32> to vector<2x1x16x64xf32>
    %110 = vector.shape_cast %109 : vector<2x1x16x64xf32> to vector<2x16x64xf32>
    %111 = arith.addf %108, %110 : vector<2x16x64xf32>
    %c0_49 = arith.constant 0 : index
    %c0_50 = arith.constant 0 : index
    %c0_51 = arith.constant 0 : index
    %c0_52 = arith.constant 0 : index
    %112 = vector.load %arg14[%c0_49, %c0_50, %c0_51, %c0_52] : memref<2x8x16x64xf32, #tpu.memory_space<vmem>>, vector<2x1x16x64xf32>
    %113 = vector.shape_cast %112 : vector<2x1x16x64xf32> to vector<2x16x64xf32>
    %114 = vector.shape_cast %111 : vector<2x16x64xf32> to vector<2x1x16x64xf32>
    tpu.vector_store %arg14[%c0_49, %c0_50, %c0_51, %c0_52], %114 {strides = array<i32>} : memref<2x8x16x64xf32, #tpu.memory_space<vmem>>, vector<2x1x16x64xf32>,
    %115 = vector.extract_strided_slice %98 {offsets = [0, 1, 0, 0], sizes = [2, 1, 16, 64], strides = [1, 1, 1, 1]} : vector<2x8x16x64xf32> to vector<2x1x16x64xf32>
    %116 = vector.shape_cast %115 : vector<2x1x16x64xf32> to vector<2x16x64xf32>
    %117 = arith.mulf %116, %111 : vector<2x16x64xf32>
    %118 = vector.extract_strided_slice %104 {offsets = [0, 1, 0, 0], sizes = [2, 1, 16, 64], strides = [1, 1, 1, 1]} : vector<2x8x16x64xf32> to vector<2x1x16x64xf32>
    %119 = vector.shape_cast %118 : vector<2x1x16x64xf32> to vector<2x16x64xf32>
    %120 = arith.addf %117, %119 : vector<2x16x64xf32>
    %c0_53 = arith.constant 0 : index
    %c1_54 = arith.constant 1 : index
    %c0_55 = arith.constant 0 : index
    %c0_56 = arith.constant 0 : index
    %121 = vector.load %arg14[%c0_53, %c1_54, %c0_55, %c0_56] : memref<2x8x16x64xf32, #tpu.memory_space<vmem>>, vector<2x1x16x64xf32>
    %122 = vector.shape_cast %121 : vector<2x1x16x64xf32> to vector<2x16x64xf32>
    %123 = vector.shape_cast %120 : vector<2x16x64xf32> to vector<2x1x16x64xf32>
    tpu.vector_store %arg14[%c0_53, %c1_54, %c0_55, %c0_56], %123 {strides = array<i32>} : memref<2x8x16x64xf32, #tpu.memory_space<vmem>>, vector<2x1x16x64xf32>,
    %124 = vector.extract_strided_slice %98 {offsets = [0, 2, 0, 0], sizes = [2, 1, 16, 64], strides = [1, 1, 1, 1]} : vector<2x8x16x64xf32> to vector<2x1x16x64xf32>
    %125 = vector.shape_cast %124 : vector<2x1x16x64xf32> to vector<2x16x64xf32>
    %126 = arith.mulf %125, %120 : vector<2x16x64xf32>
    %127 = vector.extract_strided_slice %104 {offsets = [0, 2, 0, 0], sizes = [2, 1, 16, 64], strides = [1, 1, 1, 1]} : vector<2x8x16x64xf32> to vector<2x1x16x64xf32>
    %128 = vector.shape_cast %127 : vector<2x1x16x64xf32> to vector<2x16x64xf32>
    %129 = arith.addf %126, %128 : vector<2x16x64xf32>
    %c0_57 = arith.constant 0 : index
    %c2_58 = arith.constant 2 : index
    %c0_59 = arith.constant 0 : index
    %c0_60 = arith.constant 0 : index
    %130 = vector.load %arg14[%c0_57, %c2_58, %c0_59, %c0_60] : memref<2x8x16x64xf32, #tpu.memory_space<vmem>>, vector<2x1x16x64xf32>
    %131 = vector.shape_cast %130 : vector<2x1x16x64xf32> to vector<2x16x64xf32>
    %132 = vector.shape_cast %129 : vector<2x16x64xf32> to vector<2x1x16x64xf32>
    tpu.vector_store %arg14[%c0_57, %c2_58, %c0_59, %c0_60], %132 {strides = array<i32>} : memref<2x8x16x64xf32, #tpu.memory_space<vmem>>, vector<2x1x16x64xf32>,
    %133 = vector.extract_strided_slice %98 {offsets = [0, 3, 0, 0], sizes = [2, 1, 16, 64], strides = [1, 1, 1, 1]} : vector<2x8x16x64xf32> to vector<2x1x16x64xf32>
    %134 = vector.shape_cast %133 : vector<2x1x16x64xf32> to vector<2x16x64xf32>
    %135 = arith.mulf %134, %129 : vector<2x16x64xf32>
    %136 = vector.extract_strided_slice %104 {offsets = [0, 3, 0, 0], sizes = [2, 1, 16, 64], strides = [1, 1, 1, 1]} : vector<2x8x16x64xf32> to vector<2x1x16x64xf32>
    %137 = vector.shape_cast %136 : vector<2x1x16x64xf32> to vector<2x16x64xf32>
    %138 = arith.addf %135, %137 : vector<2x16x64xf32>
    %c0_61 = arith.constant 0 : index
    %c3_62 = arith.constant 3 : index
    %c0_63 = arith.constant 0 : index
    %c0_64 = arith.constant 0 : index
    %139 = vector.load %arg14[%c0_61, %c3_62, %c0_63, %c0_64] : memref<2x8x16x64xf32, #tpu.memory_space<vmem>>, vector<2x1x16x64xf32>
    %140 = vector.shape_cast %139 : vector<2x1x16x64xf32> to vector<2x16x64xf32>
    %141 = vector.shape_cast %138 : vector<2x16x64xf32> to vector<2x1x16x64xf32>
    tpu.vector_store %arg14[%c0_61, %c3_62, %c0_63, %c0_64], %141 {strides = array<i32>} : memref<2x8x16x64xf32, #tpu.memory_space<vmem>>, vector<2x1x16x64xf32>,
    %142 = vector.extract_strided_slice %98 {offsets = [0, 4, 0, 0], sizes = [2, 1, 16, 64], strides = [1, 1, 1, 1]} : vector<2x8x16x64xf32> to vector<2x1x16x64xf32>
    %143 = vector.shape_cast %142 : vector<2x1x16x64xf32> to vector<2x16x64xf32>
    %144 = arith.mulf %143, %138 : vector<2x16x64xf32>
    %145 = vector.extract_strided_slice %104 {offsets = [0, 4, 0, 0], sizes = [2, 1, 16, 64], strides = [1, 1, 1, 1]} : vector<2x8x16x64xf32> to vector<2x1x16x64xf32>
    %146 = vector.shape_cast %145 : vector<2x1x16x64xf32> to vector<2x16x64xf32>
    %147 = arith.addf %144, %146 : vector<2x16x64xf32>
    %c0_65 = arith.constant 0 : index
    %c4 = arith.constant 4 : index
    %c0_66 = arith.constant 0 : index
    %c0_67 = arith.constant 0 : index
    %148 = vector.load %arg14[%c0_65, %c4, %c0_66, %c0_67] : memref<2x8x16x64xf32, #tpu.memory_space<vmem>>, vector<2x1x16x64xf32>
    %149 = vector.shape_cast %148 : vector<2x1x16x64xf32> to vector<2x16x64xf32>
    %150 = vector.shape_cast %147 : vector<2x16x64xf32> to vector<2x1x16x64xf32>
    tpu.vector_store %arg14[%c0_65, %c4, %c0_66, %c0_67], %150 {strides = array<i32>} : memref<2x8x16x64xf32, #tpu.memory_space<vmem>>, vector<2x1x16x64xf32>,
    %151 = vector.extract_strided_slice %98 {offsets = [0, 5, 0, 0], sizes = [2, 1, 16, 64], strides = [1, 1, 1, 1]} : vector<2x8x16x64xf32> to vector<2x1x16x64xf32>
    %152 = vector.shape_cast %151 : vector<2x1x16x64xf32> to vector<2x16x64xf32>
    %153 = arith.mulf %152, %147 : vector<2x16x64xf32>
    %154 = vector.extract_strided_slice %104 {offsets = [0, 5, 0, 0], sizes = [2, 1, 16, 64], strides = [1, 1, 1, 1]} : vector<2x8x16x64xf32> to vector<2x1x16x64xf32>
    %155 = vector.shape_cast %154 : vector<2x1x16x64xf32> to vector<2x16x64xf32>
    %156 = arith.addf %153, %155 : vector<2x16x64xf32>
    %c0_68 = arith.constant 0 : index
    %c5_69 = arith.constant 5 : index
    %c0_70 = arith.constant 0 : index
    %c0_71 = arith.constant 0 : index
    %157 = vector.load %arg14[%c0_68, %c5_69, %c0_70, %c0_71] : memref<2x8x16x64xf32, #tpu.memory_space<vmem>>, vector<2x1x16x64xf32>
    %158 = vector.shape_cast %157 : vector<2x1x16x64xf32> to vector<2x16x64xf32>
    %159 = vector.shape_cast %156 : vector<2x16x64xf32> to vector<2x1x16x64xf32>
    tpu.vector_store %arg14[%c0_68, %c5_69, %c0_70, %c0_71], %159 {strides = array<i32>} : memref<2x8x16x64xf32, #tpu.memory_space<vmem>>, vector<2x1x16x64xf32>,
    %160 = vector.extract_strided_slice %98 {offsets = [0, 6, 0, 0], sizes = [2, 1, 16, 64], strides = [1, 1, 1, 1]} : vector<2x8x16x64xf32> to vector<2x1x16x64xf32>
    %161 = vector.shape_cast %160 : vector<2x1x16x64xf32> to vector<2x16x64xf32>
    %162 = arith.mulf %161, %156 : vector<2x16x64xf32>
    %163 = vector.extract_strided_slice %104 {offsets = [0, 6, 0, 0], sizes = [2, 1, 16, 64], strides = [1, 1, 1, 1]} : vector<2x8x16x64xf32> to vector<2x1x16x64xf32>
    %164 = vector.shape_cast %163 : vector<2x1x16x64xf32> to vector<2x16x64xf32>
    %165 = arith.addf %162, %164 : vector<2x16x64xf32>
    %c0_72 = arith.constant 0 : index
    %c6_73 = arith.constant 6 : index
    %c0_74 = arith.constant 0 : index
    %c0_75 = arith.constant 0 : index
    %166 = vector.load %arg14[%c0_72, %c6_73, %c0_74, %c0_75] : memref<2x8x16x64xf32, #tpu.memory_space<vmem>>, vector<2x1x16x64xf32>
    %167 = vector.shape_cast %166 : vector<2x1x16x64xf32> to vector<2x16x64xf32>
    %168 = vector.shape_cast %165 : vector<2x16x64xf32> to vector<2x1x16x64xf32>
    tpu.vector_store %arg14[%c0_72, %c6_73, %c0_74, %c0_75], %168 {strides = array<i32>} : memref<2x8x16x64xf32, #tpu.memory_space<vmem>>, vector<2x1x16x64xf32>,
    %169 = vector.extract_strided_slice %98 {offsets = [0, 7, 0, 0], sizes = [2, 1, 16, 64], strides = [1, 1, 1, 1]} : vector<2x8x16x64xf32> to vector<2x1x16x64xf32>
    %170 = vector.shape_cast %169 : vector<2x1x16x64xf32> to vector<2x16x64xf32>
    %171 = arith.mulf %170, %165 : vector<2x16x64xf32>
    %172 = vector.extract_strided_slice %104 {offsets = [0, 7, 0, 0], sizes = [2, 1, 16, 64], strides = [1, 1, 1, 1]} : vector<2x8x16x64xf32> to vector<2x1x16x64xf32>
    %173 = vector.shape_cast %172 : vector<2x1x16x64xf32> to vector<2x16x64xf32>
    %174 = arith.addf %171, %173 : vector<2x16x64xf32>
    %c0_76 = arith.constant 0 : index
    %c7_77 = arith.constant 7 : index
    %c0_78 = arith.constant 0 : index
    %c0_79 = arith.constant 0 : index
    %175 = vector.load %arg14[%c0_76, %c7_77, %c0_78, %c0_79] : memref<2x8x16x64xf32, #tpu.memory_space<vmem>>, vector<2x1x16x64xf32>
    %176 = vector.shape_cast %175 : vector<2x1x16x64xf32> to vector<2x16x64xf32>
    %177 = vector.shape_cast %174 : vector<2x16x64xf32> to vector<2x1x16x64xf32>
    tpu.vector_store %arg14[%c0_76, %c7_77, %c0_78, %c0_79], %177 {strides = array<i32>} : memref<2x8x16x64xf32, #tpu.memory_space<vmem>>, vector<2x1x16x64xf32>,
    %c0_80 = arith.constant 0 : index
    %c0_81 = arith.constant 0 : index
    %c0_82 = arith.constant 0 : index
    %c0_83 = arith.constant 0 : index
    %178 = vector.load %arg14[%c0_80, %c0_81, %c0_82, %c0_83] : memref<2x8x16x64xf32, #tpu.memory_space<vmem>>, vector<2x8x16x64xf32>
    %179 = vector.shape_cast %91 : vector<2x8x16xf32> to vector<2x8x16x1xf32>
    %180 = vector.broadcast %179 : vector<2x8x16x1xf32> to vector<2x8x16x64xf32>
    %181 = arith.mulf %178, %180 : vector<2x8x16x64xf32>
    %cst_84 = arith.constant dense<0.000000e+00> : vector<2x8x64xf32>
    %182 = vector.multi_reduction <add>, %181, %cst_84 [2] : vector<2x8x16x64xf32> to vector<2x8x64xf32>
    %c0_85 = arith.constant 0 : index
    %c0_86 = arith.constant 0 : index
    %183 = vector.load %arg10[%c0_85, %c0_86] : memref<1x64xf32, #tpu.memory_space<vmem>>, vector<1x64xf32>
    %184 = vector.shape_cast %183 : vector<1x64xf32> to vector<1x1x64xf32>
    %185 = vector.broadcast %184 : vector<1x1x64xf32> to vector<2x8x64xf32>
    %186 = arith.mulf %185, %69 : vector<2x8x64xf32>
    %187 = arith.addf %182, %186 : vector<2x8x64xf32>
    %cst_87 = arith.constant 5.000000e-01 : f32
    %188 = vector.broadcast %cst_87 : f32 to vector<2x8x64xf32>
    %189 = arith.mulf %188, %31 : vector<2x8x64xf32>
    %190 = math.tanh %189 : vector<2x8x64xf32>
    %cst_88 = arith.constant 1.000000e+00 : f32
    %191 = vector.broadcast %cst_88 : f32 to vector<2x8x64xf32>
    %192 = arith.addf %190, %191 : vector<2x8x64xf32>
    %cst_89 = arith.constant 5.000000e-01 : f32
    %193 = vector.broadcast %cst_89 : f32 to vector<2x8x64xf32>
    %194 = arith.mulf %193, %192 : vector<2x8x64xf32>
    %195 = arith.mulf %31, %194 : vector<2x8x64xf32>
    %196 = arith.mulf %187, %195 : vector<2x8x64xf32>
    %197 = vector.shape_cast %196 : vector<2x8x64xf32> to vector<16x64xf32>
    %c0_90 = arith.constant 0 : index
    %c0_91 = arith.constant 0 : index
    %198 = vector.load %arg11[%c0_90, %c0_91] : memref<64x32xf32, #tpu.memory_space<vmem>>, vector<64x32xf32>
    %cst_92 = arith.constant dense<0.000000e+00> : vector<16x32xf32>
    %199 = tpu.matmul %197, %198, %cst_92 {dimension_numbers = #tpu.dot_dimension_numbers<[1], [0], [0], [1], [0, 0, 1, 1], [], []>, precision = #tpu.contract_precision<fp32>} : vector<16x64xf32>, vector<64x32xf32>, vector<16x32xf32> -> vector<16x32xf32>
    %200 = arith.addf %1, %199 : vector<16x32xf32>
    %201 = vector.shape_cast %200 : vector<16x32xf32> to vector<2x8x32xf32>
    %c0_93 = arith.constant 0 : index
    %c0_94 = arith.constant 0 : index
    %c0_95 = arith.constant 0 : index
    %202 = vector.load %arg12[%c0_93, %c0_94, %c0_95] : memref<2x8x32xf32, #tpu.memory_space<vmem>>, vector<2x8x32xf32>
    tpu.vector_store %arg12[%c0_93, %c0_94, %c0_95], %201 {strides = array<i32>} : memref<2x8x32xf32, #tpu.memory_space<vmem>>, vector<2x8x32xf32>,
    return
  }
  func.func @transform_0(%arg0: i32) -> (i32, i32, i32) {
    %c0_i32 = arith.constant 0 : i32
    %c0_i32_0 = arith.constant 0 : i32
    %c0_i32_1 = arith.constant 0 : i32
    %c0_i32_2 = arith.constant 0 : i32
    return %c0_i32, %c0_i32_0, %c0_i32_1 : i32, i32, i32
  }
  func.func @transform_1(%arg0: i32) -> (i32, i32) {
    %c0_i32 = arith.constant 0 : i32
    %c0_i32_0 = arith.constant 0 : i32
    %c0_i32_1 = arith.constant 0 : i32
    return %c0_i32, %c0_i32_0 : i32, i32
  }
  func.func @transform_2(%arg0: i32) -> (i32, i32) {
    %c0_i32 = arith.constant 0 : i32
    %c0_i32_0 = arith.constant 0 : i32
    %c0_i32_1 = arith.constant 0 : i32
    return %c0_i32, %c0_i32_0 : i32, i32
  }
  func.func @transform_3(%arg0: i32) -> (i32, i32) {
    %c0_i32 = arith.constant 0 : i32
    %c0_i32_0 = arith.constant 0 : i32
    %c0_i32_1 = arith.constant 0 : i32
    return %c0_i32, %c0_i32_0 : i32, i32
  }
  func.func @transform_4(%arg0: i32) -> (i32, i32) {
    %c0_i32 = arith.constant 0 : i32
    %c0_i32_0 = arith.constant 0 : i32
    %c0_i32_1 = arith.constant 0 : i32
    return %c0_i32, %c0_i32_0 : i32, i32
  }
  func.func @transform_5(%arg0: i32) -> (i32, i32) {
    %c0_i32 = arith.constant 0 : i32
    %c0_i32_0 = arith.constant 0 : i32
    %c0_i32_1 = arith.constant 0 : i32
    return %c0_i32, %c0_i32_0 : i32, i32
  }
  func.func @transform_6(%arg0: i32) -> (i32, i32) {
    %c0_i32 = arith.constant 0 : i32
    %c0_i32_0 = arith.constant 0 : i32
    %c0_i32_1 = arith.constant 0 : i32
    return %c0_i32, %c0_i32_0 : i32, i32
  }
  func.func @transform_7(%arg0: i32) -> (i32, i32) {
    %c0_i32 = arith.constant 0 : i32
    %c0_i32_0 = arith.constant 0 : i32
    %c0_i32_1 = arith.constant 0 : i32
    return %c0_i32, %c0_i32_0 : i32, i32
  }
  func.func @transform_8(%arg0: i32) -> (i32, i32) {
    %c0_i32 = arith.constant 0 : i32
    %c0_i32_0 = arith.constant 0 : i32
    %c0_i32_1 = arith.constant 0 : i32
    return %c0_i32, %c0_i32_0 : i32, i32
  }
  func.func @transform_9(%arg0: i32) -> (i32, i32) {
    %c0_i32 = arith.constant 0 : i32
    %c0_i32_0 = arith.constant 0 : i32
    %c0_i32_1 = arith.constant 0 : i32
    return %c0_i32, %c0_i32_0 : i32, i32
  }
  func.func @transform_10(%arg0: i32) -> (i32, i32) {
    %c0_i32 = arith.constant 0 : i32
    %c0_i32_0 = arith.constant 0 : i32
    %c0_i32_1 = arith.constant 0 : i32
    return %c0_i32, %c0_i32_0 : i32, i32
  }
  func.func @transform_11(%arg0: i32) -> (i32, i32, i32) {
    %c0_i32 = arith.constant 0 : i32
    %c0_i32_0 = arith.constant 0 : i32
    %c0_i32_1 = arith.constant 0 : i32
    %c0_i32_2 = arith.constant 0 : i32
    return %c0_i32, %c0_i32_0, %c0_i32_1 : i32, i32, i32
  }
}

</mosaic_0001>

<llo_original>
// kernel: block_forward.1
$region0: #{block_forward.1}
  #allocation0 [shape = 'u32[]', space=smem, size = 0x4, offset = 0x4, fixed_abs, tag = 'smem constant byte address 0x4 - core index']
  #allocation1 [shape = 'u32[144,128]{1,0:T(1,128)}', space=vmem, size = 0x12000, scoped, tag = 'internal scratch']
  #allocation2 [shape = 'f32[2,16,64]{2,1,0:T(8,128)}', space=vmem, size = 0x4000, scoped, tag = 'scratch operand']
  #allocation3 [shape = 'f32[2,8,16,64]{3,2,1,0:T(8,128)}', space=vmem, size = 0x20000, scoped, tag = 'scratch operand']
  %s0 = inlined_call_operand.vmem [shape: f32[2,8,32], index: 0, kind: input, shape index: {}]
  %s1 = inlined_call_operand.vmem [shape: f32[1,32], index: 1, kind: input, shape index: {}]
  %s2 = inlined_call_operand.vmem [shape: f32[1,32], index: 2, kind: input, shape index: {}]
  %s3 = inlined_call_operand.vmem [shape: f32[32,128], index: 3, kind: input, shape index: {}]
  %s4 = inlined_call_operand.vmem [shape: f32[4,64], index: 4, kind: input, shape index: {}]
  %s5 = inlined_call_operand.vmem [shape: f32[1,64], index: 5, kind: input, shape index: {}]
  %s6 = inlined_call_operand.vmem [shape: f32[64,96], index: 6, kind: input, shape index: {}]
  %s7 = inlined_call_operand.vmem [shape: f32[1,64], index: 7, kind: input, shape index: {}]
  %s8 = inlined_call_operand.vmem [shape: f32[16,64], index: 8, kind: input, shape index: {}]
  %s9 = inlined_call_operand.vmem [shape: f32[1,64], index: 9, kind: input, shape index: {}]
  %s10 = inlined_call_operand.vmem [shape: f32[64,32], index: 10, kind: input, shape index: {}]
  %s11 = inlined_call_operand.hbm [shape: f32[2,8,32], index: 11, kind: output, shape index: {}]
  %s12 = sld [smem:[#allocation0]]
  $region54: #{block_forward.1} parent=0
    _
  %s14 = ssub.s32 1, %s12
  %s15 = scalar_select 0, %s14, %s12
  $region1: #{block_forward.1} parent=0
    #allocation4 [shape = 'u8[8192]{0}', space=vmem, size = 0x2000, scoped, tag = 'output window, operand 0, single buffered']
    #allocation5 [shape = 's32[1]{0}', space=sflag, size = 0x4, scoped, tag = 'scoped memory for block_forward.1']
    %16 = vsyncpa [#allocation5], 0
    // Predicated region
    $region2: #{block_forward.1} parent=1 // pred_check
      _
    $region3: #{block_forward.1} parent=1 // pred_check_branch
      %18 = sbr.rel (0) target = $region5
    $region4: #{block_forward.1} parent=1 // pred_region
      _
    $region5: #{block_forward.1} parent=1 // pred_fallthru
      _
    // Predicated region
    $region6: #{block_forward.1} parent=1 // pred_check
      _
    $region7: #{block_forward.1} parent=1 // pred_check_branch
      %20 = sbr.rel (0) target = $region9
    $region8: #{block_forward.1} parent=1 // pred_region
      _
    $region9: #{block_forward.1} parent=1 // pred_fallthru
      _
    // Predicated region
    $region10: #{block_forward.1} parent=1 // pred_check
      _
    $region11: #{block_forward.1} parent=1 // pred_check_branch
      %22 = sbr.rel (0) target = $region13
    $region12: #{block_forward.1} parent=1 // pred_region
      _
    $region13: #{block_forward.1} parent=1 // pred_fallthru
      _
    // Predicated region
    $region14: #{block_forward.1} parent=1 // pred_check
      _
    $region15: #{block_forward.1} parent=1 // pred_check_branch
      %24 = sbr.rel (0) target = $region17
    $region16: #{block_forward.1} parent=1 // pred_region
      _
    $region17: #{block_forward.1} parent=1 // pred_fallthru
      _
    // Predicated region
    $region18: #{block_forward.1} parent=1 // pred_check
      _
    $region19: #{block_forward.1} parent=1 // pred_check_branch
      %26 = sbr.rel (0) target = $region21
    $region20: #{block_forward.1} parent=1 // pred_region
      _
    $region21: #{block_forward.1} parent=1 // pred_fallthru
      _
    // Predicated region
    $region22: #{block_forward.1} parent=1 // pred_check
      _
    $region23: #{block_forward.1} parent=1 // pred_check_branch
      %28 = sbr.rel (0) target = $region25
    $region24: #{block_forward.1} parent=1 // pred_region
      _
    $region25: #{block_forward.1} parent=1 // pred_fallthru
      _
    // Predicated region
    $region26: #{block_forward.1} parent=1 // pred_check
      _
    $region27: #{block_forward.1} parent=1 // pred_check_branch
      %30 = sbr.rel (0) target = $region29
    $region28: #{block_forward.1} parent=1 // pred_region
      _
    $region29: #{block_forward.1} parent=1 // pred_fallthru
      _
    // Predicated region
    $region30: #{block_forward.1} parent=1 // pred_check
      _
    $region31: #{block_forward.1} parent=1 // pred_check_branch
      %32 = sbr.rel (0) target = $region33
    $region32: #{block_forward.1} parent=1 // pred_region
      _
    $region33: #{block_forward.1} parent=1 // pred_fallthru
      _
    // Predicated region
    $region34: #{block_forward.1} parent=1 // pred_check
      _
    $region35: #{block_forward.1} parent=1 // pred_check_branch
      %34 = sbr.rel (0) target = $region37
    $region36: #{block_forward.1} parent=1 // pred_region
      _
    $region37: #{block_forward.1} parent=1 // pred_fallthru
      _
    // Predicated region
    $region38: #{block_forward.1} parent=1 // pred_check
      _
    $region39: #{block_forward.1} parent=1 // pred_check_branch
      %36 = sbr.rel (0) target = $region41
    $region40: #{block_forward.1} parent=1 // pred_region
      _
    $region41: #{block_forward.1} parent=1 // pred_fallthru
      _
    // Predicated region
    $region42: #{block_forward.1} parent=1 // pred_check
      _
    $region43: #{block_forward.1} parent=1 // pred_check_branch
      %38 = sbr.rel (0) target = $region45
    $region44: #{block_forward.1} parent=1 // pred_region
      _
    $region45: #{block_forward.1} parent=1 // pred_fallthru
      _
    %v39 = vld [vmem:[%s0] sm:$0xff]
    %v40 = vld [vmem:[%s0 + $0x8] sm:$0xff]
    %vm41 = vcmask 261120
    %v42 = vsel %vm41, %v39, 0.0
    %43 = vadd.xlane.f32.xlu0 %v42
    %v44 = vpop.xlane.xlu0 %43
    %v45 = vsel %vm41, %v40, 0.0
    %46 = vadd.xlane.f32.xlu0 %v45
    %v47 = vpop.xlane.xlu0 %46
    %v48 = vrcp.pop 32.0
    %v49 = vmul.f32 %v44, %v48
    %v50 = vmul.f32 %v47, %v48
    %v51 = vsub.f32 %v39, %v49
    %v52 = vsub.f32 %v40, %v50
    %v53 = vmul.f32 %v51, %v51
    %v54 = vmul.f32 %v52, %v52
    %v55 = vsel %vm41, %v53, 0.0
    %56 = vadd.xlane.f32.xlu0 %v55
    %v57 = vpop.xlane.xlu0 %56
    %v58 = vsel %vm41, %v54, 0.0
    %59 = vadd.xlane.f32.xlu0 %v58
    %v60 = vpop.xlane.xlu0 %59
    %v61 = vmul.f32 %v57, %v48
    %v62 = vmul.f32 %v60, %v48
    %v63 = vadd.f32 %v61, 1e-05
    %v64 = vadd.f32 %v62, 1e-05
    %v65 = vrsqrt.pop %v63
    %v66 = vrsqrt.pop %v64
    %v67 = vmul.f32 %v51, %v65
    %v68 = vmul.f32 %v52, %v66
    %v69 = vld [vmem:[%s1] sm:$0x1]
    %v71 = vlaneseq
    %v72 = vshrl.u32 %v71, 7
    %v73 = vsub.s32 0, %v72
    %v74 = vrot.slane %v69, %v73
    %v76 = vmul.f32 %v67, %v74
    %v77 = vmul.f32 %v68, %v74
    %v78 = vld [vmem:[%s2] sm:$0x1]
    %v80 = vlaneseq
    %v81 = vshrl.u32 %v80, 7
    %v82 = vsub.s32 0, %v81
    %v83 = vrot.slane %v78, %v82
    %v85 = vadd.f32 %v76, %v83
    %v86 = vadd.f32 %v77, %v83
    %v87 = vld [vmem:[%s3] sm:$0xff]
    %v88 = vld [vmem:[%s3 + $0x8] sm:$0xff]
    %v89 = vld [vmem:[%s3 + $0x10] sm:$0xff]
    %v90 = vld [vmem:[%s3 + $0x18] sm:$0xff]
    %v92 = vsel %vm41, %v85, 0
    %v95 = vsel %vm41, %v86, 0
    %97 = vmatprep.subr.mxu0 0.0
    %v98 = vand.u32 %v87, 4294901760
    %99 = vmatpush1.msra.mxu0 %v98
    %100 = vmatprep.subr.mxu0 0.0
    %v101 = vand.u32 %v88, 4294901760
    %102 = vmatpush1.msra.mxu0 %v101
    %103 = vmatprep.subr.mxu0 0.0
    %v104 = vand.u32 %v89, 4294901760
    %105 = vmatpush1.msra.mxu0 %v104
    %106 = vmatprep.subr.mxu0 0.0
    %v107 = vand.u32 %v90, 4294901760
    %108 = vmatpush1.msra.mxu0 %v107
    %109 = vmatprep.subr.mxu0 0.0
    %110 = vmatpush1.msra.mxu0 0.0
    %111 = vmatprep.subr.mxu0 0.0
    %112 = vmatpush1.msra.mxu0 0.0
    %113 = vmatprep.subr.mxu0 0.0
    %114 = vmatpush1.msra.mxu0 0.0
    %115 = vmatprep.subr.mxu0 0.0
    %116 = vmatpush1.msra.mxu0 0.0
    %117 = vmatprep.subr.mxu0 0.0
    %118 = vmatpush1.msra.mxu0 0.0
    %119 = vmatprep.subr.mxu0 0.0
    %120 = vmatpush1.msra.mxu0 0.0
    %121 = vmatprep.subr.mxu0 0.0
    %122 = vmatpush1.msra.mxu0 0.0
    %123 = vmatprep.subr.mxu0 0.0
    %124 = vmatpush1.msra.mxu0 0.0
    %125 = vmatprep.subr.mxu0 0.0
    %126 = vmatpush1.msra.mxu0 0.0
    %127 = vmatprep.subr.mxu0 0.0
    %128 = vmatpush1.msra.mxu0 0.0
    %129 = vmatprep.subr.mxu0 0.0
    %130 = vmatpush1.msra.mxu0 0.0
    %131 = vmatprep.subr.mxu0 0.0
    %132 = vmatpush1.msra.mxu0 0.0
    %133 = vmatprep.subr.mxu0 0.0
    %134 = vmatpush1.msra.mxu0 0.0
    %135 = vmatprep.subr.mxu0 0.0
    %136 = vmatpush1.msra.mxu0 0.0
    %137 = vmatprep.subr.mxu0 0.0
    %138 = vmatpush1.msra.mxu0 0.0
    %139 = vmatprep.subr.mxu0 0.0
    %140 = vmatpush1.msra.mxu0 0.0
    %141 = vmatprep.subr.mxu0 0.0
    %142 = vmatpush1.msra.mxu0 0.0
    %143 = vmatprep.subr.mxu0 0.0
    %144 = vmatpush1.msra.mxu0 0.0
    %145 = vmatprep.subr.mxu0 0.0
    %146 = vmatpush1.msra.mxu0 0.0
    %147 = vmatprep.subr.mxu0 0.0
    %148 = vmatpush1.msra.mxu0 0.0
    %149 = vmatprep.subr.mxu0 0.0
    %150 = vmatpush1.msra.mxu0 0.0
    %151 = vmatprep.subr.mxu0 0.0
    %152 = vmatpush1.msra.mxu0 0.0
    %153 = vmatprep.subr.mxu0 0.0
    %154 = vmatpush1.msra.mxu0 0.0
    %155 = vmatprep.subr.mxu0 0.0
    %156 = vmatpush1.msra.mxu0 0.0
    %157 = vmatprep.subr.mxu0 0.0
    %158 = vmatpush1.msra.mxu0 0.0
    %159 = vmatprep.subr.mxu0 0.0
    %160 = vmatpush1.msra.mxu0 0.0
    %161 = vmatprep.subr.mxu0 0.0
    %162 = vmatpush1.msra.mxu0 0.0
    %163 = vmatprep.subr.mxu0 0.0
    %164 = vmatpush1.msra.mxu0 0.0
    %165 = vmatprep.mubr.f32.mxu0 0.0
    %v166 = vand.u32 %v92, 4294901760
    %v167 = vsub.f32 %v92, %v166
    %v168 = vand.u32 %v167, 4294901760
    %v169 = vsub.f32 %v167, %v168
    %v170 = vand.u32 %v169, 4294901760
    %171 = vmatmul.mubr.f32.gmra.mrb[0].mxu0 %v170
    %v172 = vpop.f32.mrb[0].mxu0
    %v173 = vadd.f32 0.0, %v172
    %v174 = vpop.f32.mrb[0].mxu0
    %175 = vmatprep.mubr.f32.mxu0 0.0
    %v176 = vand.u32 %v95, 4294901760
    %v177 = vsub.f32 %v95, %v176
    %v178 = vand.u32 %v177, 4294901760
    %v179 = vsub.f32 %v177, %v178
    %v180 = vand.u32 %v179, 4294901760
    %181 = vmatmul.mubr.f32.gmra.mrb[0].mxu0 %v180
    %v182 = vpop.f32.mrb[0].mxu0
    %v183 = vadd.f32 0.0, %v182
    %v184 = vpop.f32.mrb[0].mxu0
    %185 = vdwg.mxu0
    %186 = vmatprep.subr.mxu0 0.0
    %v187 = vand.u32 %v87, 4294901760
    %v188 = vsub.f32 %v87, %v187
    %v189 = vand.u32 %v188, 4294901760
    %v190 = vsub.f32 %v188, %v189
    %v191 = vand.u32 %v190, 4294901760
    %192 = vmatpush1.msra.mxu0 %v191
    %193 = vmatprep.subr.mxu0 0.0
    %v194 = vand.u32 %v88, 4294901760
    %v195 = vsub.f32 %v88, %v194
    %v196 = vand.u32 %v195, 4294901760
    %v197 = vsub.f32 %v195, %v196
    %v198 = vand.u32 %v197, 4294901760
    %199 = vmatpush1.msra.mxu0 %v198
    %200 = vmatprep.subr.mxu0 0.0
    %v201 = vand.u32 %v89, 4294901760
    %v202 = vsub.f32 %v89, %v201
    %v203 = vand.u32 %v202, 4294901760
    %v204 = vsub.f32 %v202, %v203
    %v205 = vand.u32 %v204, 4294901760
    %206 = vmatpush1.msra.mxu0 %v205
    %207 = vmatprep.subr.mxu0 0.0
    %v208 = vand.u32 %v90, 4294901760
    %v209 = vsub.f32 %v90, %v208
    %v210 = vand.u32 %v209, 4294901760
    %v211 = vsub.f32 %v209, %v210
    %v212 = vand.u32 %v211, 4294901760
    %213 = vmatpush1.msra.mxu0 %v212
    %214 = vmatprep.subr.mxu0 0.0
    %215 = vmatpush1.msra.mxu0 0.0
    %216 = vmatprep.subr.mxu0 0.0
    %217 = vmatpush1.msra.mxu0 0.0
    %218 = vmatprep.subr.mxu0 0.0
    %219 = vmatpush1.msra.mxu0 0.0
    %220 = vmatprep.subr.mxu0 0.0
    %221 = vmatpush1.msra.mxu0 0.0
    %222 = vmatprep.subr.mxu0 0.0
    %223 = vmatpush1.msra.mxu0 0.0
    %224 = vmatprep.subr.mxu0 0.0
    %225 = vmatpush1.msra.mxu0 0.0
    %226 = vmatprep.subr.mxu0 0.0
    %227 = vmatpush1.msra.mxu0 0.0
    %228 = vmatprep.subr.mxu0 0.0
    %229 = vmatpush1.msra.mxu0 0.0
    %230 = vmatprep.subr.mxu0 0.0
    %231 = vmatpush1.msra.mxu0 0.0
    %232 = vmatprep.subr.mxu0 0.0
    %233 = vmatpush1.msra.mxu0 0.0
    %234 = vmatprep.subr.mxu0 0.0
    %235 = vmatpush1.msra.mxu0 0.0
    %236 = vmatprep.subr.mxu0 0.0
    %237 = vmatpush1.msra.mxu0 0.0
    %238 = vmatprep.subr.mxu0 0.0
    %239 = vmatpush1.msra.mxu0 0.0
    %240 = vmatprep.subr.mxu0 0.0
    %241 = vmatpush1.msra.mxu0 0.0
    %242 = vmatprep.subr.mxu0 0.0
    %243 = vmatpush1.msra.mxu0 0.0
    %244 = vmatprep.subr.mxu0 0.0
    %245 = vmatpush1.msra.mxu0 0.0
    %246 = vmatprep.subr.mxu0 0.0
    %247 = vmatpush1.msra.mxu0 0.0
    %248 = vmatprep.subr.mxu0 0.0
    %249 = vmatpush1.msra.mxu0 0.0
    %250 = vmatprep.subr.mxu0 0.0
    %251 = vmatpush1.msra.mxu0 0.0
    %252 = vmatprep.subr.mxu0 0.0
    %253 = vmatpush1.msra.mxu0 0.0
    %254 = vmatprep.subr.mxu0 0.0
    %255 = vmatpush1.msra.mxu0 0.0
    %256 = vmatprep.subr.mxu0 0.0
    %257 = vmatpush1.msra.mxu0 0.0
    %258 = vmatprep.subr.mxu0 0.0
    %259 = vmatpush1.msra.mxu0 0.0
    %260 = vmatprep.subr.mxu0 0.0
    %261 = vmatpush1.msra.mxu0 0.0
    %262 = vmatprep.subr.mxu0 0.0
    %263 = vmatpush1.msra.mxu0 0.0
    %264 = vmatprep.subr.mxu0 0.0
    %265 = vmatpush1.msra.mxu0 0.0
    %266 = vmatprep.subr.mxu0 0.0
    %267 = vmatpush1.msra.mxu0 0.0
    %268 = vmatprep.subr.mxu0 0.0
    %269 = vmatpush1.msra.mxu0 0.0
    %270 = vmatprep.mubr.f32.mxu0 0.0
    %v271 = vand.u32 %v92, 4294901760
    %272 = vmatmul.mubr.f32.gmra.mrb[0].mxu0 %v271
    %v273 = vpop.f32.mrb[0].mxu0
    %v274 = vadd.f32 %v173, %v273
    %v275 = vpop.f32.mrb[0].mxu0
    %276 = vmatprep.mubr.f32.mxu0 0.0
    %v277 = vand.u32 %v95, 4294901760
    %278 = vmatmul.mubr.f32.gmra.mrb[0].mxu0 %v277
    %v279 = vpop.f32.mrb[0].mxu0
    %v280 = vadd.f32 %v183, %v279
    %v281 = vpop.f32.mrb[0].mxu0
    %282 = vdwg.mxu0
    %283 = vmatprep.subr.mxu0 0.0
    %v284 = vand.u32 %v87, 4294901760
    %v285 = vsub.f32 %v87, %v284
    %286 = vmatpush1.msra.mxu0 %v285
    %287 = vmatprep.subr.mxu0 0.0
    %v288 = vand.u32 %v88, 4294901760
    %v289 = vsub.f32 %v88, %v288
    %290 = vmatpush1.msra.mxu0 %v289
    %291 = vmatprep.subr.mxu0 0.0
    %v292 = vand.u32 %v89, 4294901760
    %v293 = vsub.f32 %v89, %v292
    %294 = vmatpush1.msra.mxu0 %v293
    %295 = vmatprep.subr.mxu0 0.0
    %v296 = vand.u32 %v90, 4294901760
    %v297 = vsub.f32 %v90, %v296
    %298 = vmatpush1.msra.mxu0 %v297
    %299 = vmatprep.subr.mxu0 0.0
    %300 = vmatpush1.msra.mxu0 0.0
    %301 = vmatprep.subr.mxu0 0.0
    %302 = vmatpush1.msra.mxu0 0.0
    %303 = vmatprep.subr.mxu0 0.0
    %304 = vmatpush1.msra.mxu0 0.0
    %305 = vmatprep.subr.mxu0 0.0
    %306 = vmatpush1.msra.mxu0 0.0
    %307 = vmatprep.subr.mxu0 0.0
    %308 = vmatpush1.msra.mxu0 0.0
    %309 = vmatprep.subr.mxu0 0.0
    %310 = vmatpush1.msra.mxu0 0.0
    %311 = vmatprep.subr.mxu0 0.0
    %312 = vmatpush1.msra.mxu0 0.0
    %313 = vmatprep.subr.mxu0 0.0
    %314 = vmatpush1.msra.mxu0 0.0
    %315 = vmatprep.subr.mxu0 0.0
    %316 = vmatpush1.msra.mxu0 0.0
    %317 = vmatprep.subr.mxu0 0.0
    %318 = vmatpush1.msra.mxu0 0.0
    %319 = vmatprep.subr.mxu0 0.0
    %320 = vmatpush1.msra.mxu0 0.0
    %321 = vmatprep.subr.mxu0 0.0
    %322 = vmatpush1.msra.mxu0 0.0
    %323 = vmatprep.subr.mxu0 0.0
    %324 = vmatpush1.msra.mxu0 0.0
    %325 = vmatprep.subr.mxu0 0.0
    %326 = vmatpush1.msra.mxu0 0.0
    %327 = vmatprep.subr.mxu0 0.0
    %328 = vmatpush1.msra.mxu0 0.0
    %329 = vmatprep.subr.mxu0 0.0
    %330 = vmatpush1.msra.mxu0 0.0
    %331 = vmatprep.subr.mxu0 0.0
    %332 = vmatpush1.msra.mxu0 0.0
    %333 = vmatprep.subr.mxu0 0.0
    %334 = vmatpush1.msra.mxu0 0.0
    %335 = vmatprep.subr.mxu0 0.0
    %336 = vmatpush1.msra.mxu0 0.0
    %337 = vmatprep.subr.mxu0 0.0
    %338 = vmatpush1.msra.mxu0 0.0
    %339 = vmatprep.subr.mxu0 0.0
    %340 = vmatpush1.msra.mxu0 0.0
    %341 = vmatprep.subr.mxu0 0.0
    %342 = vmatpush1.msra.mxu0 0.0
    %343 = vmatprep.subr.mxu0 0.0
    %344 = vmatpush1.msra.mxu0 0.0
    %345 = vmatprep.subr.mxu0 0.0
    %346 = vmatpush1.msra.mxu0 0.0
    %347 = vmatprep.subr.mxu0 0.0
    %348 = vmatpush1.msra.mxu0 0.0
    %349 = vmatprep.subr.mxu0 0.0
    %350 = vmatpush1.msra.mxu0 0.0
    %351 = vmatprep.subr.mxu0 0.0
    %352 = vmatpush1.msra.mxu0 0.0
    %353 = vmatprep.subr.mxu0 0.0
    %354 = vmatpush1.msra.mxu0 0.0
    %355 = vmatprep.mubr.f32.mxu0 0.0
    %v356 = vand.u32 %v92, 4294901760
    %v357 = vsub.f32 %v92, %v356
    %358 = vmatmul.mubr.f32.gmra.mrb[0].mxu0 %v357
    %v359 = vpop.f32.mrb[0].mxu0
    %v360 = vadd.f32 %v274, %v359
    %v361 = vpop.f32.mrb[0].mxu0
    %362 = vmatprep.mubr.f32.mxu0 0.0
    %v363 = vand.u32 %v95, 4294901760
    %v364 = vsub.f32 %v95, %v363
    %365 = vmatmul.mubr.f32.gmra.mrb[0].mxu0 %v364
    %v366 = vpop.f32.mrb[0].mxu0
    %v367 = vadd.f32 %v280, %v366
    %v368 = vpop.f32.mrb[0].mxu0
    %369 = vdwg.mxu0
    %370 = vmatprep.subr.mxu0 0.0
    %v371 = vand.u32 %v87, 4294901760
    %372 = vmatpush1.msra.mxu0 %v371
    %373 = vmatprep.subr.mxu0 0.0
    %v374 = vand.u32 %v88, 4294901760
    %375 = vmatpush1.msra.mxu0 %v374
    %376 = vmatprep.subr.mxu0 0.0
    %v377 = vand.u32 %v89, 4294901760
    %378 = vmatpush1.msra.mxu0 %v377
    %379 = vmatprep.subr.mxu0 0.0
    %v380 = vand.u32 %v90, 4294901760
    %381 = vmatpush1.msra.mxu0 %v380
    %382 = vmatprep.subr.mxu0 0.0
    %383 = vmatpush1.msra.mxu0 0.0
    %384 = vmatprep.subr.mxu0 0.0
    %385 = vmatpush1.msra.mxu0 0.0
    %386 = vmatprep.subr.mxu0 0.0
    %387 = vmatpush1.msra.mxu0 0.0
    %388 = vmatprep.subr.mxu0 0.0
    %389 = vmatpush1.msra.mxu0 0.0
    %390 = vmatprep.subr.mxu0 0.0
    %391 = vmatpush1.msra.mxu0 0.0
    %392 = vmatprep.subr.mxu0 0.0
    %393 = vmatpush1.msra.mxu0 0.0
    %394 = vmatprep.subr.mxu0 0.0
    %395 = vmatpush1.msra.mxu0 0.0
    %396 = vmatprep.subr.mxu0 0.0
    %397 = vmatpush1.msra.mxu0 0.0
    %398 = vmatprep.subr.mxu0 0.0
    %399 = vmatpush1.msra.mxu0 0.0
    %400 = vmatprep.subr.mxu0 0.0
    %401 = vmatpush1.msra.mxu0 0.0
    %402 = vmatprep.subr.mxu0 0.0
    %403 = vmatpush1.msra.mxu0 0.0
    %404 = vmatprep.subr.mxu0 0.0
    %405 = vmatpush1.msra.mxu0 0.0
    %406 = vmatprep.subr.mxu0 0.0
    %407 = vmatpush1.msra.mxu0 0.0
    %408 = vmatprep.subr.mxu0 0.0
    %409 = vmatpush1.msra.mxu0 0.0
    %410 = vmatprep.subr.mxu0 0.0
    %411 = vmatpush1.msra.mxu0 0.0
    %412 = vmatprep.subr.mxu0 0.0
    %413 = vmatpush1.msra.mxu0 0.0
    %414 = vmatprep.subr.mxu0 0.0
    %415 = vmatpush1.msra.mxu0 0.0
    %416 = vmatprep.subr.mxu0 0.0
    %417 = vmatpush1.msra.mxu0 0.0
    %418 = vmatprep.subr.mxu0 0.0
    %419 = vmatpush1.msra.mxu0 0.0
    %420 = vmatprep.subr.mxu0 0.0
    %421 = vmatpush1.msra.mxu0 0.0
    %422 = vmatprep.subr.mxu0 0.0
    %423 = vmatpush1.msra.mxu0 0.0
    %424 = vmatprep.subr.mxu0 0.0
    %425 = vmatpush1.msra.mxu0 0.0
    %426 = vmatprep.subr.mxu0 0.0
    %427 = vmatpush1.msra.mxu0 0.0
    %428 = vmatprep.subr.mxu0 0.0
    %429 = vmatpush1.msra.mxu0 0.0
    %430 = vmatprep.subr.mxu0 0.0
    %431 = vmatpush1.msra.mxu0 0.0
    %432 = vmatprep.subr.mxu0 0.0
    %433 = vmatpush1.msra.mxu0 0.0
    %434 = vmatprep.subr.mxu0 0.0
    %435 = vmatpush1.msra.mxu0 0.0
    %436 = vmatprep.subr.mxu0 0.0
    %437 = vmatpush1.msra.mxu0 0.0
    %438 = vmatprep.mubr.f32.mxu0 0.0
    %v439 = vand.u32 %v92, 4294901760
    %v440 = vsub.f32 %v92, %v439
    %v441 = vand.u32 %v440, 4294901760
    %442 = vmatmul.mubr.f32.gmra.mrb[0].mxu0 %v441
    %v443 = vpop.f32.mrb[0].mxu0
    %v444 = vadd.f32 %v360, %v443
    %v445 = vpop.f32.mrb[0].mxu0
    %446 = vmatprep.mubr.f32.mxu0 0.0
    %v447 = vand.u32 %v95, 4294901760
    %v448 = vsub.f32 %v95, %v447
    %v449 = vand.u32 %v448, 4294901760
    %450 = vmatmul.mubr.f32.gmra.mrb[0].mxu0 %v449
    %v451 = vpop.f32.mrb[0].mxu0
    %v452 = vadd.f32 %v367, %v451
    %v453 = vpop.f32.mrb[0].mxu0
    %454 = vdwg.mxu0
    %455 = vmatprep.subr.mxu0 0.0
    %v456 = vand.u32 %v87, 4294901760
    %v457 = vsub.f32 %v87, %v456
    %v458 = vand.u32 %v457, 4294901760
    %459 = vmatpush1.msra.mxu0 %v458
    %460 = vmatprep.subr.mxu0 0.0
    %v461 = vand.u32 %v88, 4294901760
    %v462 = vsub.f32 %v88, %v461
    %v463 = vand.u32 %v462, 4294901760
    %464 = vmatpush1.msra.mxu0 %v463
    %465 = vmatprep.subr.mxu0 0.0
    %v466 = vand.u32 %v89, 4294901760
    %v467 = vsub.f32 %v89, %v466
    %v468 = vand.u32 %v467, 4294901760
    %469 = vmatpush1.msra.mxu0 %v468
    %470 = vmatprep.subr.mxu0 0.0
    %v471 = vand.u32 %v90, 4294901760
    %v472 = vsub.f32 %v90, %v471
    %v473 = vand.u32 %v472, 4294901760
    %474 = vmatpush1.msra.mxu0 %v473
    %475 = vmatprep.subr.mxu0 0.0
    %476 = vmatpush1.msra.mxu0 0.0
    %477 = vmatprep.subr.mxu0 0.0
    %478 = vmatpush1.msra.mxu0 0.0
    %479 = vmatprep.subr.mxu0 0.0
    %480 = vmatpush1.msra.mxu0 0.0
    %481 = vmatprep.subr.mxu0 0.0
    %482 = vmatpush1.msra.mxu0 0.0
    %483 = vmatprep.subr.mxu0 0.0
    %484 = vmatpush1.msra.mxu0 0.0
    %485 = vmatprep.subr.mxu0 0.0
    %486 = vmatpush1.msra.mxu0 0.0
    %487 = vmatprep.subr.mxu0 0.0
    %488 = vmatpush1.msra.mxu0 0.0
    %489 = vmatprep.subr.mxu0 0.0
    %490 = vmatpush1.msra.mxu0 0.0
    %491 = vmatprep.subr.mxu0 0.0
    %492 = vmatpush1.msra.mxu0 0.0
    %493 = vmatprep.subr.mxu0 0.0
    %494 = vmatpush1.msra.mxu0 0.0
    %495 = vmatprep.subr.mxu0 0.0
    %496 = vmatpush1.msra.mxu0 0.0
    %497 = vmatprep.subr.mxu0 0.0
    %498 = vmatpush1.msra.mxu0 0.0
    %499 = vmatprep.subr.mxu0 0.0
    %500 = vmatpush1.msra.mxu0 0.0
    %501 = vmatprep.subr.mxu0 0.0
    %502 = vmatpush1.msra.mxu0 0.0
    %503 = vmatprep.subr.mxu0 0.0
    %504 = vmatpush1.msra.mxu0 0.0
    %505 = vmatprep.subr.mxu0 0.0
    %506 = vmatpush1.msra.mxu0 0.0
    %507 = vmatprep.subr.mxu0 0.0
    %508 = vmatpush1.msra.mxu0 0.0
    %509 = vmatprep.subr.mxu0 0.0
    %510 = vmatpush1.msra.mxu0 0.0
    %511 = vmatprep.subr.mxu0 0.0
    %512 = vmatpush1.msra.mxu0 0.0
    %513 = vmatprep.subr.mxu0 0.0
    %514 = vmatpush1.msra.mxu0 0.0
    %515 = vmatprep.subr.mxu0 0.0
    %516 = vmatpush1.msra.mxu0 0.0
    %517 = vmatprep.subr.mxu0 0.0
    %518 = vmatpush1.msra.mxu0 0.0
    %519 = vmatprep.subr.mxu0 0.0
    %520 = vmatpush1.msra.mxu0 0.0
    %521 = vmatprep.subr.mxu0 0.0
    %522 = vmatpush1.msra.mxu0 0.0
    %523 = vmatprep.subr.mxu0 0.0
    %524 = vmatpush1.msra.mxu0 0.0
    %525 = vmatprep.subr.mxu0 0.0
    %526 = vmatpush1.msra.mxu0 0.0
    %527 = vmatprep.subr.mxu0 0.0
    %528 = vmatpush1.msra.mxu0 0.0
    %529 = vmatprep.subr.mxu0 0.0
    %530 = vmatpush1.msra.mxu0 0.0
    %531 = vmatprep.mubr.f32.mxu0 0.0
    %v532 = vand.u32 %v92, 4294901760
    %533 = vmatmul.mubr.f32.gmra.mrb[0].mxu0 %v532
    %v534 = vpop.f32.mrb[0].mxu0
    %v535 = vadd.f32 %v444, %v534
    %v536 = vpop.f32.mrb[0].mxu0
    %537 = vmatprep.mubr.f32.mxu0 0.0
    %v538 = vand.u32 %v95, 4294901760
    %539 = vmatmul.mubr.f32.gmra.mrb[0].mxu0 %v538
    %v540 = vpop.f32.mrb[0].mxu0
    %v541 = vadd.f32 %v452, %v540
    %v542 = vpop.f32.mrb[0].mxu0
    %543 = vdwg.mxu0
    %544 = vmatprep.subr.mxu0 0.0
    %v545 = vand.u32 %v87, 4294901760
    %546 = vmatpush1.msra.mxu0 %v545
    %547 = vmatprep.subr.mxu0 0.0
    %v548 = vand.u32 %v88, 4294901760
    %549 = vmatpush1.msra.mxu0 %v548
    %550 = vmatprep.subr.mxu0 0.0
    %v551 = vand.u32 %v89, 4294901760
    %552 = vmatpush1.msra.mxu0 %v551
    %553 = vmatprep.subr.mxu0 0.0
    %v554 = vand.u32 %v90, 4294901760
    %555 = vmatpush1.msra.mxu0 %v554
    %556 = vmatprep.subr.mxu0 0.0
    %557 = vmatpush1.msra.mxu0 0.0
    %558 = vmatprep.subr.mxu0 0.0
    %559 = vmatpush1.msra.mxu0 0.0
    %560 = vmatprep.subr.mxu0 0.0
    %561 = vmatpush1.msra.mxu0 0.0
    %562 = vmatprep.subr.mxu0 0.0
    %563 = vmatpush1.msra.mxu0 0.0
    %564 = vmatprep.subr.mxu0 0.0
    %565 = vmatpush1.msra.mxu0 0.0
    %566 = vmatprep.subr.mxu0 0.0
    %567 = vmatpush1.msra.mxu0 0.0
    %568 = vmatprep.subr.mxu0 0.0
    %569 = vmatpush1.msra.mxu0 0.0
    %570 = vmatprep.subr.mxu0 0.0
    %571 = vmatpush1.msra.mxu0 0.0
    %572 = vmatprep.subr.mxu0 0.0
    %573 = vmatpush1.msra.mxu0 0.0
    %574 = vmatprep.subr.mxu0 0.0
    %575 = vmatpush1.msra.mxu0 0.0
    %576 = vmatprep.subr.mxu0 0.0
    %577 = vmatpush1.msra.mxu0 0.0
    %578 = vmatprep.subr.mxu0 0.0
    %579 = vmatpush1.msra.mxu0 0.0
    %580 = vmatprep.subr.mxu0 0.0
    %581 = vmatpush1.msra.mxu0 0.0
    %582 = vmatprep.subr.mxu0 0.0
    %583 = vmatpush1.msra.mxu0 0.0
    %584 = vmatprep.subr.mxu0 0.0
    %585 = vmatpush1.msra.mxu0 0.0
    %586 = vmatprep.subr.mxu0 0.0
    %587 = vmatpush1.msra.mxu0 0.0
    %588 = vmatprep.subr.mxu0 0.0
    %589 = vmatpush1.msra.mxu0 0.0
    %590 = vmatprep.subr.mxu0 0.0
    %591 = vmatpush1.msra.mxu0 0.0
    %592 = vmatprep.subr.mxu0 0.0
    %593 = vmatpush1.msra.mxu0 0.0
    %594 = vmatprep.subr.mxu0 0.0
    %595 = vmatpush1.msra.mxu0 0.0
    %596 = vmatprep.subr.mxu0 0.0
    %597 = vmatpush1.msra.mxu0 0.0
    %598 = vmatprep.subr.mxu0 0.0
    %599 = vmatpush1.msra.mxu0 0.0
    %600 = vmatprep.subr.mxu0 0.0
    %601 = vmatpush1.msra.mxu0 0.0
    %602 = vmatprep.subr.mxu0 0.0
    %603 = vmatpush1.msra.mxu0 0.0
    %604 = vmatprep.subr.mxu0 0.0
    %605 = vmatpush1.msra.mxu0 0.0
    %606 = vmatprep.subr.mxu0 0.0
    %607 = vmatpush1.msra.mxu0 0.0
    %608 = vmatprep.subr.mxu0 0.0
    %609 = vmatpush1.msra.mxu0 0.0
    %610 = vmatprep.subr.mxu0 0.0
    %611 = vmatpush1.msra.mxu0 0.0
    %612 = vmatprep.mubr.f32.mxu0 0.0
    %v613 = vand.u32 %v92, 4294901760
    %614 = vmatmul.mubr.f32.gmra.mrb[0].mxu0 %v613
    %v615 = vpop.f32.mrb[0].mxu0
    %v616 = vadd.f32 %v535, %v615
    %v617 = vpop.f32.mrb[0].mxu0
    %618 = vmatprep.mubr.f32.mxu0 0.0
    %v619 = vand.u32 %v95, 4294901760
    %620 = vmatmul.mubr.f32.gmra.mrb[0].mxu0 %v619
    %v621 = vpop.f32.mrb[0].mxu0
    %v622 = vadd.f32 %v541, %v621
    %v623 = vpop.f32.mrb[0].mxu0
    %624 = vdwg.mxu0
    %vm625 = vcmask 523264
    %626 = vst.msk [vmem:[#allocation2] sm:$0xff] %vm625, 0.0
    %627 = vst.msk [vmem:[#allocation2 + $0x8] sm:$0xff] %vm625, 0.0
    %628 = vst.msk [vmem:[#allocation2 + $0x10] sm:$0xff] %vm625, 0.0
    %629 = vst.msk [vmem:[#allocation2 + $0x18] sm:$0xff] %vm625, 0.0
    %630 = vst.msk [vmem:[#allocation2 + $0x8] sm:$0xff] %vm625, %v616
    %631 = vst.msk [vmem:[#allocation2 + $0x18] sm:$0xff] %vm625, %v622
    %v632 = vld [vmem:[%s5] sm:$0x1]
    %v633 = vld [vmem:[#allocation2 + $0x5] sm:$0xff]
    %v634 = vld [vmem:[#allocation2 + $0x15] sm:$0xff]
    %v635 = vld [vmem:[%s4] sm:$0x1]
    %v636 = vlaneseq
    %v637 = vshrl.u32 %v636, 7
    %v638 = vsub.s32 0, %v637
    %v639 = vrot.slane %v635, %v638
    %v640 = vmul.f32 %v633, %v639
    %v641 = vmul.f32 %v634, %v639
    %v643 = vlaneseq
    %v644 = vshrl.u32 %v643, 7
    %v645 = vsub.s32 0, %v644
    %v646 = vrot.slane %v632, %v645
    %v648 = vadd.f32 %v646, %v640
    %v649 = vadd.f32 %v646, %v641
    %v650 = vld [vmem:[#allocation2 + $0x6] sm:$0xff]
    %v651 = vld [vmem:[#allocation2 + $0x16] sm:$0xff]
    %v652 = vld [vmem:[%s4 + $0x1] sm:$0x1]
    %v653 = vlaneseq
    %v654 = vshrl.u32 %v653, 7
    %v655 = vsub.s32 0, %v654
    %v656 = vrot.slane %v652, %v655
    %v657 = vmul.f32 %v650, %v656
    %v658 = vmul.f32 %v651, %v656
    %v659 = vadd.f32 %v648, %v657
    %v660 = vadd.f32 %v649, %v658
    %v661 = vld [vmem:[#allocation2 + $0x7] sm:$0xff]
    %v662 = vld [vmem:[#allocation2 + $0x17] sm:$0xff]
    %v663 = vld [vmem:[%s4 + $0x2] sm:$0x1]
    %v664 = vlaneseq
    %v665 = vshrl.u32 %v664, 7
    %v666 = vsub.s32 0, %v665
    %v667 = vrot.slane %v663, %v666
    %v668 = vmul.f32 %v661, %v667
    %v669 = vmul.f32 %v662, %v667
    %v670 = vadd.f32 %v659, %v668
    %v671 = vadd.f32 %v660, %v669
    %v672 = vld [vmem:[#allocation2 + $0x8] sm:$0xff]
    %v673 = vld [vmem:[#allocation2 + $0x18] sm:$0xff]
    %v674 = vld [vmem:[%s4 + $0x3] sm:$0x1]
    %v675 = vlaneseq
    %v676 = vshrl.u32 %v675, 7
    %v677 = vsub.s32 0, %v676
    %v678 = vrot.slane %v674, %v677
    %v679 = vmul.f32 %v672, %v678
    %v680 = vmul.f32 %v673, %v678
    %v681 = vadd.f32 %v670, %v679
    %v682 = vadd.f32 %v671, %v680
    %v683 = vmul.f32 %v681, 0.5
    %v684 = vmul.f32 %v682, 0.5
    %v685 = vtanh.pop %v683
    %v686 = vtanh.pop %v684
    %v687 = vadd.f32 %v685, 1.0
    %v688 = vadd.f32 %v686, 1.0
    %v689 = vmul.f32 %v687, 0.5
    %v690 = vmul.f32 %v688, 0.5
    %v691 = vmul.f32 %v681, %v689
    %v692 = vmul.f32 %v682, %v690
    %v693 = vld [vmem:[%s6] sm:$0xff]
    %v694 = vld [vmem:[%s6 + $0x8] sm:$0xff]
    %v695 = vld [vmem:[%s6 + $0x10] sm:$0xff]
    %v696 = vld [vmem:[%s6 + $0x18] sm:$0xff]
    %v697 = vld [vmem:[%s6 + $0x20] sm:$0xff]
    %v698 = vld [vmem:[%s6 + $0x28] sm:$0xff]
    %v699 = vld [vmem:[%s6 + $0x30] sm:$0xff]
    %v700 = vld [vmem:[%s6 + $0x38] sm:$0xff]
    %v702 = vsel %vm625, %v691, 0
    %v705 = vsel %vm625, %v692, 0
    %707 = vmatprep.subr.mxu0 0.0
    %v708 = vand.u32 %v693, 4294901760
    %709 = vmatpush1.msra.mxu0 %v708
    %710 = vmatprep.subr.mxu0 0.0
    %v711 = vand.u32 %v694, 4294901760
    %712 = vmatpush1.msra.mxu0 %v711
    %713 = vmatprep.subr.mxu0 0.0
    %v714 = vand.u32 %v695, 4294901760
    %715 = vmatpush1.msra.mxu0 %v714
    %716 = vmatprep.subr.mxu0 0.0
    %v717 = vand.u32 %v696, 4294901760
    %718 = vmatpush1.msra.mxu0 %v717
    %719 = vmatprep.subr.mxu0 0.0
    %v720 = vand.u32 %v697, 4294901760
    %721 = vmatpush1.msra.mxu0 %v720
    %722 = vmatprep.subr.mxu0 0.0
    %v723 = vand.u32 %v698, 4294901760
    %724 = vmatpush1.msra.mxu0 %v723
    %725 = vmatprep.subr.mxu0 0.0
    %v726 = vand.u32 %v699, 4294901760
    %727 = vmatpush1.msra.mxu0 %v726
    %728 = vmatprep.subr.mxu0 0.0
    %v729 = vand.u32 %v700, 4294901760
    %730 = vmatpush1.msra.mxu0 %v729
    %731 = vmatprep.subr.mxu0 0.0
    %732 = vmatpush1.msra.mxu0 0.0
    %733 = vmatprep.subr.mxu0 0.0
    %734 = vmatpush1.msra.mxu0 0.0
    %735 = vmatprep.subr.mxu0 0.0
    %736 = vmatpush1.msra.mxu0 0.0
    %737 = vmatprep.subr.mxu0 0.0
    %738 = vmatpush1.msra.mxu0 0.0
    %739 = vmatprep.subr.mxu0 0.0
    %740 = vmatpush1.msra.mxu0 0.0
    %741 = vmatprep.subr.mxu0 0.0
    %742 = vmatpush1.msra.mxu0 0.0
    %743 = vmatprep.subr.mxu0 0.0
    %744 = vmatpush1.msra.mxu0 0.0
    %745 = vmatprep.subr.mxu0 0.0
    %746 = vmatpush1.msra.mxu0 0.0
    %747 = vmatprep.subr.mxu0 0.0
    %748 = vmatpush1.msra.mxu0 0.0
    %749 = vmatprep.subr.mxu0 0.0
    %750 = vmatpush1.msra.mxu0 0.0
    %751 = vmatprep.subr.mxu0 0.0
    %752 = vmatpush1.msra.mxu0 0.0
    %753 = vmatprep.subr.mxu0 0.0
    %754 = vmatpush1.msra.mxu0 0.0
    %755 = vmatprep.subr.mxu0 0.0
    %756 = vmatpush1.msra.mxu0 0.0
    %757 = vmatprep.subr.mxu0 0.0
    %758 = vmatpush1.msra.mxu0 0.0
    %759 = vmatprep.subr.mxu0 0.0
    %760 = vmatpush1.msra.mxu0 0.0
    %761 = vmatprep.subr.mxu0 0.0
    %762 = vmatpush1.msra.mxu0 0.0
    %763 = vmatprep.subr.mxu0 0.0
    %764 = vmatpush1.msra.mxu0 0.0
    %765 = vmatprep.subr.mxu0 0.0
    %766 = vmatpush1.msra.mxu0 0.0
    %767 = vmatprep.subr.mxu0 0.0
    %768 = vmatpush1.msra.mxu0 0.0
    %769 = vmatprep.subr.mxu0 0.0
    %770 = vmatpush1.msra.mxu0 0.0
    %771 = vmatprep.subr.mxu0 0.0
    %772 = vmatpush1.msra.mxu0 0.0
    %773 = vmatprep.subr.mxu0 0.0
    %774 = vmatpush1.msra.mxu0 0.0
    %775 = vmatprep.subr.mxu0 0.0
    %776 = vmatpush1.msra.mxu0 0.0
    %777 = vmatprep.subr.mxu0 0.0
    %778 = vmatpush1.msra.mxu0 0.0
    %779 = vmatprep.mubr.f32.mxu0 0.0
    %v780 = vand.u32 %v702, 4294901760
    %v781 = vsub.f32 %v702, %v780
    %v782 = vand.u32 %v781, 4294901760
    %v783 = vsub.f32 %v781, %v782
    %v784 = vand.u32 %v783, 4294901760
    %785 = vmatmul.mubr.f32.gmra.mrb[0].mxu0 %v784
    %v786 = vpop.f32.mrb[0].mxu0
    %v787 = vadd.f32 0.0, %v786
    %v788 = vpop.f32.mrb[0].mxu0
    %789 = vmatprep.mubr.f32.mxu0 0.0
    %v790 = vand.u32 %v705, 4294901760
    %v791 = vsub.f32 %v705, %v790
    %v792 = vand.u32 %v791, 4294901760
    %v793 = vsub.f32 %v791, %v792
    %v794 = vand.u32 %v793, 4294901760
    %795 = vmatmul.mubr.f32.gmra.mrb[0].mxu0 %v794
    %v796 = vpop.f32.mrb[0].mxu0
    %v797 = vadd.f32 0.0, %v796
    %v798 = vpop.f32.mrb[0].mxu0
    %799 = vdwg.mxu0
    %800 = vmatprep.subr.mxu0 0.0
    %v801 = vand.u32 %v693, 4294901760
    %v802 = vsub.f32 %v693, %v801
    %v803 = vand.u32 %v802, 4294901760
    %v804 = vsub.f32 %v802, %v803
    %v805 = vand.u32 %v804, 4294901760
    %806 = vmatpush1.msra.mxu0 %v805
    %807 = vmatprep.subr.mxu0 0.0
    %v808 = vand.u32 %v694, 4294901760
    %v809 = vsub.f32 %v694, %v808
    %v810 = vand.u32 %v809, 4294901760
    %v811 = vsub.f32 %v809, %v810
    %v812 = vand.u32 %v811, 4294901760
    %813 = vmatpush1.msra.mxu0 %v812
    %814 = vmatprep.subr.mxu0 0.0
    %v815 = vand.u32 %v695, 4294901760
    %v816 = vsub.f32 %v695, %v815
    %v817 = vand.u32 %v816, 4294901760
    %v818 = vsub.f32 %v816, %v817
    %v819 = vand.u32 %v818, 4294901760
    %820 = vmatpush1.msra.mxu0 %v819
    %821 = vmatprep.subr.mxu0 0.0
    %v822 = vand.u32 %v696, 4294901760
    %v823 = vsub.f32 %v696, %v822
    %v824 = vand.u32 %v823, 4294901760
    %v825 = vsub.f32 %v823, %v824
    %v826 = vand.u32 %v825, 4294901760
    %827 = vmatpush1.msra.mxu0 %v826
    %828 = vmatprep.subr.mxu0 0.0
    %v829 = vand.u32 %v697, 4294901760
    %v830 = vsub.f32 %v697, %v829
    %v831 = vand.u32 %v830, 4294901760
    %v832 = vsub.f32 %v830, %v831
    %v833 = vand.u32 %v832, 4294901760
    %834 = vmatpush1.msra.mxu0 %v833
    %835 = vmatprep.subr.mxu0 0.0
    %v836 = vand.u32 %v698, 4294901760
    %v837 = vsub.f32 %v698, %v836
    %v838 = vand.u32 %v837, 4294901760
    %v839 = vsub.f32 %v837, %v838
    %v840 = vand.u32 %v839, 4294901760
    %841 = vmatpush1.msra.mxu0 %v840
    %842 = vmatprep.subr.mxu0 0.0
    %v843 = vand.u32 %v699, 4294901760
    %v844 = vsub.f32 %v699, %v843
    %v845 = vand.u32 %v844, 4294901760
    %v846 = vsub.f32 %v844, %v845
    %v847 = vand.u32 %v846, 4294901760
    %848 = vmatpush1.msra.mxu0 %v847
    %849 = vmatprep.subr.mxu0 0.0
    %v850 = vand.u32 %v700, 4294901760
    %v851 = vsub.f32 %v700, %v850
    %v852 = vand.u32 %v851, 4294901760
    %v853 = vsub.f32 %v851, %v852
    %v854 = vand.u32 %v853, 4294901760
    %855 = vmatpush1.msra.mxu0 %v854
    %856 = vmatprep.subr.mxu0 0.0
    %857 = vmatpush1.msra.mxu0 0.0
    %858 = vmatprep.subr.mxu0 0.0
    %859 = vmatpush1.msra.mxu0 0.0
    %860 = vmatprep.subr.mxu0 0.0
    %861 = vmatpush1.msra.mxu0 0.0
    %862 = vmatprep.subr.mxu0 0.0
    %863 = vmatpush1.msra.mxu0 0.0
    %864 = vmatprep.subr.mxu0 0.0
    %865 = vmatpush1.msra.mxu0 0.0
    %866 = vmatprep.subr.mxu0 0.0
    %867 = vmatpush1.msra.mxu0 0.0
    %868 = vmatprep.subr.mxu0 0.0
    %869 = vmatpush1.msra.mxu0 0.0
    %870 = vmatprep.subr.mxu0 0.0
    %871 = vmatpush1.msra.mxu0 0.0
    %872 = vmatprep.subr.mxu0 0.0
    %873 = vmatpush1.msra.mxu0 0.0
    %874 = vmatprep.subr.mxu0 0.0
    %875 = vmatpush1.msra.mxu0 0.0
    %876 = vmatprep.subr.mxu0 0.0
    %877 = vmatpush1.msra.mxu0 0.0
    %878 = vmatprep.subr.mxu0 0.0
    %879 = vmatpush1.msra.mxu0 0.0
    %880 = vmatprep.subr.mxu0 0.0
    %881 = vmatpush1.msra.mxu0 0.0
    %882 = vmatprep.subr.mxu0 0.0
    %883 = vmatpush1.msra.mxu0 0.0
    %884 = vmatprep.subr.mxu0 0.0
    %885 = vmatpush1.msra.mxu0 0.0
    %886 = vmatprep.subr.mxu0 0.0
    %887 = vmatpush1.msra.mxu0 0.0
    %888 = vmatprep.subr.mxu0 0.0
    %889 = vmatpush1.msra.mxu0 0.0
    %890 = vmatprep.subr.mxu0 0.0
    %891 = vmatpush1.msra.mxu0 0.0
    %892 = vmatprep.subr.mxu0 0.0
    %893 = vmatpush1.msra.mxu0 0.0
    %894 = vmatprep.subr.mxu0 0.0
    %895 = vmatpush1.msra.mxu0 0.0
    %896 = vmatprep.subr.mxu0 0.0
    %897 = vmatpush1.msra.mxu0 0.0
    %898 = vmatprep.subr.mxu0 0.0
    %899 = vmatpush1.msra.mxu0 0.0
    %900 = vmatprep.subr.mxu0 0.0
    %901 = vmatpush1.msra.mxu0 0.0
    %902 = vmatprep.subr.mxu0 0.0
    %903 = vmatpush1.msra.mxu0 0.0
    %904 = vmatprep.mubr.f32.mxu0 0.0
    %v905 = vand.u32 %v702, 4294901760
    %906 = vmatmul.mubr.f32.gmra.mrb[0].mxu0 %v905
    %v907 = vpop.f32.mrb[0].mxu0
    %v908 = vadd.f32 %v787, %v907
    %v909 = vpop.f32.mrb[0].mxu0
    %910 = vmatprep.mubr.f32.mxu0 0.0
    %v911 = vand.u32 %v705, 4294901760
    %912 = vmatmul.mubr.f32.gmra.mrb[0].mxu0 %v911
    %v913 = vpop.f32.mrb[0].mxu0
    %v914 = vadd.f32 %v797, %v913
    %v915 = vpop.f32.mrb[0].mxu0
    %916 = vdwg.mxu0
    %917 = vmatprep.subr.mxu0 0.0
    %v918 = vand.u32 %v693, 4294901760
    %v919 = vsub.f32 %v693, %v918
    %920 = vmatpush1.msra.mxu0 %v919
    %921 = vmatprep.subr.mxu0 0.0
    %v922 = vand.u32 %v694, 4294901760
    %v923 = vsub.f32 %v694, %v922
    %924 = vmatpush1.msra.mxu0 %v923
    %925 = vmatprep.subr.mxu0 0.0
    %v926 = vand.u32 %v695, 4294901760
    %v927 = vsub.f32 %v695, %v926
    %928 = vmatpush1.msra.mxu0 %v927
    %929 = vmatprep.subr.mxu0 0.0
    %v930 = vand.u32 %v696, 4294901760
    %v931 = vsub.f32 %v696, %v930
    %932 = vmatpush1.msra.mxu0 %v931
    %933 = vmatprep.subr.mxu0 0.0
    %v934 = vand.u32 %v697, 4294901760
    %v935 = vsub.f32 %v697, %v934
    %936 = vmatpush1.msra.mxu0 %v935
    %937 = vmatprep.subr.mxu0 0.0
    %v938 = vand.u32 %v698, 4294901760
    %v939 = vsub.f32 %v698, %v938
    %940 = vmatpush1.msra.mxu0 %v939
    %941 = vmatprep.subr.mxu0 0.0
    %v942 = vand.u32 %v699, 4294901760
    %v943 = vsub.f32 %v699, %v942
    %944 = vmatpush1.msra.mxu0 %v943
    %945 = vmatprep.subr.mxu0 0.0
    %v946 = vand.u32 %v700, 4294901760
    %v947 = vsub.f32 %v700, %v946
    %948 = vmatpush1.msra.mxu0 %v947
    %949 = vmatprep.subr.mxu0 0.0
    %950 = vmatpush1.msra.mxu0 0.0
    %951 = vmatprep.subr.mxu0 0.0
    %952 = vmatpush1.msra.mxu0 0.0
    %953 = vmatprep.subr.mxu0 0.0
    %954 = vmatpush1.msra.mxu0 0.0
    %955 = vmatprep.subr.mxu0 0.0
    %956 = vmatpush1.msra.mxu0 0.0
    %957 = vmatprep.subr.mxu0 0.0
    %958 = vmatpush1.msra.mxu0 0.0
    %959 = vmatprep.subr.mxu0 0.0
    %960 = vmatpush1.msra.mxu0 0.0
    %961 = vmatprep.subr.mxu0 0.0
    %962 = vmatpush1.msra.mxu0 0.0
    %963 = vmatprep.subr.mxu0 0.0
    %964 = vmatpush1.msra.mxu0 0.0
    %965 = vmatprep.subr.mxu0 0.0
    %966 = vmatpush1.msra.mxu0 0.0
    %967 = vmatprep.subr.mxu0 0.0
    %968 = vmatpush1.msra.mxu0 0.0
    %969 = vmatprep.subr.mxu0 0.0
    %970 = vmatpush1.msra.mxu0 0.0
    %971 = vmatprep.subr.mxu0 0.0
    %972 = vmatpush1.msra.mxu0 0.0
    %973 = vmatprep.subr.mxu0 0.0
    %974 = vmatpush1.msra.mxu0 0.0
    %975 = vmatprep.subr.mxu0 0.0
    %976 = vmatpush1.msra.mxu0 0.0
    %977 = vmatprep.subr.mxu0 0.0
    %978 = vmatpush1.msra.mxu0 0.0
    %979 = vmatprep.subr.mxu0 0.0
    %980 = vmatpush1.msra.mxu0 0.0
    %981 = vmatprep.subr.mxu0 0.0
    %982 = vmatpush1.msra.mxu0 0.0
    %983 = vmatprep.subr.mxu0 0.0
    %984 = vmatpush1.msra.mxu0 0.0
    %985 = vmatprep.subr.mxu0 0.0
    %986 = vmatpush1.msra.mxu0 0.0
    %987 = vmatprep.subr.mxu0 0.0
    %988 = vmatpush1.msra.mxu0 0.0
    %989 = vmatprep.subr.mxu0 0.0
    %990 = vmatpush1.msra.mxu0 0.0
    %991 = vmatprep.subr.mxu0 0.0
    %992 = vmatpush1.msra.mxu0 0.0
    %993 = vmatprep.subr.mxu0 0.0
    %994 = vmatpush1.msra.mxu0 0.0
    %995 = vmatprep.subr.mxu0 0.0
    %996 = vmatpush1.msra.mxu0 0.0
    %997 = vmatprep.mubr.f32.mxu0 0.0
    %v998 = vand.u32 %v702, 4294901760
    %v999 = vsub.f32 %v702, %v998
    %1000 = vmatmul.mubr.f32.gmra.mrb[0].mxu0 %v999
    %v1001 = vpop.f32.mrb[0].mxu0
    %v1002 = vadd.f32 %v908, %v1001
    %v1003 = vpop.f32.mrb[0].mxu0
    %1004 = vmatprep.mubr.f32.mxu0 0.0
    %v1005 = vand.u32 %v705, 4294901760
    %v1006 = vsub.f32 %v705, %v1005
    %1007 = vmatmul.mubr.f32.gmra.mrb[0].mxu0 %v1006
    %v1008 = vpop.f32.mrb[0].mxu0
    %v1009 = vadd.f32 %v914, %v1008
    %v1010 = vpop.f32.mrb[0].mxu0
    %1011 = vdwg.mxu0
    %1012 = vmatprep.subr.mxu0 0.0
    %v1013 = vand.u32 %v693, 4294901760
    %1014 = vmatpush1.msra.mxu0 %v1013
    %1015 = vmatprep.subr.mxu0 0.0
    %v1016 = vand.u32 %v694, 4294901760
    %1017 = vmatpush1.msra.mxu0 %v1016
    %1018 = vmatprep.subr.mxu0 0.0
    %v1019 = vand.u32 %v695, 4294901760
    %1020 = vmatpush1.msra.mxu0 %v1019
    %1021 = vmatprep.subr.mxu0 0.0
    %v1022 = vand.u32 %v696, 4294901760
    %1023 = vmatpush1.msra.mxu0 %v1022
    %1024 = vmatprep.subr.mxu0 0.0
    %v1025 = vand.u32 %v697, 4294901760
    %1026 = vmatpush1.msra.mxu0 %v1025
    %1027 = vmatprep.subr.mxu0 0.0
    %v1028 = vand.u32 %v698, 4294901760
    %1029 = vmatpush1.msra.mxu0 %v1028
    %1030 = vmatprep.subr.mxu0 0.0
    %v1031 = vand.u32 %v699, 4294901760
    %1032 = vmatpush1.msra.mxu0 %v1031
    %1033 = vmatprep.subr.mxu0 0.0
    %v1034 = vand.u32 %v700, 4294901760
    %1035 = vmatpush1.msra.mxu0 %v1034
    %1036 = vmatprep.subr.mxu0 0.0
    %1037 = vmatpush1.msra.mxu0 0.0
    %1038 = vmatprep.subr.mxu0 0.0
    %1039 = vmatpush1.msra.mxu0 0.0
    %1040 = vmatprep.subr.mxu0 0.0
    %1041 = vmatpush1.msra.mxu0 0.0
    %1042 = vmatprep.subr.mxu0 0.0
    %1043 = vmatpush1.msra.mxu0 0.0
    %1044 = vmatprep.subr.mxu0 0.0
    %1045 = vmatpush1.msra.mxu0 0.0
    %1046 = vmatprep.subr.mxu0 0.0
    %1047 = vmatpush1.msra.mxu0 0.0
    %1048 = vmatprep.subr.mxu0 0.0
    %1049 = vmatpush1.msra.mxu0 0.0
    %1050 = vmatprep.subr.mxu0 0.0
    %1051 = vmatpush1.msra.mxu0 0.0
    %1052 = vmatprep.subr.mxu0 0.0
    %1053 = vmatpush1.msra.mxu0 0.0
    %1054 = vmatprep.subr.mxu0 0.0
    %1055 = vmatpush1.msra.mxu0 0.0
    %1056 = vmatprep.subr.mxu0 0.0
    %1057 = vmatpush1.msra.mxu0 0.0
    %1058 = vmatprep.subr.mxu0 0.0
    %1059 = vmatpush1.msra.mxu0 0.0
    %1060 = vmatprep.subr.mxu0 0.0
    %1061 = vmatpush1.msra.mxu0 0.0
    %1062 = vmatprep.subr.mxu0 0.0
    %1063 = vmatpush1.msra.mxu0 0.0
    %1064 = vmatprep.subr.mxu0 0.0
    %1065 = vmatpush1.msra.mxu0 0.0
    %1066 = vmatprep.subr.mxu0 0.0
    %1067 = vmatpush1.msra.mxu0 0.0
    %1068 = vmatprep.subr.mxu0 0.0
    %1069 = vmatpush1.msra.mxu0 0.0
    %1070 = vmatprep.subr.mxu0 0.0
    %1071 = vmatpush1.msra.mxu0 0.0
    %1072 = vmatprep.subr.mxu0 0.0
    %1073 = vmatpush1.msra.mxu0 0.0
    %1074 = vmatprep.subr.mxu0 0.0
    %1075 = vmatpush1.msra.mxu0 0.0
    %1076 = vmatprep.subr.mxu0 0.0
    %1077 = vmatpush1.msra.mxu0 0.0
    %1078 = vmatprep.subr.mxu0 0.0
    %1079 = vmatpush1.msra.mxu0 0.0
    %1080 = vmatprep.subr.mxu0 0.0
    %1081 = vmatpush1.msra.mxu0 0.0
    %1082 = vmatprep.subr.mxu0 0.0
    %1083 = vmatpush1.msra.mxu0 0.0
    %1084 = vmatprep.mubr.f32.mxu0 0.0
    %v1085 = vand.u32 %v702, 4294901760
    %v1086 = vsub.f32 %v702, %v1085
    %v1087 = vand.u32 %v1086, 4294901760
    %1088 = vmatmul.mubr.f32.gmra.mrb[0].mxu0 %v1087
    %v1089 = vpop.f32.mrb[0].mxu0
    %v1090 = vadd.f32 %v1002, %v1089
    %v1091 = vpop.f32.mrb[0].mxu0
    %1092 = vmatprep.mubr.f32.mxu0 0.0
    %v1093 = vand.u32 %v705, 4294901760
    %v1094 = vsub.f32 %v705, %v1093
    %v1095 = vand.u32 %v1094, 4294901760
    %1096 = vmatmul.mubr.f32.gmra.mrb[0].mxu0 %v1095
    %v1097 = vpop.f32.mrb[0].mxu0
    %v1098 = vadd.f32 %v1009, %v1097
    %v1099 = vpop.f32.mrb[0].mxu0
    %1100 = vdwg.mxu0
    %1101 = vmatprep.subr.mxu0 0.0
    %v1102 = vand.u32 %v693, 4294901760
    %v1103 = vsub.f32 %v693, %v1102
    %v1104 = vand.u32 %v1103, 4294901760
    %1105 = vmatpush1.msra.mxu0 %v1104
    %1106 = vmatprep.subr.mxu0 0.0
    %v1107 = vand.u32 %v694, 4294901760
    %v1108 = vsub.f32 %v694, %v1107
    %v1109 = vand.u32 %v1108, 4294901760
    %1110 = vmatpush1.msra.mxu0 %v1109
    %1111 = vmatprep.subr.mxu0 0.0
    %v1112 = vand.u32 %v695, 4294901760
    %v1113 = vsub.f32 %v695, %v1112
    %v1114 = vand.u32 %v1113, 4294901760
    %1115 = vmatpush1.msra.mxu0 %v1114
    %1116 = vmatprep.subr.mxu0 0.0
    %v1117 = vand.u32 %v696, 4294901760
    %v1118 = vsub.f32 %v696, %v1117
    %v1119 = vand.u32 %v1118, 4294901760
    %1120 = vmatpush1.msra.mxu0 %v1119
    %1121 = vmatprep.subr.mxu0 0.0
    %v1122 = vand.u32 %v697, 4294901760
    %v1123 = vsub.f32 %v697, %v1122
    %v1124 = vand.u32 %v1123, 4294901760
    %1125 = vmatpush1.msra.mxu0 %v1124
    %1126 = vmatprep.subr.mxu0 0.0
    %v1127 = vand.u32 %v698, 4294901760
    %v1128 = vsub.f32 %v698, %v1127
    %v1129 = vand.u32 %v1128, 4294901760
    %1130 = vmatpush1.msra.mxu0 %v1129
    %1131 = vmatprep.subr.mxu0 0.0
    %v1132 = vand.u32 %v699, 4294901760
    %v1133 = vsub.f32 %v699, %v1132
    %v1134 = vand.u32 %v1133, 4294901760
    %1135 = vmatpush1.msra.mxu0 %v1134
    %1136 = vmatprep.subr.mxu0 0.0
    %v1137 = vand.u32 %v700, 4294901760
    %v1138 = vsub.f32 %v700, %v1137
    %v1139 = vand.u32 %v1138, 4294901760
    %1140 = vmatpush1.msra.mxu0 %v1139
    %1141 = vmatprep.subr.mxu0 0.0
    %1142 = vmatpush1.msra.mxu0 0.0
    %1143 = vmatprep.subr.mxu0 0.0
    %1144 = vmatpush1.msra.mxu0 0.0
    %1145 = vmatprep.subr.mxu0 0.0
    %1146 = vmatpush1.msra.mxu0 0.0
    %1147 = vmatprep.subr.mxu0 0.0
    %1148 = vmatpush1.msra.mxu0 0.0
    %1149 = vmatprep.subr.mxu0 0.0
    %1150 = vmatpush1.msra.mxu0 0.0
    %1151 = vmatprep.subr.mxu0 0.0
    %1152 = vmatpush1.msra.mxu0 0.0
    %1153 = vmatprep.subr.mxu0 0.0
    %1154 = vmatpush1.msra.mxu0 0.0
    %1155 = vmatprep.subr.mxu0 0.0
    %1156 = vmatpush1.msra.mxu0 0.0
    %1157 = vmatprep.subr.mxu0 0.0
    %1158 = vmatpush1.msra.mxu0 0.0
    %1159 = vmatprep.subr.mxu0 0.0
    %1160 = vmatpush1.msra.mxu0 0.0
    %1161 = vmatprep.subr.mxu0 0.0
    %1162 = vmatpush1.msra.mxu0 0.0
    %1163 = vmatprep.subr.mxu0 0.0
    %1164 = vmatpush1.msra.mxu0 0.0
    %1165 = vmatprep.subr.mxu0 0.0
    %1166 = vmatpush1.msra.mxu0 0.0
    %1167 = vmatprep.subr.mxu0 0.0
    %1168 = vmatpush1.msra.mxu0 0.0
    %1169 = vmatprep.subr.mxu0 0.0
    %1170 = vmatpush1.msra.mxu0 0.0
    %1171 = vmatprep.subr.mxu0 0.0
    %1172 = vmatpush1.msra.mxu0 0.0
    %1173 = vmatprep.subr.mxu0 0.0
    %1174 = vmatpush1.msra.mxu0 0.0
    %1175 = vmatprep.subr.mxu0 0.0
    %1176 = vmatpush1.msra.mxu0 0.0
    %1177 = vmatprep.subr.mxu0 0.0
    %1178 = vmatpush1.msra.mxu0 0.0
    %1179 = vmatprep.subr.mxu0 0.0
    %1180 = vmatpush1.msra.mxu0 0.0
    %1181 = vmatprep.subr.mxu0 0.0
    %1182 = vmatpush1.msra.mxu0 0.0
    %1183 = vmatprep.subr.mxu0 0.0
    %1184 = vmatpush1.msra.mxu0 0.0
    %1185 = vmatprep.subr.mxu0 0.0
    %1186 = vmatpush1.msra.mxu0 0.0
    %1187 = vmatprep.subr.mxu0 0.0
    %1188 = vmatpush1.msra.mxu0 0.0
    %1189 = vmatprep.mubr.f32.mxu0 0.0
    %v1190 = vand.u32 %v702, 4294901760
    %1191 = vmatmul.mubr.f32.gmra.mrb[0].mxu0 %v1190
    %v1192 = vpop.f32.mrb[0].mxu0
    %v1193 = vadd.f32 %v1090, %v1192
    %v1194 = vpop.f32.mrb[0].mxu0
    %1195 = vmatprep.mubr.f32.mxu0 0.0
    %v1196 = vand.u32 %v705, 4294901760
    %1197 = vmatmul.mubr.f32.gmra.mrb[0].mxu0 %v1196
    %v1198 = vpop.f32.mrb[0].mxu0
    %v1199 = vadd.f32 %v1098, %v1198
    %v1200 = vpop.f32.mrb[0].mxu0
    %1201 = vdwg.mxu0
    %1202 = vmatprep.subr.mxu0 0.0
    %v1203 = vand.u32 %v693, 4294901760
    %1204 = vmatpush1.msra.mxu0 %v1203
    %1205 = vmatprep.subr.mxu0 0.0
    %v1206 = vand.u32 %v694, 4294901760
    %1207 = vmatpush1.msra.mxu0 %v1206
    %1208 = vmatprep.subr.mxu0 0.0
    %v1209 = vand.u32 %v695, 4294901760
    %1210 = vmatpush1.msra.mxu0 %v1209
    %1211 = vmatprep.subr.mxu0 0.0
    %v1212 = vand.u32 %v696, 4294901760
    %1213 = vmatpush1.msra.mxu0 %v1212
    %1214 = vmatprep.subr.mxu0 0.0
    %v1215 = vand.u32 %v697, 4294901760
    %1216 = vmatpush1.msra.mxu0 %v1215
    %1217 = vmatprep.subr.mxu0 0.0
    %v1218 = vand.u32 %v698, 4294901760
    %1219 = vmatpush1.msra.mxu0 %v1218
    %1220 = vmatprep.subr.mxu0 0.0
    %v1221 = vand.u32 %v699, 4294901760
    %1222 = vmatpush1.msra.mxu0 %v1221
    %1223 = vmatprep.subr.mxu0 0.0
    %v1224 = vand.u32 %v700, 4294901760
    %1225 = vmatpush1.msra.mxu0 %v1224
    %1226 = vmatprep.subr.mxu0 0.0
    %1227 = vmatpush1.msra.mxu0 0.0
    %1228 = vmatprep.subr.mxu0 0.0
    %1229 = vmatpush1.msra.mxu0 0.0
    %1230 = vmatprep.subr.mxu0 0.0
    %1231 = vmatpush1.msra.mxu0 0.0
    %1232 = vmatprep.subr.mxu0 0.0
    %1233 = vmatpush1.msra.mxu0 0.0
    %1234 = vmatprep.subr.mxu0 0.0
    %1235 = vmatpush1.msra.mxu0 0.0
    %1236 = vmatprep.subr.mxu0 0.0
    %1237 = vmatpush1.msra.mxu0 0.0
    %1238 = vmatprep.subr.mxu0 0.0
    %1239 = vmatpush1.msra.mxu0 0.0
    %1240 = vmatprep.subr.mxu0 0.0
    %1241 = vmatpush1.msra.mxu0 0.0
    %1242 = vmatprep.subr.mxu0 0.0
    %1243 = vmatpush1.msra.mxu0 0.0
    %1244 = vmatprep.subr.mxu0 0.0
    %1245 = vmatpush1.msra.mxu0 0.0
    %1246 = vmatprep.subr.mxu0 0.0
    %1247 = vmatpush1.msra.mxu0 0.0
    %1248 = vmatprep.subr.mxu0 0.0
    %1249 = vmatpush1.msra.mxu0 0.0
    %1250 = vmatprep.subr.mxu0 0.0
    %1251 = vmatpush1.msra.mxu0 0.0
    %1252 = vmatprep.subr.mxu0 0.0
    %1253 = vmatpush1.msra.mxu0 0.0
    %1254 = vmatprep.subr.mxu0 0.0
    %1255 = vmatpush1.msra.mxu0 0.0
    %1256 = vmatprep.subr.mxu0 0.0
    %1257 = vmatpush1.msra.mxu0 0.0
    %1258 = vmatprep.subr.mxu0 0.0
    %1259 = vmatpush1.msra.mxu0 0.0
    %1260 = vmatprep.subr.mxu0 0.0
    %1261 = vmatpush1.msra.mxu0 0.0
    %1262 = vmatprep.subr.mxu0 0.0
    %1263 = vmatpush1.msra.mxu0 0.0
    %1264 = vmatprep.subr.mxu0 0.0
    %1265 = vmatpush1.msra.mxu0 0.0
    %1266 = vmatprep.subr.mxu0 0.0
    %1267 = vmatpush1.msra.mxu0 0.0
    %1268 = vmatprep.subr.mxu0 0.0
    %1269 = vmatpush1.msra.mxu0 0.0
    %1270 = vmatprep.subr.mxu0 0.0
    %1271 = vmatpush1.msra.mxu0 0.0
    %1272 = vmatprep.subr.mxu0 0.0
    %1273 = vmatpush1.msra.mxu0 0.0
    %1274 = vmatprep.mubr.f32.mxu0 0.0
    %v1275 = vand.u32 %v702, 4294901760
    %1276 = vmatmul.mubr.f32.gmra.mrb[0].mxu0 %v1275
    %v1277 = vpop.f32.mrb[0].mxu0
    %v1278 = vadd.f32 %v1193, %v1277
    %v1279 = vpop.f32.mrb[0].mxu0
    %1280 = vmatprep.mubr.f32.mxu0 0.0
    %v1281 = vand.u32 %v705, 4294901760
    %1282 = vmatmul.mubr.f32.gmra.mrb[0].mxu0 %v1281
    %v1283 = vpop.f32.mrb[0].mxu0
    %v1284 = vadd.f32 %v1199, %v1283
    %v1285 = vpop.f32.mrb[0].mxu0
    %1286 = vdwg.mxu0
    %v1287 = vld [vmem:[%s7] sm:$0x1]
    %v1289 = vlaneseq
    %v1290 = vshrl.u32 %v1289, 7
    %v1291 = vsub.s32 0, %v1290
    %v1292 = vrot.slane %v1287, %v1291
    %v1294 = vadd.f32 %v1278, %v1292
    %v1295 = vadd.f32 %v1284, %v1292
    %v1296 = vmax.f32 %v1294, 0.0
    %v1297 = vmax.f32 %v1295, 0.0
    %v1298 = vand.u32 2147483647, %v1294
    %v1299 = vand.u32 2147483647, %v1295
    %v1300 = vsub.f32 0.0, %v1298
    %v1301 = vsub.f32 0.0, %v1299
    %v1302 = vmul.f32 %v1300, 1.442695
    %v1303 = vpow.pop %v1302
    %v1304 = vmul.f32 %v1301, 1.442695
    %v1305 = vpow.pop %v1304
    %v1306 = vadd.f32 %v1303, 1.0
    %v1307 = vadd.f32 %v1305, 1.0
    %v1308 = vlog2.pop %v1306
    %v1309 = vmul.f32 %v1308, 0.6931472
    %v1310 = vlog2.pop %v1307
    %v1311 = vmul.f32 %v1310, 0.6931472
    %v1312 = vadd.f32 %v1296, %v1309
    %v1313 = vadd.f32 %v1297, %v1311
    %v1314 = vld [vmem:[%s8] sm:$0xff]
    %v1315 = vld [vmem:[%s8 + $0x8] sm:$0xff]
    %v1318 = vcombine.high %v1312, %v1312
    %v1320 = vunpack.c.l.s4 1966171168
    %v1321 = vunpack.c.0.s8 %v1320
    %v1322 = vlaneseq
    %v1323 = vshrl.u32 %v1322, 7
    %v1324 = vsub.s32 %v1321, %v1323
    %v1325 = vrot.slane %v1312, %v1324
    %v1327 = vunpack.c.l.s4 1966171168
    %v1328 = vunpack.c.0.s8 %v1327
    %v1329 = vlaneseq
    %v1330 = vshrl.u32 %v1329, 7
    %v1331 = vsub.s32 %v1328, %v1330
    %v1332 = vrot.slane %v1318, %v1331
    %v1333 = vcombine.high %v1325, %v1325
    %v1334 = vcombine.high %v1332, %v1332
    %v1336 = vunpack.c.l.s4 1966171168
    %v1337 = vunpack.c.0.s8 %v1336
    %v1338 = vlaneseq
    %v1339 = vshrl.u32 %v1338, 7
    %v1340 = vsub.s32 %v1337, %v1339
    %v1341 = vrot.slane %v1325, %v1340
    %v1343 = vunpack.c.l.s4 1966171168
    %v1344 = vunpack.c.0.s8 %v1343
    %v1345 = vlaneseq
    %v1346 = vshrl.u32 %v1345, 7
    %v1347 = vsub.s32 %v1344, %v1346
    %v1348 = vrot.slane %v1332, %v1347
    %v1350 = vunpack.c.l.s4 1966171168
    %v1351 = vunpack.c.0.s8 %v1350
    %v1352 = vlaneseq
    %v1353 = vshrl.u32 %v1352, 7
    %v1354 = vsub.s32 %v1351, %v1353
    %v1355 = vrot.slane %v1333, %v1354
    %v1357 = vunpack.c.l.s4 1966171168
    %v1358 = vunpack.c.0.s8 %v1357
    %v1359 = vlaneseq
    %v1360 = vshrl.u32 %v1359, 7
    %v1361 = vsub.s32 %v1358, %v1360
    %v1362 = vrot.slane %v1334, %v1361
    %v1363 = vcombine.high %v1341, %v1341
    %v1364 = vcombine.high %v1348, %v1348
    %v1365 = vcombine.high %v1355, %v1355
    %v1366 = vcombine.high %v1362, %v1362
    %v1367 = vcombine.high %v1313, %v1313
    %v1369 = vunpack.c.l.s4 1966171168
    %v1370 = vunpack.c.0.s8 %v1369
    %v1371 = vlaneseq
    %v1372 = vshrl.u32 %v1371, 7
    %v1373 = vsub.s32 %v1370, %v1372
    %v1374 = vrot.slane %v1313, %v1373
    %v1376 = vunpack.c.l.s4 1966171168
    %v1377 = vunpack.c.0.s8 %v1376
    %v1378 = vlaneseq
    %v1379 = vshrl.u32 %v1378, 7
    %v1380 = vsub.s32 %v1377, %v1379
    %v1381 = vrot.slane %v1367, %v1380
    %v1382 = vcombine.high %v1374, %v1374
    %v1383 = vcombine.high %v1381, %v1381
    %v1385 = vunpack.c.l.s4 1966171168
    %v1386 = vunpack.c.0.s8 %v1385
    %v1387 = vlaneseq
    %v1388 = vshrl.u32 %v1387, 7
    %v1389 = vsub.s32 %v1386, %v1388
    %v1390 = vrot.slane %v1374, %v1389
    %v1392 = vunpack.c.l.s4 1966171168
    %v1393 = vunpack.c.0.s8 %v1392
    %v1394 = vlaneseq
    %v1395 = vshrl.u32 %v1394, 7
    %v1396 = vsub.s32 %v1393, %v1395
    %v1397 = vrot.slane %v1381, %v1396
    %v1399 = vunpack.c.l.s4 1966171168
    %v1400 = vunpack.c.0.s8 %v1399
    %v1401 = vlaneseq
    %v1402 = vshrl.u32 %v1401, 7
    %v1403 = vsub.s32 %v1400, %v1402
    %v1404 = vrot.slane %v1382, %v1403
    %v1406 = vunpack.c.l.s4 1966171168
    %v1407 = vunpack.c.0.s8 %v1406
    %v1408 = vlaneseq
    %v1409 = vshrl.u32 %v1408, 7
    %v1410 = vsub.s32 %v1407, %v1409
    %v1411 = vrot.slane %v1383, %v1410
    %v1412 = vcombine.high %v1390, %v1390
    %v1413 = vcombine.high %v1397, %v1397
    %v1414 = vcombine.high %v1404, %v1404
    %v1415 = vcombine.high %v1411, %v1411
    %v1416 = vlaneseq
    %v1417 = vshrl.u32 %v1416, 7
    %v1418 = vsub.s32 0, %v1417
    %v1419 = vrot.slane %v1341, %v1418
    %v1420 = vlaneseq
    %v1421 = vshrl.u32 %v1420, 7
    %v1422 = vsub.s32 0, %v1421
    %v1423 = vrot.slane %v1355, %v1422
    %v1424 = vlaneseq
    %v1425 = vshrl.u32 %v1424, 7
    %v1426 = vsub.s32 0, %v1425
    %v1427 = vrot.slane %v1363, %v1426
    %v1428 = vlaneseq
    %v1429 = vshrl.u32 %v1428, 7
    %v1430 = vsub.s32 0, %v1429
    %v1431 = vrot.slane %v1365, %v1430
    %v1432 = vlaneseq
    %v1433 = vshrl.u32 %v1432, 7
    %v1434 = vsub.s32 0, %v1433
    %v1435 = vrot.slane %v1348, %v1434
    %v1436 = vlaneseq
    %v1437 = vshrl.u32 %v1436, 7
    %v1438 = vsub.s32 0, %v1437
    %v1439 = vrot.slane %v1362, %v1438
    %v1440 = vlaneseq
    %v1441 = vshrl.u32 %v1440, 7
    %v1442 = vsub.s32 0, %v1441
    %v1443 = vrot.slane %v1364, %v1442
    %v1444 = vlaneseq
    %v1445 = vshrl.u32 %v1444, 7
    %v1446 = vsub.s32 0, %v1445
    %v1447 = vrot.slane %v1366, %v1446
    %v1448 = vlaneseq
    %v1449 = vshrl.u32 %v1448, 7
    %v1450 = vsub.s32 0, %v1449
    %v1451 = vrot.slane %v1390, %v1450
    %v1452 = vlaneseq
    %v1453 = vshrl.u32 %v1452, 7
    %v1454 = vsub.s32 0, %v1453
    %v1455 = vrot.slane %v1404, %v1454
    %v1456 = vlaneseq
    %v1457 = vshrl.u32 %v1456, 7
    %v1458 = vsub.s32 0, %v1457
    %v1459 = vrot.slane %v1412, %v1458
    %v1460 = vlaneseq
    %v1461 = vshrl.u32 %v1460, 7
    %v1462 = vsub.s32 0, %v1461
    %v1463 = vrot.slane %v1414, %v1462
    %v1464 = vlaneseq
    %v1465 = vshrl.u32 %v1464, 7
    %v1466 = vsub.s32 0, %v1465
    %v1467 = vrot.slane %v1397, %v1466
    %v1468 = vlaneseq
    %v1469 = vshrl.u32 %v1468, 7
    %v1470 = vsub.s32 0, %v1469
    %v1471 = vrot.slane %v1411, %v1470
    %v1472 = vlaneseq
    %v1473 = vshrl.u32 %v1472, 7
    %v1474 = vsub.s32 0, %v1473
    %v1475 = vrot.slane %v1413, %v1474
    %v1476 = vlaneseq
    %v1477 = vshrl.u32 %v1476, 7
    %v1478 = vsub.s32 0, %v1477
    %v1479 = vrot.slane %v1415, %v1478
    %v1496 = vmul.f32 %v1419, %v1314
    %v1497 = vmul.f32 %v1419, %v1315
    %v1498 = vmul.f32 %v1423, %v1314
    %v1499 = vmul.f32 %v1423, %v1315
    %v1500 = vmul.f32 %v1427, %v1314
    %v1501 = vmul.f32 %v1427, %v1315
    %v1502 = vmul.f32 %v1431, %v1314
    %v1503 = vmul.f32 %v1431, %v1315
    %v1504 = vmul.f32 %v1435, %v1314
    %v1505 = vmul.f32 %v1435, %v1315
    %v1506 = vmul.f32 %v1439, %v1314
    %v1507 = vmul.f32 %v1439, %v1315
    %v1508 = vmul.f32 %v1443, %v1314
    %v1509 = vmul.f32 %v1443, %v1315
    %v1510 = vmul.f32 %v1447, %v1314
    %v1511 = vmul.f32 %v1447, %v1315
    %v1512 = vmul.f32 %v1451, %v1314
    %v1513 = vmul.f32 %v1451, %v1315
    %v1514 = vmul.f32 %v1455, %v1314
    %v1515 = vmul.f32 %v1455, %v1315
    %v1516 = vmul.f32 %v1459, %v1314
    %v1517 = vmul.f32 %v1459, %v1315
    %v1518 = vmul.f32 %v1463, %v1314
    %v1519 = vmul.f32 %v1463, %v1315
    %v1520 = vmul.f32 %v1467, %v1314
    %v1521 = vmul.f32 %v1467, %v1315
    %v1522 = vmul.f32 %v1471, %v1314
    %v1523 = vmul.f32 %v1471, %v1315
    %v1524 = vmul.f32 %v1475, %v1314
    %v1525 = vmul.f32 %v1475, %v1315
    %v1526 = vmul.f32 %v1479, %v1314
    %v1527 = vmul.f32 %v1479, %v1315
    %v1528 = vmul.f32 %v1496, 1.442695
    %v1529 = vpow.pop %v1528
    %v1530 = vmul.f32 %v1497, 1.442695
    %v1531 = vpow.pop %v1530
    %v1532 = vmul.f32 %v1498, 1.442695
    %v1533 = vpow.pop %v1532
    %v1534 = vmul.f32 %v1499, 1.442695
    %v1535 = vpow.pop %v1534
    %v1536 = vmul.f32 %v1500, 1.442695
    %v1537 = vpow.pop %v1536
    %v1538 = vmul.f32 %v1501, 1.442695
    %v1539 = vpow.pop %v1538
    %v1540 = vmul.f32 %v1502, 1.442695
    %v1541 = vpow.pop %v1540
    %v1542 = vmul.f32 %v1503, 1.442695
    %v1543 = vpow.pop %v1542
    %v1544 = vmul.f32 %v1504, 1.442695
    %v1545 = vpow.pop %v1544
    %v1546 = vmul.f32 %v1505, 1.442695
    %v1547 = vpow.pop %v1546
    %v1548 = vmul.f32 %v1506, 1.442695
    %v1549 = vpow.pop %v1548
    %v1550 = vmul.f32 %v1507, 1.442695
    %v1551 = vpow.pop %v1550
    %v1552 = vmul.f32 %v1508, 1.442695
    %v1553 = vpow.pop %v1552
    %v1554 = vmul.f32 %v1509, 1.442695
    %v1555 = vpow.pop %v1554
    %v1556 = vmul.f32 %v1510, 1.442695
    %v1557 = vpow.pop %v1556
    %v1558 = vmul.f32 %v1511, 1.442695
    %v1559 = vpow.pop %v1558
    %v1560 = vmul.f32 %v1512, 1.442695
    %v1561 = vpow.pop %v1560
    %v1562 = vmul.f32 %v1513, 1.442695
    %v1563 = vpow.pop %v1562
    %v1564 = vmul.f32 %v1514, 1.442695
    %v1565 = vpow.pop %v1564
    %v1566 = vmul.f32 %v1515, 1.442695
    %v1567 = vpow.pop %v1566
    %v1568 = vmul.f32 %v1516, 1.442695
    %v1569 = vpow.pop %v1568
    %v1570 = vmul.f32 %v1517, 1.442695
    %v1571 = vpow.pop %v1570
    %v1572 = vmul.f32 %v1518, 1.442695
    %v1573 = vpow.pop %v1572
    %v1574 = vmul.f32 %v1519, 1.442695
    %v1575 = vpow.pop %v1574
    %v1576 = vmul.f32 %v1520, 1.442695
    %v1577 = vpow.pop %v1576
    %v1578 = vmul.f32 %v1521, 1.442695
    %v1579 = vpow.pop %v1578
    %v1580 = vmul.f32 %v1522, 1.442695
    %v1581 = vpow.pop %v1580
    %v1582 = vmul.f32 %v1523, 1.442695
    %v1583 = vpow.pop %v1582
    %v1584 = vmul.f32 %v1524, 1.442695
    %v1585 = vpow.pop %v1584
    %v1586 = vmul.f32 %v1525, 1.442695
    %v1587 = vpow.pop %v1586
    %v1588 = vmul.f32 %v1526, 1.442695
    %v1589 = vpow.pop %v1588
    %v1590 = vmul.f32 %v1527, 1.442695
    %v1591 = vpow.pop %v1590
    %v1592 = vmul.f32 %v1312, %v691
    %v1593 = vmul.f32 %v1313, %v692
    %v1596 = vcombine.high %v1592, %v1592
    %v1598 = vunpack.c.l.s4 1966171168
    %v1599 = vunpack.c.0.s8 %v1598
    %v1600 = vlaneseq
    %v1601 = vshrl.u32 %v1600, 7
    %v1602 = vsub.s32 %v1599, %v1601
    %v1603 = vrot.slane %v1592, %v1602
    %v1605 = vunpack.c.l.s4 1966171168
    %v1606 = vunpack.c.0.s8 %v1605
    %v1607 = vlaneseq
    %v1608 = vshrl.u32 %v1607, 7
    %v1609 = vsub.s32 %v1606, %v1608
    %v1610 = vrot.slane %v1596, %v1609
    %v1611 = vcombine.high %v1603, %v1603
    %v1612 = vcombine.high %v1610, %v1610
    %v1614 = vunpack.c.l.s4 1966171168
    %v1615 = vunpack.c.0.s8 %v1614
    %v1616 = vlaneseq
    %v1617 = vshrl.u32 %v1616, 7
    %v1618 = vsub.s32 %v1615, %v1617
    %v1619 = vrot.slane %v1603, %v1618
    %v1621 = vunpack.c.l.s4 1966171168
    %v1622 = vunpack.c.0.s8 %v1621
    %v1623 = vlaneseq
    %v1624 = vshrl.u32 %v1623, 7
    %v1625 = vsub.s32 %v1622, %v1624
    %v1626 = vrot.slane %v1610, %v1625
    %v1628 = vunpack.c.l.s4 1966171168
    %v1629 = vunpack.c.0.s8 %v1628
    %v1630 = vlaneseq
    %v1631 = vshrl.u32 %v1630, 7
    %v1632 = vsub.s32 %v1629, %v1631
    %v1633 = vrot.slane %v1611, %v1632
    %v1635 = vunpack.c.l.s4 1966171168
    %v1636 = vunpack.c.0.s8 %v1635
    %v1637 = vlaneseq
    %v1638 = vshrl.u32 %v1637, 7
    %v1639 = vsub.s32 %v1636, %v1638
    %v1640 = vrot.slane %v1612, %v1639
    %v1641 = vcombine.high %v1619, %v1619
    %v1642 = vcombine.high %v1626, %v1626
    %v1643 = vcombine.high %v1633, %v1633
    %v1644 = vcombine.high %v1640, %v1640
    %v1645 = vcombine.high %v1593, %v1593
    %v1647 = vunpack.c.l.s4 1966171168
    %v1648 = vunpack.c.0.s8 %v1647
    %v1649 = vlaneseq
    %v1650 = vshrl.u32 %v1649, 7
    %v1651 = vsub.s32 %v1648, %v1650
    %v1652 = vrot.slane %v1593, %v1651
    %v1654 = vunpack.c.l.s4 1966171168
    %v1655 = vunpack.c.0.s8 %v1654
    %v1656 = vlaneseq
    %v1657 = vshrl.u32 %v1656, 7
    %v1658 = vsub.s32 %v1655, %v1657
    %v1659 = vrot.slane %v1645, %v1658
    %v1660 = vcombine.high %v1652, %v1652
    %v1661 = vcombine.high %v1659, %v1659
    %v1663 = vunpack.c.l.s4 1966171168
    %v1664 = vunpack.c.0.s8 %v1663
    %v1665 = vlaneseq
    %v1666 = vshrl.u32 %v1665, 7
    %v1667 = vsub.s32 %v1664, %v1666
    %v1668 = vrot.slane %v1652, %v1667
    %v1670 = vunpack.c.l.s4 1966171168
    %v1671 = vunpack.c.0.s8 %v1670
    %v1672 = vlaneseq
    %v1673 = vshrl.u32 %v1672, 7
    %v1674 = vsub.s32 %v1671, %v1673
    %v1675 = vrot.slane %v1659, %v1674
    %v1677 = vunpack.c.l.s4 1966171168
    %v1678 = vunpack.c.0.s8 %v1677
    %v1679 = vlaneseq
    %v1680 = vshrl.u32 %v1679, 7
    %v1681 = vsub.s32 %v1678, %v1680
    %v1682 = vrot.slane %v1660, %v1681
    %v1684 = vunpack.c.l.s4 1966171168
    %v1685 = vunpack.c.0.s8 %v1684
    %v1686 = vlaneseq
    %v1687 = vshrl.u32 %v1686, 7
    %v1688 = vsub.s32 %v1685, %v1687
    %v1689 = vrot.slane %v1661, %v1688
    %v1690 = vcombine.high %v1668, %v1668
    %v1691 = vcombine.high %v1675, %v1675
    %v1692 = vcombine.high %v1682, %v1682
    %v1693 = vcombine.high %v1689, %v1689
    %v1694 = vlaneseq
    %v1695 = vshrl.u32 %v1694, 7
    %v1696 = vsub.s32 0, %v1695
    %v1697 = vrot.slane %v1278, %v1696
    %s1699 = sor.u32 256, 64
    %1700 = vbcast.lane.b32.xlu0 %v1697, %s1699
    %v1701 = vpop.permute.xlu0 %1700
    %s1703 = sor.u32 256, 72
    %1704 = vbcast.lane.b32.xlu0 %v1697, %s1703
    %v1705 = vpop.permute.xlu0 %1704
    %v1706 = vlaneseq
    %v1707 = vshrl.u32 %v1706, 7
    %v1708 = vsub.s32 1, %v1707
    %v1709 = vrot.slane %v1278, %v1708
    %s1711 = sor.u32 256, 64
    %1712 = vbcast.lane.b32.xlu0 %v1709, %s1711
    %v1713 = vpop.permute.xlu0 %1712
    %s1715 = sor.u32 256, 72
    %1716 = vbcast.lane.b32.xlu0 %v1709, %s1715
    %v1717 = vpop.permute.xlu0 %1716
    %v1718 = vlaneseq
    %v1719 = vshrl.u32 %v1718, 7
    %v1720 = vsub.s32 2, %v1719
    %v1721 = vrot.slane %v1278, %v1720
    %s1723 = sor.u32 256, 64
    %1724 = vbcast.lane.b32.xlu0 %v1721, %s1723
    %v1725 = vpop.permute.xlu0 %1724
    %s1727 = sor.u32 256, 72
    %1728 = vbcast.lane.b32.xlu0 %v1721, %s1727
    %v1729 = vpop.permute.xlu0 %1728
    %v1730 = vlaneseq
    %v1731 = vshrl.u32 %v1730, 7
    %v1732 = vsub.s32 3, %v1731
    %v1733 = vrot.slane %v1278, %v1732
    %s1735 = sor.u32 256, 64
    %1736 = vbcast.lane.b32.xlu0 %v1733, %s1735
    %v1737 = vpop.permute.xlu0 %1736
    %s1739 = sor.u32 256, 72
    %1740 = vbcast.lane.b32.xlu0 %v1733, %s1739
    %v1741 = vpop.permute.xlu0 %1740
    %v1742 = vlaneseq
    %v1743 = vshrl.u32 %v1742, 7
    %v1744 = vsub.s32 4, %v1743
    %v1745 = vrot.slane %v1278, %v1744
    %s1747 = sor.u32 256, 64
    %1748 = vbcast.lane.b32.xlu0 %v1745, %s1747
    %v1749 = vpop.permute.xlu0 %1748
    %s1751 = sor.u32 256, 72
    %1752 = vbcast.lane.b32.xlu0 %v1745, %s1751
    %v1753 = vpop.permute.xlu0 %1752
    %v1754 = vlaneseq
    %v1755 = vshrl.u32 %v1754, 7
    %v1756 = vsub.s32 5, %v1755
    %v1757 = vrot.slane %v1278, %v1756
    %s1759 = sor.u32 256, 64
    %1760 = vbcast.lane.b32.xlu0 %v1757, %s1759
    %v1761 = vpop.permute.xlu0 %1760
    %s1763 = sor.u32 256, 72
    %1764 = vbcast.lane.b32.xlu0 %v1757, %s1763
    %v1765 = vpop.permute.xlu0 %1764
    %v1766 = vlaneseq
    %v1767 = vshrl.u32 %v1766, 7
    %v1768 = vsub.s32 6, %v1767
    %v1769 = vrot.slane %v1278, %v1768
    %s1771 = sor.u32 256, 64
    %1772 = vbcast.lane.b32.xlu0 %v1769, %s1771
    %v1773 = vpop.permute.xlu0 %1772
    %s1775 = sor.u32 256, 72
    %1776 = vbcast.lane.b32.xlu0 %v1769, %s1775
    %v1777 = vpop.permute.xlu0 %1776
    %v1778 = vlaneseq
    %v1779 = vshrl.u32 %v1778, 7
    %v1780 = vsub.s32 7, %v1779
    %v1781 = vrot.slane %v1278, %v1780
    %s1783 = sor.u32 256, 64
    %1784 = vbcast.lane.b32.xlu0 %v1781, %s1783
    %v1785 = vpop.permute.xlu0 %1784
    %s1787 = sor.u32 256, 72
    %1788 = vbcast.lane.b32.xlu0 %v1781, %s1787
    %v1789 = vpop.permute.xlu0 %1788
    %v1790 = vlaneseq
    %v1791 = vshrl.u32 %v1790, 7
    %v1792 = vsub.s32 0, %v1791
    %v1793 = vrot.slane %v1284, %v1792
    %s1795 = sor.u32 256, 64
    %1796 = vbcast.lane.b32.xlu0 %v1793, %s1795
    %v1797 = vpop.permute.xlu0 %1796
    %s1799 = sor.u32 256, 72
    %1800 = vbcast.lane.b32.xlu0 %v1793, %s1799
    %v1801 = vpop.permute.xlu0 %1800
    %v1802 = vlaneseq
    %v1803 = vshrl.u32 %v1802, 7
    %v1804 = vsub.s32 1, %v1803
    %v1805 = vrot.slane %v1284, %v1804
    %s1807 = sor.u32 256, 64
    %1808 = vbcast.lane.b32.xlu0 %v1805, %s1807
    %v1809 = vpop.permute.xlu0 %1808
    %s1811 = sor.u32 256, 72
    %1812 = vbcast.lane.b32.xlu0 %v1805, %s1811
    %v1813 = vpop.permute.xlu0 %1812
    %v1814 = vlaneseq
    %v1815 = vshrl.u32 %v1814, 7
    %v1816 = vsub.s32 2, %v1815
    %v1817 = vrot.slane %v1284, %v1816
    %s1819 = sor.u32 256, 64
    %1820 = vbcast.lane.b32.xlu0 %v1817, %s1819
    %v1821 = vpop.permute.xlu0 %1820
    %s1823 = sor.u32 256, 72
    %1824 = vbcast.lane.b32.xlu0 %v1817, %s1823
    %v1825 = vpop.permute.xlu0 %1824
    %v1826 = vlaneseq
    %v1827 = vshrl.u32 %v1826, 7
    %v1828 = vsub.s32 3, %v1827
    %v1829 = vrot.slane %v1284, %v1828
    %s1831 = sor.u32 256, 64
    %1832 = vbcast.lane.b32.xlu0 %v1829, %s1831
    %v1833 = vpop.permute.xlu0 %1832
    %s1835 = sor.u32 256, 72
    %1836 = vbcast.lane.b32.xlu0 %v1829, %s1835
    %v1837 = vpop.permute.xlu0 %1836
    %v1838 = vlaneseq
    %v1839 = vshrl.u32 %v1838, 7
    %v1840 = vsub.s32 4, %v1839
    %v1841 = vrot.slane %v1284, %v1840
    %s1843 = sor.u32 256, 64
    %1844 = vbcast.lane.b32.xlu0 %v1841, %s1843
    %v1845 = vpop.permute.xlu0 %1844
    %s1847 = sor.u32 256, 72
    %1848 = vbcast.lane.b32.xlu0 %v1841, %s1847
    %v1849 = vpop.permute.xlu0 %1848
    %v1850 = vlaneseq
    %v1851 = vshrl.u32 %v1850, 7
    %v1852 = vsub.s32 5, %v1851
    %v1853 = vrot.slane %v1284, %v1852
    %s1855 = sor.u32 256, 64
    %1856 = vbcast.lane.b32.xlu0 %v1853, %s1855
    %v1857 = vpop.permute.xlu0 %1856
    %s1859 = sor.u32 256, 72
    %1860 = vbcast.lane.b32.xlu0 %v1853, %s1859
    %v1861 = vpop.permute.xlu0 %1860
    %v1862 = vlaneseq
    %v1863 = vshrl.u32 %v1862, 7
    %v1864 = vsub.s32 6, %v1863
    %v1865 = vrot.slane %v1284, %v1864
    %s1867 = sor.u32 256, 64
    %1868 = vbcast.lane.b32.xlu0 %v1865, %s1867
    %v1869 = vpop.permute.xlu0 %1868
    %s1871 = sor.u32 256, 72
    %1872 = vbcast.lane.b32.xlu0 %v1865, %s1871
    %v1873 = vpop.permute.xlu0 %1872
    %v1874 = vlaneseq
    %v1875 = vshrl.u32 %v1874, 7
    %v1876 = vsub.s32 7, %v1875
    %v1877 = vrot.slane %v1284, %v1876
    %s1879 = sor.u32 256, 64
    %1880 = vbcast.lane.b32.xlu0 %v1877, %s1879
    %v1881 = vpop.permute.xlu0 %1880
    %s1883 = sor.u32 256, 72
    %1884 = vbcast.lane.b32.xlu0 %v1877, %s1883
    %v1885 = vpop.permute.xlu0 %1884
    %v1886 = vlaneseq
    %v1887 = vshrl.u32 %v1886, 7
    %v1888 = vsub.s32 0, %v1887
    %v1889 = vrot.slane %v1619, %v1888
    %v1890 = vlaneseq
    %v1891 = vshrl.u32 %v1890, 7
    %v1892 = vsub.s32 0, %v1891
    %v1893 = vrot.slane %v1633, %v1892
    %v1894 = vlaneseq
    %v1895 = vshrl.u32 %v1894, 7
    %v1896 = vsub.s32 0, %v1895
    %v1897 = vrot.slane %v1641, %v1896
    %v1898 = vlaneseq
    %v1899 = vshrl.u32 %v1898, 7
    %v1900 = vsub.s32 0, %v1899
    %v1901 = vrot.slane %v1643, %v1900
    %v1902 = vlaneseq
    %v1903 = vshrl.u32 %v1902, 7
    %v1904 = vsub.s32 0, %v1903
    %v1905 = vrot.slane %v1626, %v1904
    %v1906 = vlaneseq
    %v1907 = vshrl.u32 %v1906, 7
    %v1908 = vsub.s32 0, %v1907
    %v1909 = vrot.slane %v1640, %v1908
    %v1910 = vlaneseq
    %v1911 = vshrl.u32 %v1910, 7
    %v1912 = vsub.s32 0, %v1911
    %v1913 = vrot.slane %v1642, %v1912
    %v1914 = vlaneseq
    %v1915 = vshrl.u32 %v1914, 7
    %v1916 = vsub.s32 0, %v1915
    %v1917 = vrot.slane %v1644, %v1916
    %v1918 = vlaneseq
    %v1919 = vshrl.u32 %v1918, 7
    %v1920 = vsub.s32 0, %v1919
    %v1921 = vrot.slane %v1668, %v1920
    %v1922 = vlaneseq
    %v1923 = vshrl.u32 %v1922, 7
    %v1924 = vsub.s32 0, %v1923
    %v1925 = vrot.slane %v1682, %v1924
    %v1926 = vlaneseq
    %v1927 = vshrl.u32 %v1926, 7
    %v1928 = vsub.s32 0, %v1927
    %v1929 = vrot.slane %v1690, %v1928
    %v1930 = vlaneseq
    %v1931 = vshrl.u32 %v1930, 7
    %v1932 = vsub.s32 0, %v1931
    %v1933 = vrot.slane %v1692, %v1932
    %v1934 = vlaneseq
    %v1935 = vshrl.u32 %v1934, 7
    %v1936 = vsub.s32 0, %v1935
    %v1937 = vrot.slane %v1675, %v1936
    %v1938 = vlaneseq
    %v1939 = vshrl.u32 %v1938, 7
    %v1940 = vsub.s32 0, %v1939
    %v1941 = vrot.slane %v1689, %v1940
    %v1942 = vlaneseq
    %v1943 = vshrl.u32 %v1942, 7
    %v1944 = vsub.s32 0, %v1943
    %v1945 = vrot.slane %v1691, %v1944
    %v1946 = vlaneseq
    %v1947 = vshrl.u32 %v1946, 7
    %v1948 = vsub.s32 0, %v1947
    %v1949 = vrot.slane %v1693, %v1948
    %v1966 = vmul.f32 %v1889, %v1701
    %v1967 = vmul.f32 %v1889, %v1705
    %v1968 = vmul.f32 %v1893, %v1713
    %v1969 = vmul.f32 %v1893, %v1717
    %v1970 = vmul.f32 %v1897, %v1725
    %v1971 = vmul.f32 %v1897, %v1729
    %v1972 = vmul.f32 %v1901, %v1737
    %v1973 = vmul.f32 %v1901, %v1741
    %v1974 = vmul.f32 %v1905, %v1749
    %v1975 = vmul.f32 %v1905, %v1753
    %v1976 = vmul.f32 %v1909, %v1761
    %v1977 = vmul.f32 %v1909, %v1765
    %v1978 = vmul.f32 %v1913, %v1773
    %v1979 = vmul.f32 %v1913, %v1777
    %v1980 = vmul.f32 %v1917, %v1785
    %v1981 = vmul.f32 %v1917, %v1789
    %v1982 = vmul.f32 %v1921, %v1797
    %v1983 = vmul.f32 %v1921, %v1801
    %v1984 = vmul.f32 %v1925, %v1809
    %v1985 = vmul.f32 %v1925, %v1813
    %v1986 = vmul.f32 %v1929, %v1821
    %v1987 = vmul.f32 %v1929, %v1825
    %v1988 = vmul.f32 %v1933, %v1833
    %v1989 = vmul.f32 %v1933, %v1837
    %v1990 = vmul.f32 %v1937, %v1845
    %v1991 = vmul.f32 %v1937, %v1849
    %v1992 = vmul.f32 %v1941, %v1857
    %v1993 = vmul.f32 %v1941, %v1861
    %v1994 = vmul.f32 %v1945, %v1869
    %v1995 = vmul.f32 %v1945, %v1873
    %v1996 = vmul.f32 %v1949, %v1881
    %v1997 = vmul.f32 %v1949, %v1885
    %v1998 = vmul.f32 %v1529, 0.0
    %v1999 = vmul.f32 %v1531, 0.0
    %v2000 = vmul.f32 %v1561, 0.0
    %v2001 = vmul.f32 %v1563, 0.0
    %v2002 = vadd.f32 %v1998, %v1966
    %v2003 = vadd.f32 %v1999, %v1967
    %v2004 = vadd.f32 %v2000, %v1982
    %v2005 = vadd.f32 %v2001, %v1983
    %2006 = vst.msk [vmem:[#allocation3] sm:$0xff] %vm625, %v2002
    %2007 = vst.msk [vmem:[#allocation3 + $0x8] sm:$0xff] %vm625, %v2003
    %2008 = vst.msk [vmem:[#allocation3 + $0x80] sm:$0xff] %vm625, %v2004
    %2009 = vst.msk [vmem:[#allocation3 + $0x88] sm:$0xff] %vm625, %v2005
    %v2010 = vmul.f32 %v1533, %v2002
    %v2011 = vmul.f32 %v1535, %v2003
    %v2012 = vmul.f32 %v1565, %v2004
    %v2013 = vmul.f32 %v1567, %v2005
    %v2014 = vadd.f32 %v2010, %v1968
    %v2015 = vadd.f32 %v2011, %v1969
    %v2016 = vadd.f32 %v2012, %v1984
    %v2017 = vadd.f32 %v2013, %v1985
    %s2018 = scalar_lea.vmem [#allocation3], 16
    %2019 = vst.msk [vmem:[%s2018] sm:$0xff] %vm625, %v2014
    %2020 = vst.msk [vmem:[%s2018 + $0x8] sm:$0xff] %vm625, %v2015
    %2021 = vst.msk [vmem:[%s2018 + $0x80] sm:$0xff] %vm625, %v2016
    %2022 = vst.msk [vmem:[%s2018 + $0x88] sm:$0xff] %vm625, %v2017
    %v2023 = vmul.f32 %v1537, %v2014
    %v2024 = vmul.f32 %v1539, %v2015
    %v2025 = vmul.f32 %v1569, %v2016
    %v2026 = vmul.f32 %v1571, %v2017
    %v2027 = vadd.f32 %v2023, %v1970
    %v2028 = vadd.f32 %v2024, %v1971
    %v2029 = vadd.f32 %v2025, %v1986
    %v2030 = vadd.f32 %v2026, %v1987
    %s2031 = scalar_lea.vmem [#allocation3], 32
    %2032 = vst.msk [vmem:[%s2031] sm:$0xff] %vm625, %v2027
    %2033 = vst.msk [vmem:[%s2031 + $0x8] sm:$0xff] %vm625, %v2028
    %2034 = vst.msk [vmem:[%s2031 + $0x80] sm:$0xff] %vm625, %v2029
    %2035 = vst.msk [vmem:[%s2031 + $0x88] sm:$0xff] %vm625, %v2030
    %v2036 = vmul.f32 %v1541, %v2027
    %v2037 = vmul.f32 %v1543, %v2028
    %v2038 = vmul.f32 %v1573, %v2029
    %v2039 = vmul.f32 %v1575, %v2030
    %v2040 = vadd.f32 %v2036, %v1972
    %v2041 = vadd.f32 %v2037, %v1973
    %v2042 = vadd.f32 %v2038, %v1988
    %v2043 = vadd.f32 %v2039, %v1989
    %s2044 = scalar_lea.vmem [#allocation3], 48
    %2045 = vst.msk [vmem:[%s2044] sm:$0xff] %vm625, %v2040
    %2046 = vst.msk [vmem:[%s2044 + $0x8] sm:$0xff] %vm625, %v2041
    %2047 = vst.msk [vmem:[%s2044 + $0x80] sm:$0xff] %vm625, %v2042
    %2048 = vst.msk [vmem:[%s2044 + $0x88] sm:$0xff] %vm625, %v2043
    %v2049 = vmul.f32 %v1545, %v2040
    %v2050 = vmul.f32 %v1547, %v2041
    %v2051 = vmul.f32 %v1577, %v2042
    %v2052 = vmul.f32 %v1579, %v2043
    %v2053 = vadd.f32 %v2049, %v1974
    %v2054 = vadd.f32 %v2050, %v1975
    %v2055 = vadd.f32 %v2051, %v1990
    %v2056 = vadd.f32 %v2052, %v1991
    %s2057 = scalar_lea.vmem [#allocation3], 64
    %2058 = vst.msk [vmem:[%s2057] sm:$0xff] %vm625, %v2053
    %2059 = vst.msk [vmem:[%s2057 + $0x8] sm:$0xff] %vm625, %v2054
    %2060 = vst.msk [vmem:[%s2057 + $0x80] sm:$0xff] %vm625, %v2055
    %2061 = vst.msk [vmem:[%s2057 + $0x88] sm:$0xff] %vm625, %v2056
    %v2062 = vmul.f32 %v1549, %v2053
    %v2063 = vmul.f32 %v1551, %v2054
    %v2064 = vmul.f32 %v1581, %v2055
    %v2065 = vmul.f32 %v1583, %v2056
    %v2066 = vadd.f32 %v2062, %v1976
    %v2067 = vadd.f32 %v2063, %v1977
    %v2068 = vadd.f32 %v2064, %v1992
    %v2069 = vadd.f32 %v2065, %v1993
    %s2070 = scalar_lea.vmem [#allocation3], 80
    %2071 = vst.msk [vmem:[%s2070] sm:$0xff] %vm625, %v2066
    %2072 = vst.msk [vmem:[%s2070 + $0x8] sm:$0xff] %vm625, %v2067
    %2073 = vst.msk [vmem:[%s2070 + $0x80] sm:$0xff] %vm625, %v2068
    %2074 = vst.msk [vmem:[%s2070 + $0x88] sm:$0xff] %vm625, %v2069
    %v2075 = vmul.f32 %v1553, %v2066
    %v2076 = vmul.f32 %v1555, %v2067
    %v2077 = vmul.f32 %v1585, %v2068
    %v2078 = vmul.f32 %v1587, %v2069
    %v2079 = vadd.f32 %v2075, %v1978
    %v2080 = vadd.f32 %v2076, %v1979
    %v2081 = vadd.f32 %v2077, %v1994
    %v2082 = vadd.f32 %v2078, %v1995
    %s2083 = scalar_lea.vmem [#allocation3], 96
    %2084 = vst.msk [vmem:[%s2083] sm:$0xff] %vm625, %v2079
    %2085 = vst.msk [vmem:[%s2083 + $0x8] sm:$0xff] %vm625, %v2080
    %2086 = vst.msk [vmem:[%s2083 + $0x80] sm:$0xff] %vm625, %v2081
    %2087 = vst.msk [vmem:[%s2083 + $0x88] sm:$0xff] %vm625, %v2082
    %v2088 = vmul.f32 %v1557, %v2079
    %v2089 = vmul.f32 %v1559, %v2080
    %v2090 = vmul.f32 %v1589, %v2081
    %v2091 = vmul.f32 %v1591, %v2082
    %v2092 = vadd.f32 %v2088, %v1980
    %v2093 = vadd.f32 %v2089, %v1981
    %v2094 = vadd.f32 %v2090, %v1996
    %v2095 = vadd.f32 %v2091, %v1997
    %s2096 = scalar_lea.vmem [#allocation3], 112
    %2097 = vst.msk [vmem:[%s2096] sm:$0xff] %vm625, %v2092
    %2098 = vst.msk [vmem:[%s2096 + $0x8] sm:$0xff] %vm625, %v2093
    %2099 = vst.msk [vmem:[%s2096 + $0x80] sm:$0xff] %vm625, %v2094
    %2100 = vst.msk [vmem:[%s2096 + $0x88] sm:$0xff] %vm625, %v2095
    %v2101 = vld [vmem:[#allocation3] sm:$0xff]
    %v2102 = vld [vmem:[#allocation3 + $0x8] sm:$0xff]
    %v2103 = vld [vmem:[#allocation3 + $0x10] sm:$0xff]
    %v2104 = vld [vmem:[#allocation3 + $0x18] sm:$0xff]
    %v2105 = vld [vmem:[#allocation3 + $0x20] sm:$0xff]
    %v2106 = vld [vmem:[#allocation3 + $0x28] sm:$0xff]
    %v2107 = vld [vmem:[#allocation3 + $0x30] sm:$0xff]
    %v2108 = vld [vmem:[#allocation3 + $0x38] sm:$0xff]
    %v2109 = vld [vmem:[#allocation3 + $0x40] sm:$0xff]
    %v2110 = vld [vmem:[#allocation3 + $0x48] sm:$0xff]
    %v2111 = vld [vmem:[#allocation3 + $0x50] sm:$0xff]
    %v2112 = vld [vmem:[#allocation3 + $0x58] sm:$0xff]
    %v2113 = vld [vmem:[#allocation3 + $0x60] sm:$0xff]
    %v2114 = vld [vmem:[#allocation3 + $0x68] sm:$0xff]
    %v2115 = vld [vmem:[#allocation3 + $0x70] sm:$0xff]
    %v2116 = vld [vmem:[#allocation3 + $0x78] sm:$0xff]
    %v2117 = vld [vmem:[#allocation3 + $0x80] sm:$0xff]
    %v2118 = vld [vmem:[#allocation3 + $0x88] sm:$0xff]
    %v2119 = vld [vmem:[#allocation3 + $0x90] sm:$0xff]
    %v2120 = vld [vmem:[#allocation3 + $0x98] sm:$0xff]
    %v2121 = vld [vmem:[#allocation3 + $0xa0] sm:$0xff]
    %v2122 = vld [vmem:[#allocation3 + $0xa8] sm:$0xff]
    %v2123 = vld [vmem:[#allocation3 + $0xb0] sm:$0xff]
    %v2124 = vld [vmem:[#allocation3 + $0xb8] sm:$0xff]
    %v2125 = vld [vmem:[#allocation3 + $0xc0] sm:$0xff]
    %v2126 = vld [vmem:[#allocation3 + $0xc8] sm:$0xff]
    %v2127 = vld [vmem:[#allocation3 + $0xd0] sm:$0xff]
    %v2128 = vld [vmem:[#allocation3 + $0xd8] sm:$0xff]
    %v2129 = vld [vmem:[#allocation3 + $0xe0] sm:$0xff]
    %v2130 = vld [vmem:[#allocation3 + $0xe8] sm:$0xff]
    %v2131 = vld [vmem:[#allocation3 + $0xf0] sm:$0xff]
    %v2132 = vld [vmem:[#allocation3 + $0xf8] sm:$0xff]
    %s2134 = sor.u32 256, 80
    %2135 = vbcast.lane.b32.xlu0 %v1697, %s2134
    %v2136 = vpop.permute.xlu0 %2135
    %s2138 = sor.u32 256, 88
    %2139 = vbcast.lane.b32.xlu0 %v1697, %s2138
    %v2140 = vpop.permute.xlu0 %2139
    %s2142 = sor.u32 256, 80
    %2143 = vbcast.lane.b32.xlu0 %v1709, %s2142
    %v2144 = vpop.permute.xlu0 %2143
    %s2146 = sor.u32 256, 88
    %2147 = vbcast.lane.b32.xlu0 %v1709, %s2146
    %v2148 = vpop.permute.xlu0 %2147
    %s2150 = sor.u32 256, 80
    %2151 = vbcast.lane.b32.xlu0 %v1721, %s2150
    %v2152 = vpop.permute.xlu0 %2151
    %s2154 = sor.u32 256, 88
    %2155 = vbcast.lane.b32.xlu0 %v1721, %s2154
    %v2156 = vpop.permute.xlu0 %2155
    %s2158 = sor.u32 256, 80
    %2159 = vbcast.lane.b32.xlu0 %v1733, %s2158
    %v2160 = vpop.permute.xlu0 %2159
    %s2162 = sor.u32 256, 88
    %2163 = vbcast.lane.b32.xlu0 %v1733, %s2162
    %v2164 = vpop.permute.xlu0 %2163
    %s2166 = sor.u32 256, 80
    %2167 = vbcast.lane.b32.xlu0 %v1745, %s2166
    %v2168 = vpop.permute.xlu0 %2167
    %s2170 = sor.u32 256, 88
    %2171 = vbcast.lane.b32.xlu0 %v1745, %s2170
    %v2172 = vpop.permute.xlu0 %2171
    %s2174 = sor.u32 256, 80
    %2175 = vbcast.lane.b32.xlu0 %v1757, %s2174
    %v2176 = vpop.permute.xlu0 %2175
    %s2178 = sor.u32 256, 88
    %2179 = vbcast.lane.b32.xlu0 %v1757, %s2178
    %v2180 = vpop.permute.xlu0 %2179
    %s2182 = sor.u32 256, 80
    %2183 = vbcast.lane.b32.xlu0 %v1769, %s2182
    %v2184 = vpop.permute.xlu0 %2183
    %s2186 = sor.u32 256, 88
    %2187 = vbcast.lane.b32.xlu0 %v1769, %s2186
    %v2188 = vpop.permute.xlu0 %2187
    %s2190 = sor.u32 256, 80
    %2191 = vbcast.lane.b32.xlu0 %v1781, %s2190
    %v2192 = vpop.permute.xlu0 %2191
    %s2194 = sor.u32 256, 88
    %2195 = vbcast.lane.b32.xlu0 %v1781, %s2194
    %v2196 = vpop.permute.xlu0 %2195
    %s2198 = sor.u32 256, 80
    %2199 = vbcast.lane.b32.xlu0 %v1793, %s2198
    %v2200 = vpop.permute.xlu0 %2199
    %s2202 = sor.u32 256, 88
    %2203 = vbcast.lane.b32.xlu0 %v1793, %s2202
    %v2204 = vpop.permute.xlu0 %2203
    %s2206 = sor.u32 256, 80
    %2207 = vbcast.lane.b32.xlu0 %v1805, %s2206
    %v2208 = vpop.permute.xlu0 %2207
    %s2210 = sor.u32 256, 88
    %2211 = vbcast.lane.b32.xlu0 %v1805, %s2210
    %v2212 = vpop.permute.xlu0 %2211
    %s2214 = sor.u32 256, 80
    %2215 = vbcast.lane.b32.xlu0 %v1817, %s2214
    %v2216 = vpop.permute.xlu0 %2215
    %s2218 = sor.u32 256, 88
    %2219 = vbcast.lane.b32.xlu0 %v1817, %s2218
    %v2220 = vpop.permute.xlu0 %2219
    %s2222 = sor.u32 256, 80
    %2223 = vbcast.lane.b32.xlu0 %v1829, %s2222
    %v2224 = vpop.permute.xlu0 %2223
    %s2226 = sor.u32 256, 88
    %2227 = vbcast.lane.b32.xlu0 %v1829, %s2226
    %v2228 = vpop.permute.xlu0 %2227
    %s2230 = sor.u32 256, 80
    %2231 = vbcast.lane.b32.xlu0 %v1841, %s2230
    %v2232 = vpop.permute.xlu0 %2231
    %s2234 = sor.u32 256, 88
    %2235 = vbcast.lane.b32.xlu0 %v1841, %s2234
    %v2236 = vpop.permute.xlu0 %2235
    %s2238 = sor.u32 256, 80
    %2239 = vbcast.lane.b32.xlu0 %v1853, %s2238
    %v2240 = vpop.permute.xlu0 %2239
    %s2242 = sor.u32 256, 88
    %2243 = vbcast.lane.b32.xlu0 %v1853, %s2242
    %v2244 = vpop.permute.xlu0 %2243
    %s2246 = sor.u32 256, 80
    %2247 = vbcast.lane.b32.xlu0 %v1865, %s2246
    %v2248 = vpop.permute.xlu0 %2247
    %s2250 = sor.u32 256, 88
    %2251 = vbcast.lane.b32.xlu0 %v1865, %s2250
    %v2252 = vpop.permute.xlu0 %2251
    %s2254 = sor.u32 256, 80
    %2255 = vbcast.lane.b32.xlu0 %v1877, %s2254
    %v2256 = vpop.permute.xlu0 %2255
    %s2258 = sor.u32 256, 88
    %2259 = vbcast.lane.b32.xlu0 %v1877, %s2258
    %v2260 = vpop.permute.xlu0 %2259
    %v2261 = vmul.f32 %v2101, %v2136
    %v2262 = vmul.f32 %v2102, %v2140
    %v2263 = vmul.f32 %v2103, %v2144
    %v2264 = vmul.f32 %v2104, %v2148
    %v2265 = vmul.f32 %v2105, %v2152
    %v2266 = vmul.f32 %v2106, %v2156
    %v2267 = vmul.f32 %v2107, %v2160
    %v2268 = vmul.f32 %v2108, %v2164
    %v2269 = vmul.f32 %v2109, %v2168
    %v2270 = vmul.f32 %v2110, %v2172
    %v2271 = vmul.f32 %v2111, %v2176
    %v2272 = vmul.f32 %v2112, %v2180
    %v2273 = vmul.f32 %v2113, %v2184
    %v2274 = vmul.f32 %v2114, %v2188
    %v2275 = vmul.f32 %v2115, %v2192
    %v2276 = vmul.f32 %v2116, %v2196
    %v2277 = vmul.f32 %v2117, %v2200
    %v2278 = vmul.f32 %v2118, %v2204
    %v2279 = vmul.f32 %v2119, %v2208
    %v2280 = vmul.f32 %v2120, %v2212
    %v2281 = vmul.f32 %v2121, %v2216
    %v2282 = vmul.f32 %v2122, %v2220
    %v2283 = vmul.f32 %v2123, %v2224
    %v2284 = vmul.f32 %v2124, %v2228
    %v2285 = vmul.f32 %v2125, %v2232
    %v2286 = vmul.f32 %v2126, %v2236
    %v2287 = vmul.f32 %v2127, %v2240
    %v2288 = vmul.f32 %v2128, %v2244
    %v2289 = vmul.f32 %v2129, %v2248
    %v2290 = vmul.f32 %v2130, %v2252
    %v2291 = vmul.f32 %v2131, %v2256
    %v2292 = vmul.f32 %v2132, %v2260
    %v2293 = vsel %vm625, %v2261, 0.0
    %v2294 = vsel %vm625, %v2262, 0.0
    %v2295 = vadd.f32 %v2293, %v2294
    %v2296 = vrot.slane %v2295, 4
    %v2297 = vadd.f32 %v2295, %v2296
    %v2298 = vrot.slane %v2297, 2
    %v2299 = vadd.f32 %v2297, %v2298
    %v2300 = vrot.slane %v2299, 1
    %v2301 = vadd.f32 %v2299, %v2300
    %v2302 = vsel %vm625, %v2263, 0.0
    %v2303 = vsel %vm625, %v2264, 0.0
    %v2304 = vadd.f32 %v2302, %v2303
    %v2305 = vrot.slane %v2304, 4
    %v2306 = vadd.f32 %v2304, %v2305
    %v2307 = vrot.slane %v2306, 2
    %v2308 = vadd.f32 %v2306, %v2307
    %v2309 = vrot.slane %v2308, 1
    %v2310 = vadd.f32 %v2308, %v2309
    %v2311 = vsel %vm625, %v2265, 0.0
    %v2312 = vsel %vm625, %v2266, 0.0
    %v2313 = vadd.f32 %v2311, %v2312
    %v2314 = vrot.slane %v2313, 4
    %v2315 = vadd.f32 %v2313, %v2314
    %v2316 = vrot.slane %v2315, 2
    %v2317 = vadd.f32 %v2315, %v2316
    %v2318 = vrot.slane %v2317, 1
    %v2319 = vadd.f32 %v2317, %v2318
    %v2320 = vsel %vm625, %v2267, 0.0
    %v2321 = vsel %vm625, %v2268, 0.0
    %v2322 = vadd.f32 %v2320, %v2321
    %v2323 = vrot.slane %v2322, 4
    %v2324 = vadd.f32 %v2322, %v2323
    %v2325 = vrot.slane %v2324, 2
    %v2326 = vadd.f32 %v2324, %v2325
    %v2327 = vrot.slane %v2326, 1
    %v2328 = vadd.f32 %v2326, %v2327
    %v2329 = vsel %vm625, %v2269, 0.0
    %v2330 = vsel %vm625, %v2270, 0.0
    %v2331 = vadd.f32 %v2329, %v2330
    %v2332 = vrot.slane %v2331, 4
    %v2333 = vadd.f32 %v2331, %v2332
    %v2334 = vrot.slane %v2333, 2
    %v2335 = vadd.f32 %v2333, %v2334
    %v2336 = vrot.slane %v2335, 1
    %v2337 = vadd.f32 %v2335, %v2336
    %v2338 = vsel %vm625, %v2271, 0.0
    %v2339 = vsel %vm625, %v2272, 0.0
    %v2340 = vadd.f32 %v2338, %v2339
    %v2341 = vrot.slane %v2340, 4
    %v2342 = vadd.f32 %v2340, %v2341
    %v2343 = vrot.slane %v2342, 2
    %v2344 = vadd.f32 %v2342, %v2343
    %v2345 = vrot.slane %v2344, 1
    %v2346 = vadd.f32 %v2344, %v2345
    %v2347 = vsel %vm625, %v2273, 0.0
    %v2348 = vsel %vm625, %v2274, 0.0
    %v2349 = vadd.f32 %v2347, %v2348
    %v2350 = vrot.slane %v2349, 4
    %v2351 = vadd.f32 %v2349, %v2350
    %v2352 = vrot.slane %v2351, 2
    %v2353 = vadd.f32 %v2351, %v2352
    %v2354 = vrot.slane %v2353, 1
    %v2355 = vadd.f32 %v2353, %v2354
    %v2356 = vsel %vm625, %v2275, 0.0
    %v2357 = vsel %vm625, %v2276, 0.0
    %v2358 = vadd.f32 %v2356, %v2357
    %v2359 = vrot.slane %v2358, 4
    %v2360 = vadd.f32 %v2358, %v2359
    %v2361 = vrot.slane %v2360, 2
    %v2362 = vadd.f32 %v2360, %v2361
    %v2363 = vrot.slane %v2362, 1
    %v2364 = vadd.f32 %v2362, %v2363
    %v2365 = vsel %vm625, %v2277, 0.0
    %v2366 = vsel %vm625, %v2278, 0.0
    %v2367 = vadd.f32 %v2365, %v2366
    %v2368 = vrot.slane %v2367, 4
    %v2369 = vadd.f32 %v2367, %v2368
    %v2370 = vrot.slane %v2369, 2
    %v2371 = vadd.f32 %v2369, %v2370
    %v2372 = vrot.slane %v2371, 1
    %v2373 = vadd.f32 %v2371, %v2372
    %v2374 = vsel %vm625, %v2279, 0.0
    %v2375 = vsel %vm625, %v2280, 0.0
    %v2376 = vadd.f32 %v2374, %v2375
    %v2377 = vrot.slane %v2376, 4
    %v2378 = vadd.f32 %v2376, %v2377
    %v2379 = vrot.slane %v2378, 2
    %v2380 = vadd.f32 %v2378, %v2379
    %v2381 = vrot.slane %v2380, 1
    %v2382 = vadd.f32 %v2380, %v2381
    %v2383 = vsel %vm625, %v2281, 0.0
    %v2384 = vsel %vm625, %v2282, 0.0
    %v2385 = vadd.f32 %v2383, %v2384
    %v2386 = vrot.slane %v2385, 4
    %v2387 = vadd.f32 %v2385, %v2386
    %v2388 = vrot.slane %v2387, 2
    %v2389 = vadd.f32 %v2387, %v2388
    %v2390 = vrot.slane %v2389, 1
    %v2391 = vadd.f32 %v2389, %v2390
    %v2392 = vsel %vm625, %v2283, 0.0
    %v2393 = vsel %vm625, %v2284, 0.0
    %v2394 = vadd.f32 %v2392, %v2393
    %v2395 = vrot.slane %v2394, 4
    %v2396 = vadd.f32 %v2394, %v2395
    %v2397 = vrot.slane %v2396, 2
    %v2398 = vadd.f32 %v2396, %v2397
    %v2399 = vrot.slane %v2398, 1
    %v2400 = vadd.f32 %v2398, %v2399
    %v2401 = vsel %vm625, %v2285, 0.0
    %v2402 = vsel %vm625, %v2286, 0.0
    %v2403 = vadd.f32 %v2401, %v2402
    %v2404 = vrot.slane %v2403, 4
    %v2405 = vadd.f32 %v2403, %v2404
    %v2406 = vrot.slane %v2405, 2
    %v2407 = vadd.f32 %v2405, %v2406
    %v2408 = vrot.slane %v2407, 1
    %v2409 = vadd.f32 %v2407, %v2408
    %v2410 = vsel %vm625, %v2287, 0.0
    %v2411 = vsel %vm625, %v2288, 0.0
    %v2412 = vadd.f32 %v2410, %v2411
    %v2413 = vrot.slane %v2412, 4
    %v2414 = vadd.f32 %v2412, %v2413
    %v2415 = vrot.slane %v2414, 2
    %v2416 = vadd.f32 %v2414, %v2415
    %v2417 = vrot.slane %v2416, 1
    %v2418 = vadd.f32 %v2416, %v2417
    %v2419 = vsel %vm625, %v2289, 0.0
    %v2420 = vsel %vm625, %v2290, 0.0
    %v2421 = vadd.f32 %v2419, %v2420
    %v2422 = vrot.slane %v2421, 4
    %v2423 = vadd.f32 %v2421, %v2422
    %v2424 = vrot.slane %v2423, 2
    %v2425 = vadd.f32 %v2423, %v2424
    %v2426 = vrot.slane %v2425, 1
    %v2427 = vadd.f32 %v2425, %v2426
    %v2428 = vsel %vm625, %v2291, 0.0
    %v2429 = vsel %vm625, %v2292, 0.0
    %v2430 = vadd.f32 %v2428, %v2429
    %v2431 = vrot.slane %v2430, 4
    %v2432 = vadd.f32 %v2430, %v2431
    %v2433 = vrot.slane %v2432, 2
    %v2434 = vadd.f32 %v2432, %v2433
    %v2435 = vrot.slane %v2434, 1
    %v2436 = vadd.f32 %v2434, %v2435
    %v2437 = vld [vmem:[%s9] sm:$0x1]
    %v2439 = vlaneseq
    %v2440 = vshrl.u32 %v2439, 7
    %v2441 = vsub.s32 0, %v2440
    %v2442 = vrot.slane %v2437, %v2441
    %v2444 = vmul.f32 %v2442, %v691
    %v2445 = vmul.f32 %v2442, %v692
    %v2448 = vrot.slane %v2444, 1
    %v2449 = vrot.slane %v2444, 2
    %v2450 = vrot.slane %v2444, 3
    %v2451 = vrot.slane %v2444, 4
    %v2452 = vrot.slane %v2444, 5
    %v2453 = vrot.slane %v2444, 6
    %v2454 = vrot.slane %v2444, 7
    %v2455 = vrot.slane %v2445, 1
    %v2456 = vrot.slane %v2445, 2
    %v2457 = vrot.slane %v2445, 3
    %v2458 = vrot.slane %v2445, 4
    %v2459 = vrot.slane %v2445, 5
    %v2460 = vrot.slane %v2445, 6
    %v2461 = vrot.slane %v2445, 7
    %v2478 = vadd.f32 %v2301, %v2444
    %v2479 = vadd.f32 %v2310, %v2448
    %v2480 = vadd.f32 %v2319, %v2449
    %v2481 = vadd.f32 %v2328, %v2450
    %v2482 = vadd.f32 %v2337, %v2451
    %v2483 = vadd.f32 %v2346, %v2452
    %v2484 = vadd.f32 %v2355, %v2453
    %v2485 = vadd.f32 %v2364, %v2454
    %v2486 = vadd.f32 %v2373, %v2445
    %v2487 = vadd.f32 %v2382, %v2455
    %v2488 = vadd.f32 %v2391, %v2456
    %v2489 = vadd.f32 %v2400, %v2457
    %v2490 = vadd.f32 %v2409, %v2458
    %v2491 = vadd.f32 %v2418, %v2459
    %v2492 = vadd.f32 %v2427, %v2460
    %v2493 = vadd.f32 %v2436, %v2461
    %v2494 = vmul.f32 %v616, 0.5
    %v2495 = vmul.f32 %v622, 0.5
    %v2496 = vtanh.pop %v2494
    %v2497 = vtanh.pop %v2495
    %v2498 = vadd.f32 %v2496, 1.0
    %v2499 = vadd.f32 %v2497, 1.0
    %v2500 = vmul.f32 %v2498, 0.5
    %v2501 = vmul.f32 %v2499, 0.5
    %v2502 = vmul.f32 %v616, %v2500
    %v2503 = vmul.f32 %v622, %v2501
    %v2506 = vrot.slane %v2502, 1
    %v2507 = vrot.slane %v2502, 2
    %v2508 = vrot.slane %v2502, 3
    %v2509 = vrot.slane %v2502, 4
    %v2510 = vrot.slane %v2502, 5
    %v2511 = vrot.slane %v2502, 6
    %v2512 = vrot.slane %v2502, 7
    %v2513 = vrot.slane %v2503, 1
    %v2514 = vrot.slane %v2503, 2
    %v2515 = vrot.slane %v2503, 3
    %v2516 = vrot.slane %v2503, 4
    %v2517 = vrot.slane %v2503, 5
    %v2518 = vrot.slane %v2503, 6
    %v2519 = vrot.slane %v2503, 7
    %2520 = vrot.lane.b32.xlu0 %v2502, 64
    %v2521 = vpop.permute.xlu0 %2520
    %2522 = vrot.lane.b32.xlu0 %v2506, 64
    %v2523 = vpop.permute.xlu0 %2522
    %2524 = vrot.lane.b32.xlu0 %v2507, 64
    %v2525 = vpop.permute.xlu0 %2524
    %2526 = vrot.lane.b32.xlu0 %v2508, 64
    %v2527 = vpop.permute.xlu0 %2526
    %2528 = vrot.lane.b32.xlu0 %v2509, 64
    %v2529 = vpop.permute.xlu0 %2528
    %2530 = vrot.lane.b32.xlu0 %v2510, 64
    %v2531 = vpop.permute.xlu0 %2530
    %2532 = vrot.lane.b32.xlu0 %v2511, 64
    %v2533 = vpop.permute.xlu0 %2532
    %2534 = vrot.lane.b32.xlu0 %v2512, 64
    %v2535 = vpop.permute.xlu0 %2534
    %2536 = vrot.lane.b32.xlu0 %v2503, 64
    %v2537 = vpop.permute.xlu0 %2536
    %2538 = vrot.lane.b32.xlu0 %v2513, 64
    %v2539 = vpop.permute.xlu0 %2538
    %2540 = vrot.lane.b32.xlu0 %v2514, 64
    %v2541 = vpop.permute.xlu0 %2540
    %2542 = vrot.lane.b32.xlu0 %v2515, 64
    %v2543 = vpop.permute.xlu0 %2542
    %2544 = vrot.lane.b32.xlu0 %v2516, 64
    %v2545 = vpop.permute.xlu0 %2544
    %2546 = vrot.lane.b32.xlu0 %v2517, 64
    %v2547 = vpop.permute.xlu0 %2546
    %2548 = vrot.lane.b32.xlu0 %v2518, 64
    %v2549 = vpop.permute.xlu0 %2548
    %2550 = vrot.lane.b32.xlu0 %v2519, 64
    %v2551 = vpop.permute.xlu0 %2550
    %v2568 = vmul.f32 %v2478, %v2521
    %v2569 = vmul.f32 %v2479, %v2523
    %v2570 = vmul.f32 %v2480, %v2525
    %v2571 = vmul.f32 %v2481, %v2527
    %v2572 = vmul.f32 %v2482, %v2529
    %v2573 = vmul.f32 %v2483, %v2531
    %v2574 = vmul.f32 %v2484, %v2533
    %v2575 = vmul.f32 %v2485, %v2535
    %v2576 = vmul.f32 %v2486, %v2537
    %v2577 = vmul.f32 %v2487, %v2539
    %v2578 = vmul.f32 %v2488, %v2541
    %v2579 = vmul.f32 %v2489, %v2543
    %v2580 = vmul.f32 %v2490, %v2545
    %v2581 = vmul.f32 %v2491, %v2547
    %v2582 = vmul.f32 %v2492, %v2549
    %v2583 = vmul.f32 %v2493, %v2551
    %v2584 = vld [vmem:[%s10] sm:$0xff]
    %v2585 = vld [vmem:[%s10 + $0x8] sm:$0xff]
    %v2586 = vld [vmem:[%s10 + $0x10] sm:$0xff]
    %v2587 = vld [vmem:[%s10 + $0x18] sm:$0xff]
    %v2588 = vld [vmem:[%s10 + $0x20] sm:$0xff]
    %v2589 = vld [vmem:[%s10 + $0x28] sm:$0xff]
    %v2590 = vld [vmem:[%s10 + $0x30] sm:$0xff]
    %v2591 = vld [vmem:[%s10 + $0x38] sm:$0xff]
    %v2608 = vrot.slane %v2569, 7
    %vm2609 = vcmask 1041409
    %v2610 = vsel %vm2609, %v2608, %v2568
    %v2611 = vrot.slane %v2570, 6
    %vm2612 = vcmask 1042434
    %v2613 = vsel %vm2612, %v2611, %v2610
    %v2614 = vrot.slane %v2571, 5
    %vm2615 = vcmask 1043459
    %v2616 = vsel %vm2615, %v2614, %v2613
    %v2617 = vrot.slane %v2572, 4
    %vm2618 = vcmask 1044484
    %v2619 = vsel %vm2618, %v2617, %v2616
    %v2620 = vrot.slane %v2573, 3
    %vm2621 = vcmask 1045509
    %v2622 = vsel %vm2621, %v2620, %v2619
    %v2623 = vrot.slane %v2574, 2
    %vm2624 = vcmask 1046534
    %v2625 = vsel %vm2624, %v2623, %v2622
    %v2626 = vrot.slane %v2575, 1
    %vm2627 = vcmask 1047559
    %v2628 = vsel %vm2627, %v2626, %v2625
    %v2629 = vrot.slane %v2577, 7
    %v2630 = vsel %vm2609, %v2629, %v2576
    %v2631 = vrot.slane %v2578, 6
    %v2632 = vsel %vm2612, %v2631, %v2630
    %v2633 = vrot.slane %v2579, 5
    %v2634 = vsel %vm2615, %v2633, %v2632
    %v2635 = vrot.slane %v2580, 4
    %v2636 = vsel %vm2618, %v2635, %v2634
    %v2637 = vrot.slane %v2581, 3
    %v2638 = vsel %vm2621, %v2637, %v2636
    %v2639 = vrot.slane %v2582, 2
    %v2640 = vsel %vm2624, %v2639, %v2638
    %v2641 = vrot.slane %v2583, 1
    %v2642 = vsel %vm2627, %v2641, %v2640
    %v2643 = vsel %vm625, %v2628, 0
    %v2645 = vsel %vm625, %v2642, 0
    %2647 = vmatprep.subr.mxu0 0.0
    %v2648 = vand.u32 %v2584, 4294901760
    %2649 = vmatpush1.msra.mxu0 %v2648
    %2650 = vmatprep.subr.mxu0 0.0
    %v2651 = vand.u32 %v2585, 4294901760
    %2652 = vmatpush1.msra.mxu0 %v2651
    %2653 = vmatprep.subr.mxu0 0.0
    %v2654 = vand.u32 %v2586, 4294901760
    %2655 = vmatpush1.msra.mxu0 %v2654
    %2656 = vmatprep.subr.mxu0 0.0
    %v2657 = vand.u32 %v2587, 4294901760
    %2658 = vmatpush1.msra.mxu0 %v2657
    %2659 = vmatprep.subr.mxu0 0.0
    %v2660 = vand.u32 %v2588, 4294901760
    %2661 = vmatpush1.msra.mxu0 %v2660
    %2662 = vmatprep.subr.mxu0 0.0
    %v2663 = vand.u32 %v2589, 4294901760
    %2664 = vmatpush1.msra.mxu0 %v2663
    %2665 = vmatprep.subr.mxu0 0.0
    %v2666 = vand.u32 %v2590, 4294901760
    %2667 = vmatpush1.msra.mxu0 %v2666
    %2668 = vmatprep.subr.mxu0 0.0
    %v2669 = vand.u32 %v2591, 4294901760
    %2670 = vmatpush1.msra.mxu0 %v2669
    %2671 = vmatprep.subr.mxu0 0.0
    %2672 = vmatpush1.msra.mxu0 0.0
    %2673 = vmatprep.subr.mxu0 0.0
    %2674 = vmatpush1.msra.mxu0 0.0
    %2675 = vmatprep.subr.mxu0 0.0
    %2676 = vmatpush1.msra.mxu0 0.0
    %2677 = vmatprep.subr.mxu0 0.0
    %2678 = vmatpush1.msra.mxu0 0.0
    %2679 = vmatprep.subr.mxu0 0.0
    %2680 = vmatpush1.msra.mxu0 0.0
    %2681 = vmatprep.subr.mxu0 0.0
    %2682 = vmatpush1.msra.mxu0 0.0
    %2683 = vmatprep.subr.mxu0 0.0
    %2684 = vmatpush1.msra.mxu0 0.0
    %2685 = vmatprep.subr.mxu0 0.0
    %2686 = vmatpush1.msra.mxu0 0.0
    %2687 = vmatprep.subr.mxu0 0.0
    %2688 = vmatpush1.msra.mxu0 0.0
    %2689 = vmatprep.subr.mxu0 0.0
    %2690 = vmatpush1.msra.mxu0 0.0
    %2691 = vmatprep.subr.mxu0 0.0
    %2692 = vmatpush1.msra.mxu0 0.0
    %2693 = vmatprep.subr.mxu0 0.0
    %2694 = vmatpush1.msra.mxu0 0.0
    %2695 = vmatprep.subr.mxu0 0.0
    %2696 = vmatpush1.msra.mxu0 0.0
    %2697 = vmatprep.subr.mxu0 0.0
    %2698 = vmatpush1.msra.mxu0 0.0
    %2699 = vmatprep.subr.mxu0 0.0
    %2700 = vmatpush1.msra.mxu0 0.0
    %2701 = vmatprep.subr.mxu0 0.0
    %2702 = vmatpush1.msra.mxu0 0.0
    %2703 = vmatprep.subr.mxu0 0.0
    %2704 = vmatpush1.msra.mxu0 0.0
    %2705 = vmatprep.subr.mxu0 0.0
    %2706 = vmatpush1.msra.mxu0 0.0
    %2707 = vmatprep.subr.mxu0 0.0
    %2708 = vmatpush1.msra.mxu0 0.0
    %2709 = vmatprep.subr.mxu0 0.0
    %2710 = vmatpush1.msra.mxu0 0.0
    %2711 = vmatprep.subr.mxu0 0.0
    %2712 = vmatpush1.msra.mxu0 0.0
    %2713 = vmatprep.subr.mxu0 0.0
    %2714 = vmatpush1.msra.mxu0 0.0
    %2715 = vmatprep.subr.mxu0 0.0
    %2716 = vmatpush1.msra.mxu0 0.0
    %2717 = vmatprep.subr.mxu0 0.0
    %2718 = vmatpush1.msra.mxu0 0.0
    %2719 = vmatprep.mubr.f32.mxu0 0.0
    %v2720 = vand.u32 %v2643, 4294901760
    %v2721 = vsub.f32 %v2643, %v2720
    %v2722 = vand.u32 %v2721, 4294901760
    %v2723 = vsub.f32 %v2721, %v2722
    %v2724 = vand.u32 %v2723, 4294901760
    %2725 = vmatmul.mubr.f32.gmra.mrb[0].mxu0 %v2724
    %v2726 = vpop.f32.mrb[0].mxu0
    %v2727 = vadd.f32 0.0, %v2726
    %v2728 = vpop.f32.mrb[0].mxu0
    %2729 = vmatprep.mubr.f32.mxu0 0.0
    %v2730 = vand.u32 %v2645, 4294901760
    %v2731 = vsub.f32 %v2645, %v2730
    %v2732 = vand.u32 %v2731, 4294901760
    %v2733 = vsub.f32 %v2731, %v2732
    %v2734 = vand.u32 %v2733, 4294901760
    %2735 = vmatmul.mubr.f32.gmra.mrb[0].mxu0 %v2734
    %v2736 = vpop.f32.mrb[0].mxu0
    %v2737 = vadd.f32 0.0, %v2736
    %v2738 = vpop.f32.mrb[0].mxu0
    %2739 = vdwg.mxu0
    %2740 = vmatprep.subr.mxu0 0.0
    %v2741 = vand.u32 %v2584, 4294901760
    %v2742 = vsub.f32 %v2584, %v2741
    %v2743 = vand.u32 %v2742, 4294901760
    %v2744 = vsub.f32 %v2742, %v2743
    %v2745 = vand.u32 %v2744, 4294901760
    %2746 = vmatpush1.msra.mxu0 %v2745
    %2747 = vmatprep.subr.mxu0 0.0
    %v2748 = vand.u32 %v2585, 4294901760
    %v2749 = vsub.f32 %v2585, %v2748
    %v2750 = vand.u32 %v2749, 4294901760
    %v2751 = vsub.f32 %v2749, %v2750
    %v2752 = vand.u32 %v2751, 4294901760
    %2753 = vmatpush1.msra.mxu0 %v2752
    %2754 = vmatprep.subr.mxu0 0.0
    %v2755 = vand.u32 %v2586, 4294901760
    %v2756 = vsub.f32 %v2586, %v2755
    %v2757 = vand.u32 %v2756, 4294901760
    %v2758 = vsub.f32 %v2756, %v2757
    %v2759 = vand.u32 %v2758, 4294901760
    %2760 = vmatpush1.msra.mxu0 %v2759
    %2761 = vmatprep.subr.mxu0 0.0
    %v2762 = vand.u32 %v2587, 4294901760
    %v2763 = vsub.f32 %v2587, %v2762
    %v2764 = vand.u32 %v2763, 4294901760
    %v2765 = vsub.f32 %v2763, %v2764
    %v2766 = vand.u32 %v2765, 4294901760
    %2767 = vmatpush1.msra.mxu0 %v2766
    %2768 = vmatprep.subr.mxu0 0.0
    %v2769 = vand.u32 %v2588, 4294901760
    %v2770 = vsub.f32 %v2588, %v2769
    %v2771 = vand.u32 %v2770, 4294901760
    %v2772 = vsub.f32 %v2770, %v2771
    %v2773 = vand.u32 %v2772, 4294901760
    %2774 = vmatpush1.msra.mxu0 %v2773
    %2775 = vmatprep.subr.mxu0 0.0
    %v2776 = vand.u32 %v2589, 4294901760
    %v2777 = vsub.f32 %v2589, %v2776
    %v2778 = vand.u32 %v2777, 4294901760
    %v2779 = vsub.f32 %v2777, %v2778
    %v2780 = vand.u32 %v2779, 4294901760
    %2781 = vmatpush1.msra.mxu0 %v2780
    %2782 = vmatprep.subr.mxu0 0.0
    %v2783 = vand.u32 %v2590, 4294901760
    %v2784 = vsub.f32 %v2590, %v2783
    %v2785 = vand.u32 %v2784, 4294901760
    %v2786 = vsub.f32 %v2784, %v2785
    %v2787 = vand.u32 %v2786, 4294901760
    %2788 = vmatpush1.msra.mxu0 %v2787
    %2789 = vmatprep.subr.mxu0 0.0
    %v2790 = vand.u32 %v2591, 4294901760
    %v2791 = vsub.f32 %v2591, %v2790
    %v2792 = vand.u32 %v2791, 4294901760
    %v2793 = vsub.f32 %v2791, %v2792
    %v2794 = vand.u32 %v2793, 4294901760
    %2795 = vmatpush1.msra.mxu0 %v2794
    %2796 = vmatprep.subr.mxu0 0.0
    %2797 = vmatpush1.msra.mxu0 0.0
    %2798 = vmatprep.subr.mxu0 0.0
    %2799 = vmatpush1.msra.mxu0 0.0
    %2800 = vmatprep.subr.mxu0 0.0
    %2801 = vmatpush1.msra.mxu0 0.0
    %2802 = vmatprep.subr.mxu0 0.0
    %2803 = vmatpush1.msra.mxu0 0.0
    %2804 = vmatprep.subr.mxu0 0.0
    %2805 = vmatpush1.msra.mxu0 0.0
    %2806 = vmatprep.subr.mxu0 0.0
    %2807 = vmatpush1.msra.mxu0 0.0
    %2808 = vmatprep.subr.mxu0 0.0
    %2809 = vmatpush1.msra.mxu0 0.0
    %2810 = vmatprep.subr.mxu0 0.0
    %2811 = vmatpush1.msra.mxu0 0.0
    %2812 = vmatprep.subr.mxu0 0.0
    %2813 = vmatpush1.msra.mxu0 0.0
    %2814 = vmatprep.subr.mxu0 0.0
    %2815 = vmatpush1.msra.mxu0 0.0
    %2816 = vmatprep.subr.mxu0 0.0
    %2817 = vmatpush1.msra.mxu0 0.0
    %2818 = vmatprep.subr.mxu0 0.0
    %2819 = vmatpush1.msra.mxu0 0.0
    %2820 = vmatprep.subr.mxu0 0.0
    %2821 = vmatpush1.msra.mxu0 0.0
    %2822 = vmatprep.subr.mxu0 0.0
    %2823 = vmatpush1.msra.mxu0 0.0
    %2824 = vmatprep.subr.mxu0 0.0
    %2825 = vmatpush1.msra.mxu0 0.0
    %2826 = vmatprep.subr.mxu0 0.0
    %2827 = vmatpush1.msra.mxu0 0.0
    %2828 = vmatprep.subr.mxu0 0.0
    %2829 = vmatpush1.msra.mxu0 0.0
    %2830 = vmatprep.subr.mxu0 0.0
    %2831 = vmatpush1.msra.mxu0 0.0
    %2832 = vmatprep.subr.mxu0 0.0
    %2833 = vmatpush1.msra.mxu0 0.0
    %2834 = vmatprep.subr.mxu0 0.0
    %2835 = vmatpush1.msra.mxu0 0.0
    %2836 = vmatprep.subr.mxu0 0.0
    %2837 = vmatpush1.msra.mxu0 0.0
    %2838 = vmatprep.subr.mxu0 0.0
    %2839 = vmatpush1.msra.mxu0 0.0
    %2840 = vmatprep.subr.mxu0 0.0
    %2841 = vmatpush1.msra.mxu0 0.0
    %2842 = vmatprep.subr.mxu0 0.0
    %2843 = vmatpush1.msra.mxu0 0.0
    %2844 = vmatprep.mubr.f32.mxu0 0.0
    %v2845 = vand.u32 %v2643, 4294901760
    %2846 = vmatmul.mubr.f32.gmra.mrb[0].mxu0 %v2845
    %v2847 = vpop.f32.mrb[0].mxu0
    %v2848 = vadd.f32 %v2727, %v2847
    %v2849 = vpop.f32.mrb[0].mxu0
    %2850 = vmatprep.mubr.f32.mxu0 0.0
    %v2851 = vand.u32 %v2645, 4294901760
    %2852 = vmatmul.mubr.f32.gmra.mrb[0].mxu0 %v2851
    %v2853 = vpop.f32.mrb[0].mxu0
    %v2854 = vadd.f32 %v2737, %v2853
    %v2855 = vpop.f32.mrb[0].mxu0
    %2856 = vdwg.mxu0
    %2857 = vmatprep.subr.mxu0 0.0
    %v2858 = vand.u32 %v2584, 4294901760
    %v2859 = vsub.f32 %v2584, %v2858
    %2860 = vmatpush1.msra.mxu0 %v2859
    %2861 = vmatprep.subr.mxu0 0.0
    %v2862 = vand.u32 %v2585, 4294901760
    %v2863 = vsub.f32 %v2585, %v2862
    %2864 = vmatpush1.msra.mxu0 %v2863
    %2865 = vmatprep.subr.mxu0 0.0
    %v2866 = vand.u32 %v2586, 4294901760
    %v2867 = vsub.f32 %v2586, %v2866
    %2868 = vmatpush1.msra.mxu0 %v2867
    %2869 = vmatprep.subr.mxu0 0.0
    %v2870 = vand.u32 %v2587, 4294901760
    %v2871 = vsub.f32 %v2587, %v2870
    %2872 = vmatpush1.msra.mxu0 %v2871
    %2873 = vmatprep.subr.mxu0 0.0
    %v2874 = vand.u32 %v2588, 4294901760
    %v2875 = vsub.f32 %v2588, %v2874
    %2876 = vmatpush1.msra.mxu0 %v2875
    %2877 = vmatprep.subr.mxu0 0.0
    %v2878 = vand.u32 %v2589, 4294901760
    %v2879 = vsub.f32 %v2589, %v2878
    %2880 = vmatpush1.msra.mxu0 %v2879
    %2881 = vmatprep.subr.mxu0 0.0
    %v2882 = vand.u32 %v2590, 4294901760
    %v2883 = vsub.f32 %v2590, %v2882
    %2884 = vmatpush1.msra.mxu0 %v2883
    %2885 = vmatprep.subr.mxu0 0.0
    %v2886 = vand.u32 %v2591, 4294901760
    %v2887 = vsub.f32 %v2591, %v2886
    %2888 = vmatpush1.msra.mxu0 %v2887
    %2889 = vmatprep.subr.mxu0 0.0
    %2890 = vmatpush1.msra.mxu0 0.0
    %2891 = vmatprep.subr.mxu0 0.0
    %2892 = vmatpush1.msra.mxu0 0.0
    %2893 = vmatprep.subr.mxu0 0.0
    %2894 = vmatpush1.msra.mxu0 0.0
    %2895 = vmatprep.subr.mxu0 0.0
    %2896 = vmatpush1.msra.mxu0 0.0
    %2897 = vmatprep.subr.mxu0 0.0
    %2898 = vmatpush1.msra.mxu0 0.0
    %2899 = vmatprep.subr.mxu0 0.0
    %2900 = vmatpush1.msra.mxu0 0.0
    %2901 = vmatprep.subr.mxu0 0.0
    %2902 = vmatpush1.msra.mxu0 0.0
    %2903 = vmatprep.subr.mxu0 0.0
    %2904 = vmatpush1.msra.mxu0 0.0
    %2905 = vmatprep.subr.mxu0 0.0
    %2906 = vmatpush1.msra.mxu0 0.0
    %2907 = vmatprep.subr.mxu0 0.0
    %2908 = vmatpush1.msra.mxu0 0.0
    %2909 = vmatprep.subr.mxu0 0.0
    %2910 = vmatpush1.msra.mxu0 0.0
    %2911 = vmatprep.subr.mxu0 0.0
    %2912 = vmatpush1.msra.mxu0 0.0
    %2913 = vmatprep.subr.mxu0 0.0
    %2914 = vmatpush1.msra.mxu0 0.0
    %2915 = vmatprep.subr.mxu0 0.0
    %2916 = vmatpush1.msra.mxu0 0.0
    %2917 = vmatprep.subr.mxu0 0.0
    %2918 = vmatpush1.msra.mxu0 0.0
    %2919 = vmatprep.subr.mxu0 0.0
    %2920 = vmatpush1.msra.mxu0 0.0
    %2921 = vmatprep.subr.mxu0 0.0
    %2922 = vmatpush1.msra.mxu0 0.0
    %2923 = vmatprep.subr.mxu0 0.0
    %2924 = vmatpush1.msra.mxu0 0.0
    %2925 = vmatprep.subr.mxu0 0.0
    %2926 = vmatpush1.msra.mxu0 0.0
    %2927 = vmatprep.subr.mxu0 0.0
    %2928 = vmatpush1.msra.mxu0 0.0
    %2929 = vmatprep.subr.mxu0 0.0
    %2930 = vmatpush1.msra.mxu0 0.0
    %2931 = vmatprep.subr.mxu0 0.0
    %2932 = vmatpush1.msra.mxu0 0.0
    %2933 = vmatprep.subr.mxu0 0.0
    %2934 = vmatpush1.msra.mxu0 0.0
    %2935 = vmatprep.subr.mxu0 0.0
    %2936 = vmatpush1.msra.mxu0 0.0
    %2937 = vmatprep.mubr.f32.mxu0 0.0
    %v2938 = vand.u32 %v2643, 4294901760
    %v2939 = vsub.f32 %v2643, %v2938
    %2940 = vmatmul.mubr.f32.gmra.mrb[0].mxu0 %v2939
    %v2941 = vpop.f32.mrb[0].mxu0
    %v2942 = vadd.f32 %v2848, %v2941
    %v2943 = vpop.f32.mrb[0].mxu0
    %2944 = vmatprep.mubr.f32.mxu0 0.0
    %v2945 = vand.u32 %v2645, 4294901760
    %v2946 = vsub.f32 %v2645, %v2945
    %2947 = vmatmul.mubr.f32.gmra.mrb[0].mxu0 %v2946
    %v2948 = vpop.f32.mrb[0].mxu0
    %v2949 = vadd.f32 %v2854, %v2948
    %v2950 = vpop.f32.mrb[0].mxu0
    %2951 = vdwg.mxu0
    %2952 = vmatprep.subr.mxu0 0.0
    %v2953 = vand.u32 %v2584, 4294901760
    %2954 = vmatpush1.msra.mxu0 %v2953
    %2955 = vmatprep.subr.mxu0 0.0
    %v2956 = vand.u32 %v2585, 4294901760
    %2957 = vmatpush1.msra.mxu0 %v2956
    %2958 = vmatprep.subr.mxu0 0.0
    %v2959 = vand.u32 %v2586, 4294901760
    %2960 = vmatpush1.msra.mxu0 %v2959
    %2961 = vmatprep.subr.mxu0 0.0
    %v2962 = vand.u32 %v2587, 4294901760
    %2963 = vmatpush1.msra.mxu0 %v2962
    %2964 = vmatprep.subr.mxu0 0.0
    %v2965 = vand.u32 %v2588, 4294901760
    %2966 = vmatpush1.msra.mxu0 %v2965
    %2967 = vmatprep.subr.mxu0 0.0
    %v2968 = vand.u32 %v2589, 4294901760
    %2969 = vmatpush1.msra.mxu0 %v2968
    %2970 = vmatprep.subr.mxu0 0.0
    %v2971 = vand.u32 %v2590, 4294901760
    %2972 = vmatpush1.msra.mxu0 %v2971
    %2973 = vmatprep.subr.mxu0 0.0
    %v2974 = vand.u32 %v2591, 4294901760
    %2975 = vmatpush1.msra.mxu0 %v2974
    %2976 = vmatprep.subr.mxu0 0.0
    %2977 = vmatpush1.msra.mxu0 0.0
    %2978 = vmatprep.subr.mxu0 0.0
    %2979 = vmatpush1.msra.mxu0 0.0
    %2980 = vmatprep.subr.mxu0 0.0
    %2981 = vmatpush1.msra.mxu0 0.0
    %2982 = vmatprep.subr.mxu0 0.0
    %2983 = vmatpush1.msra.mxu0 0.0
    %2984 = vmatprep.subr.mxu0 0.0
    %2985 = vmatpush1.msra.mxu0 0.0
    %2986 = vmatprep.subr.mxu0 0.0
    %2987 = vmatpush1.msra.mxu0 0.0
    %2988 = vmatprep.subr.mxu0 0.0
    %2989 = vmatpush1.msra.mxu0 0.0
    %2990 = vmatprep.subr.mxu0 0.0
    %2991 = vmatpush1.msra.mxu0 0.0
    %2992 = vmatprep.subr.mxu0 0.0
    %2993 = vmatpush1.msra.mxu0 0.0
    %2994 = vmatprep.subr.mxu0 0.0
    %2995 = vmatpush1.msra.mxu0 0.0
    %2996 = vmatprep.subr.mxu0 0.0
    %2997 = vmatpush1.msra.mxu0 0.0
    %2998 = vmatprep.subr.mxu0 0.0
    %2999 = vmatpush1.msra.mxu0 0.0
    %3000 = vmatprep.subr.mxu0 0.0
    %3001 = vmatpush1.msra.mxu0 0.0
    %3002 = vmatprep.subr.mxu0 0.0
    %3003 = vmatpush1.msra.mxu0 0.0
    %3004 = vmatprep.subr.mxu0 0.0
    %3005 = vmatpush1.msra.mxu0 0.0
    %3006 = vmatprep.subr.mxu0 0.0
    %3007 = vmatpush1.msra.mxu0 0.0
    %3008 = vmatprep.subr.mxu0 0.0
    %3009 = vmatpush1.msra.mxu0 0.0
    %3010 = vmatprep.subr.mxu0 0.0
    %3011 = vmatpush1.msra.mxu0 0.0
    %3012 = vmatprep.subr.mxu0 0.0
    %3013 = vmatpush1.msra.mxu0 0.0
    %3014 = vmatprep.subr.mxu0 0.0
    %3015 = vmatpush1.msra.mxu0 0.0
    %3016 = vmatprep.subr.mxu0 0.0
    %3017 = vmatpush1.msra.mxu0 0.0
    %3018 = vmatprep.subr.mxu0 0.0
    %3019 = vmatpush1.msra.mxu0 0.0
    %3020 = vmatprep.subr.mxu0 0.0
    %3021 = vmatpush1.msra.mxu0 0.0
    %3022 = vmatprep.subr.mxu0 0.0
    %3023 = vmatpush1.msra.mxu0 0.0
    %3024 = vmatprep.mubr.f32.mxu0 0.0
    %v3025 = vand.u32 %v2643, 4294901760
    %v3026 = vsub.f32 %v2643, %v3025
    %v3027 = vand.u32 %v3026, 4294901760
    %3028 = vmatmul.mubr.f32.gmra.mrb[0].mxu0 %v3027
    %v3029 = vpop.f32.mrb[0].mxu0
    %v3030 = vadd.f32 %v2942, %v3029
    %v3031 = vpop.f32.mrb[0].mxu0
    %3032 = vmatprep.mubr.f32.mxu0 0.0
    %v3033 = vand.u32 %v2645, 4294901760
    %v3034 = vsub.f32 %v2645, %v3033
    %v3035 = vand.u32 %v3034, 4294901760
    %3036 = vmatmul.mubr.f32.gmra.mrb[0].mxu0 %v3035
    %v3037 = vpop.f32.mrb[0].mxu0
    %v3038 = vadd.f32 %v2949, %v3037
    %v3039 = vpop.f32.mrb[0].mxu0
    %3040 = vdwg.mxu0
    %3041 = vmatprep.subr.mxu0 0.0
    %v3042 = vand.u32 %v2584, 4294901760
    %v3043 = vsub.f32 %v2584, %v3042
    %v3044 = vand.u32 %v3043, 4294901760
    %3045 = vmatpush1.msra.mxu0 %v3044
    %3046 = vmatprep.subr.mxu0 0.0
    %v3047 = vand.u32 %v2585, 4294901760
    %v3048 = vsub.f32 %v2585, %v3047
    %v3049 = vand.u32 %v3048, 4294901760
    %3050 = vmatpush1.msra.mxu0 %v3049
    %3051 = vmatprep.subr.mxu0 0.0
    %v3052 = vand.u32 %v2586, 4294901760
    %v3053 = vsub.f32 %v2586, %v3052
    %v3054 = vand.u32 %v3053, 4294901760
    %3055 = vmatpush1.msra.mxu0 %v3054
    %3056 = vmatprep.subr.mxu0 0.0
    %v3057 = vand.u32 %v2587, 4294901760
    %v3058 = vsub.f32 %v2587, %v3057
    %v3059 = vand.u32 %v3058, 4294901760
    %3060 = vmatpush1.msra.mxu0 %v3059
    %3061 = vmatprep.subr.mxu0 0.0
    %v3062 = vand.u32 %v2588, 4294901760
    %v3063 = vsub.f32 %v2588, %v3062
    %v3064 = vand.u32 %v3063, 4294901760
    %3065 = vmatpush1.msra.mxu0 %v3064
    %3066 = vmatprep.subr.mxu0 0.0
    %v3067 = vand.u32 %v2589, 4294901760
    %v3068 = vsub.f32 %v2589, %v3067
    %v3069 = vand.u32 %v3068, 4294901760
    %3070 = vmatpush1.msra.mxu0 %v3069
    %3071 = vmatprep.subr.mxu0 0.0
    %v3072 = vand.u32 %v2590, 4294901760
    %v3073 = vsub.f32 %v2590, %v3072
    %v3074 = vand.u32 %v3073, 4294901760
    %3075 = vmatpush1.msra.mxu0 %v3074
    %3076 = vmatprep.subr.mxu0 0.0
    %v3077 = vand.u32 %v2591, 4294901760
    %v3078 = vsub.f32 %v2591, %v3077
    %v3079 = vand.u32 %v3078, 4294901760
    %3080 = vmatpush1.msra.mxu0 %v3079
    %3081 = vmatprep.subr.mxu0 0.0
    %3082 = vmatpush1.msra.mxu0 0.0
    %3083 = vmatprep.subr.mxu0 0.0
    %3084 = vmatpush1.msra.mxu0 0.0
    %3085 = vmatprep.subr.mxu0 0.0
    %3086 = vmatpush1.msra.mxu0 0.0
    %3087 = vmatprep.subr.mxu0 0.0
    %3088 = vmatpush1.msra.mxu0 0.0
    %3089 = vmatprep.subr.mxu0 0.0
    %3090 = vmatpush1.msra.mxu0 0.0
    %3091 = vmatprep.subr.mxu0 0.0
    %3092 = vmatpush1.msra.mxu0 0.0
    %3093 = vmatprep.subr.mxu0 0.0
    %3094 = vmatpush1.msra.mxu0 0.0
    %3095 = vmatprep.subr.mxu0 0.0
    %3096 = vmatpush1.msra.mxu0 0.0
    %3097 = vmatprep.subr.mxu0 0.0
    %3098 = vmatpush1.msra.mxu0 0.0
    %3099 = vmatprep.subr.mxu0 0.0
    %3100 = vmatpush1.msra.mxu0 0.0
    %3101 = vmatprep.subr.mxu0 0.0
    %3102 = vmatpush1.msra.mxu0 0.0
    %3103 = vmatprep.subr.mxu0 0.0
    %3104 = vmatpush1.msra.mxu0 0.0
    %3105 = vmatprep.subr.mxu0 0.0
    %3106 = vmatpush1.msra.mxu0 0.0
    %3107 = vmatprep.subr.mxu0 0.0
    %3108 = vmatpush1.msra.mxu0 0.0
    %3109 = vmatprep.subr.mxu0 0.0
    %3110 = vmatpush1.msra.mxu0 0.0
    %3111 = vmatprep.subr.mxu0 0.0
    %3112 = vmatpush1.msra.mxu0 0.0
    %3113 = vmatprep.subr.mxu0 0.0
    %3114 = vmatpush1.msra.mxu0 0.0
    %3115 = vmatprep.subr.mxu0 0.0
    %3116 = vmatpush1.msra.mxu0 0.0
    %3117 = vmatprep.subr.mxu0 0.0
    %3118 = vmatpush1.msra.mxu0 0.0
    %3119 = vmatprep.subr.mxu0 0.0
    %3120 = vmatpush1.msra.mxu0 0.0
    %3121 = vmatprep.subr.mxu0 0.0
    %3122 = vmatpush1.msra.mxu0 0.0
    %3123 = vmatprep.subr.mxu0 0.0
    %3124 = vmatpush1.msra.mxu0 0.0
    %3125 = vmatprep.subr.mxu0 0.0
    %3126 = vmatpush1.msra.mxu0 0.0
    %3127 = vmatprep.subr.mxu0 0.0
    %3128 = vmatpush1.msra.mxu0 0.0
    %3129 = vmatprep.mubr.f32.mxu0 0.0
    %v3130 = vand.u32 %v2643, 4294901760
    %3131 = vmatmul.mubr.f32.gmra.mrb[0].mxu0 %v3130
    %v3132 = vpop.f32.mrb[0].mxu0
    %v3133 = vadd.f32 %v3030, %v3132
    %v3134 = vpop.f32.mrb[0].mxu0
    %3135 = vmatprep.mubr.f32.mxu0 0.0
    %v3136 = vand.u32 %v2645, 4294901760
    %3137 = vmatmul.mubr.f32.gmra.mrb[0].mxu0 %v3136
    %v3138 = vpop.f32.mrb[0].mxu0
    %v3139 = vadd.f32 %v3038, %v3138
    %v3140 = vpop.f32.mrb[0].mxu0
    %3141 = vdwg.mxu0
    %3142 = vmatprep.subr.mxu0 0.0
    %v3143 = vand.u32 %v2584, 4294901760
    %3144 = vmatpush1.msra.mxu0 %v3143
    %3145 = vmatprep.subr.mxu0 0.0
    %v3146 = vand.u32 %v2585, 4294901760
    %3147 = vmatpush1.msra.mxu0 %v3146
    %3148 = vmatprep.subr.mxu0 0.0
    %v3149 = vand.u32 %v2586, 4294901760
    %3150 = vmatpush1.msra.mxu0 %v3149
    %3151 = vmatprep.subr.mxu0 0.0
    %v3152 = vand.u32 %v2587, 4294901760
    %3153 = vmatpush1.msra.mxu0 %v3152
    %3154 = vmatprep.subr.mxu0 0.0
    %v3155 = vand.u32 %v2588, 4294901760
    %3156 = vmatpush1.msra.mxu0 %v3155
    %3157 = vmatprep.subr.mxu0 0.0
    %v3158 = vand.u32 %v2589, 4294901760
    %3159 = vmatpush1.msra.mxu0 %v3158
    %3160 = vmatprep.subr.mxu0 0.0
    %v3161 = vand.u32 %v2590, 4294901760
    %3162 = vmatpush1.msra.mxu0 %v3161
    %3163 = vmatprep.subr.mxu0 0.0
    %v3164 = vand.u32 %v2591, 4294901760
    %3165 = vmatpush1.msra.mxu0 %v3164
    %3166 = vmatprep.subr.mxu0 0.0
    %3167 = vmatpush1.msra.mxu0 0.0
    %3168 = vmatprep.subr.mxu0 0.0
    %3169 = vmatpush1.msra.mxu0 0.0
    %3170 = vmatprep.subr.mxu0 0.0
    %3171 = vmatpush1.msra.mxu0 0.0
    %3172 = vmatprep.subr.mxu0 0.0
    %3173 = vmatpush1.msra.mxu0 0.0
    %3174 = vmatprep.subr.mxu0 0.0
    %3175 = vmatpush1.msra.mxu0 0.0
    %3176 = vmatprep.subr.mxu0 0.0
    %3177 = vmatpush1.msra.mxu0 0.0
    %3178 = vmatprep.subr.mxu0 0.0
    %3179 = vmatpush1.msra.mxu0 0.0
    %3180 = vmatprep.subr.mxu0 0.0
    %3181 = vmatpush1.msra.mxu0 0.0
    %3182 = vmatprep.subr.mxu0 0.0
    %3183 = vmatpush1.msra.mxu0 0.0
    %3184 = vmatprep.subr.mxu0 0.0
    %3185 = vmatpush1.msra.mxu0 0.0
    %3186 = vmatprep.subr.mxu0 0.0
    %3187 = vmatpush1.msra.mxu0 0.0
    %3188 = vmatprep.subr.mxu0 0.0
    %3189 = vmatpush1.msra.mxu0 0.0
    %3190 = vmatprep.subr.mxu0 0.0
    %3191 = vmatpush1.msra.mxu0 0.0
    %3192 = vmatprep.subr.mxu0 0.0
    %3193 = vmatpush1.msra.mxu0 0.0
    %3194 = vmatprep.subr.mxu0 0.0
    %3195 = vmatpush1.msra.mxu0 0.0
    %3196 = vmatprep.subr.mxu0 0.0
    %3197 = vmatpush1.msra.mxu0 0.0
    %3198 = vmatprep.subr.mxu0 0.0
    %3199 = vmatpush1.msra.mxu0 0.0
    %3200 = vmatprep.subr.mxu0 0.0
    %3201 = vmatpush1.msra.mxu0 0.0
    %3202 = vmatprep.subr.mxu0 0.0
    %3203 = vmatpush1.msra.mxu0 0.0
    %3204 = vmatprep.subr.mxu0 0.0
    %3205 = vmatpush1.msra.mxu0 0.0
    %3206 = vmatprep.subr.mxu0 0.0
    %3207 = vmatpush1.msra.mxu0 0.0
    %3208 = vmatprep.subr.mxu0 0.0
    %3209 = vmatpush1.msra.mxu0 0.0
    %3210 = vmatprep.subr.mxu0 0.0
    %3211 = vmatpush1.msra.mxu0 0.0
    %3212 = vmatprep.subr.mxu0 0.0
    %3213 = vmatpush1.msra.mxu0 0.0
    %3214 = vmatprep.mubr.f32.mxu0 0.0
    %v3215 = vand.u32 %v2643, 4294901760
    %3216 = vmatmul.mubr.f32.gmra.mrb[0].mxu0 %v3215
    %v3217 = vpop.f32.mrb[0].mxu0
    %v3218 = vadd.f32 %v3133, %v3217
    %v3219 = vpop.f32.mrb[0].mxu0
    %3220 = vmatprep.mubr.f32.mxu0 0.0
    %v3221 = vand.u32 %v2645, 4294901760
    %3222 = vmatmul.mubr.f32.gmra.mrb[0].mxu0 %v3221
    %v3223 = vpop.f32.mrb[0].mxu0
    %v3224 = vadd.f32 %v3139, %v3223
    %v3225 = vpop.f32.mrb[0].mxu0
    %3226 = vdwg.mxu0
    %v3227 = vadd.f32 %v39, %v3218
    %v3228 = vadd.f32 %v40, %v3224
    %3229 = vst.msk [vmem:[#allocation4] sm:$0xff] %vm41, %v3227
    %3230 = vst.msk [vmem:[#allocation4 + $0x8] sm:$0xff] %vm41, %v3228
    // Predicated region
    $region46: #{block_forward.1} parent=1 // pred_check
      _
    $region47: #{block_forward.1} parent=1 // pred_check_branch
      %3232 = sbr.rel (0) target = $region49
    $region48: #{block_forward.1} parent=1 // pred_region
      %s3234 = ssub.s32 256, 256
      %3235 = vsyncadd [#allocation5], %s3234
      %s3236 = sshll.u32 [#allocation4], 4
      %s3237 = int_to_ptr.vmem [resolvable:$true] %s3236
      %3242 = dma.vmem_to_hbm [thread:$0]  %s3237, 256, %s11, [#allocation5], 128, 128, 8
    $region49: #{block_forward.1} parent=1 // pred_fallthru
      _
    // Predicated region
    $region50: #{block_forward.1} parent=1 // pred_check
      _
    $region51: #{block_forward.1} parent=1 // pred_check_branch
      %3244 = sbr.rel (0) target = $region53
    $region52: #{block_forward.1} parent=1 // pred_region
      %3245 = dma.done [#allocation5], 256
    $region53: #{block_forward.1} parent=1 // pred_fallthru
      _
    %3246 = vsyncpa [#allocation5], 1

</llo_original>
